<compile_context>
chip_gen: v5e
topology: v5e:2x2
jax: 0.10.0
libtpu: 0.0.40
codegen_flags: <defaults>
</compile_context>

<pallas_src>
import functools
import math

import jax
import jax.numpy as jnp
from jax import lax
from jax.experimental import pallas as pl
from jax.experimental.pallas import tpu as pltpu


_SQRT_HALF = 0.7071067811865476
STATE_DIM = 16
ACTION_DIM = 8
LANE = 128          # lane-dense output padding


class Config:
    n_embd = 32
    n_head = 4
    n_layer = 2
    block_size = 8
    len_key_states = 2
    max_timestep = 20
    model_type = "cot"        # contains 'cot', no '+a'
    key_state_loss = "01"     # use intermediate features of layers 0 and 1
    cot_decoder = "64"
    key_states = "ab"
    attn_pdrop = resid_pdrop = embd_pdrop = 0.0


# ------------------------------ in-kernel math helpers ------------------------------

def _erf(x):
    # Abramowitz & Stegun 7.1.26 rational approximation (|err| ~ 1.5e-7).
    a1, a2, a3, a4, a5 = 0.254829592, -0.284496736, 1.421413741, -1.453152027, 1.061405429
    pc = 0.3275911
    s = jnp.where(x >= 0.0, 1.0, -1.0)
    ax = jnp.abs(x)
    t = 1.0 / (1.0 + pc * ax)                    # exact divide (precision)
    poly = ((((a5 * t + a4) * t + a3) * t + a2) * t + a1) * t
    return s * (1.0 - poly * jnp.exp(-ax * ax))


def _gelu(x):
    # exact (erf-based) GELU, matching torch.nn.functional.gelu default
    return 0.5 * x * (1.0 + _erf(x * _SQRT_HALF))


def _layernorm(x, g, b):
    mu = jnp.mean(x, axis=-1, keepdims=True)
    var = jnp.mean((x - mu) ** 2, axis=-1, keepdims=True)
    return (x - mu) * lax.rsqrt(var + 1e-5) * g + b


# ------------------------------ the fused forward kernel ------------------------------

def _gpt_forward_kernel(
    # VMEM inputs
    states_ref, gpe_ref, local_pe_ref, ks_pe_ref, mask_ref,
    se_w1_ref, se_b1_ref, se_w2_ref, se_b2_ref,
    ln1_g_ref, ln1_b_ref, ln2_g_ref, ln2_b_ref,
    qkv_w_ref, qkv_b_ref, proj_w_ref, proj_b_ref,
    fc_w_ref, fc_b_ref, fcp_w_ref, fcp_b_ref,
    lnf_g_ref, lnf_b_ref,
    ap_w1_ref, ap_b1_ref, ap_w2_ref, ap_b2_ref, ap_w3_ref, ap_b3_ref,
    ksp_w1_ref, ksp_b1_ref, ksp_w2_ref, ksp_b2_ref,
    # outputs
    act_out_ref, ks_out_ref,
    *, B, T, block_size, lks, Tpad, C, nh, hd, n_layer, ks_layers,
    ks_rows, mm_dtype,
):
    scale = 1.0 / math.sqrt(hd)
    f32 = jnp.float32

    def dot(a, b):
        return jnp.dot(a.astype(mm_dtype), b.astype(mm_dtype),
                       preferred_element_type=f32)

    def dot_tb(a, b):      # a @ b.T without materializing a transpose
        return lax.dot_general(a.astype(mm_dtype), b.astype(mm_dtype),
                               (((1,), (1,)), ((), ())),
                               preferred_element_type=f32)

    # ---------------- state encoder MLP (16 -> 256 -> C), fused ----------------
    s = states_ref[...]                                           # (B*T, state_dim)
    h = jnp.maximum(dot(s, se_w1_ref[...]) + se_b1_ref[...], 0.0)
    se = dot(h, se_w2_ref[...]) + se_b2_ref[...]                  # (B*T, C)

    # ------- token assembly: per batch [ks query tokens ; state tokens + pos emb ; pad] -------
    local_pe = local_pe_ref[...]                                  # (block_size, C)
    ks_pe = ks_pe_ref[...]                                        # (lks, C)
    pieces = []
    pad_rows = Tpad - (lks + block_size)
    for b in range(B):
        tok = se[b * T:(b + 1) * T, :]                            # (T, C)
        if T < block_size:
            tok = jnp.concatenate(
                [tok, jnp.zeros((block_size - T, C), f32)], axis=0)
        g = gpe_ref[b:b + 1, :]                                   # (1, C), gathered in wrapper
        pieces.append(ks_pe)
        pieces.append(tok + g + local_pe)
        if pad_rows:
            pieces.append(jnp.zeros((pad_rows, C), f32))
    x = jnp.concatenate(pieces, axis=0)                           # (B*Tpad, C)

    mask = mask_ref[...]                                          # (B*Tpad, B*Tpad) additive

    # ---------------- transformer blocks, fully unrolled in one kernel ----------------
    intermediates = []
    for l in range(n_layer):
        h1 = _layernorm(x, ln1_g_ref[l], ln1_b_ref[l])
        # fused [query | key | value] projection: one lane-dense (C, 3C) matmul
        qkv = dot(h1, qkv_w_ref[l]) + qkv_b_ref[l]                # (Rows, 3C)
        ctx_heads = []
        for hh in range(nh):
            c0 = hh * hd
            q_h = qkv[:, c0:c0 + hd]                              # (Rows, hd)
            k_h = qkv[:, C + c0:C + c0 + hd]
            v_h = qkv[:, 2 * C + c0:2 * C + c0 + hd]
            att = dot_tb(q_h, k_h) * scale + mask                 # (Rows, Rows)
            att = att - jnp.max(att, axis=-1, keepdims=True)
            p = jnp.exp(att)
            p = p * pl.reciprocal(jnp.sum(p, axis=-1, keepdims=True), approx=True)
            ctx_heads.append(dot(p, v_h))                         # (Rows, hd)
        ctx = jnp.concatenate(ctx_heads, axis=-1)                 # (Rows, C) head merge
        x = x + dot(ctx, proj_w_ref[l]) + proj_b_ref[l]           # residual (attn)

        h2 = _layernorm(x, ln2_g_ref[l], ln2_b_ref[l])
        m = _gelu(dot(h2, fc_w_ref[l]) + fc_b_ref[l])             # (Rows, 4C)
        x = x + dot(m, fcp_w_ref[l]) + fcp_b_ref[l]               # residual (mlp)
        intermediates.append(x)

    # ---------------- final LN + action predictor MLP (C -> 256 -> 256 -> 128 padded) ----------------
    xf = _layernorm(x, lnf_g_ref[...], lnf_b_ref[...])
    a = jnp.maximum(dot(xf, ap_w1_ref[...]) + ap_b1_ref[...], 0.0)
    a = jnp.maximum(dot(a, ap_w2_ref[...]) + ap_b2_ref[...], 0.0)
    act_out_ref[...] = dot(a, ap_w3_ref[...]) + ap_b3_ref[...]    # (Rows, 128) full-tile store

    # ---------------- key-state predictors, batched over B ----------------
    for idx, layer_idx in enumerate(ks_layers):
        inter = intermediates[layer_idx]
        feats = [inter[b * Tpad:b * Tpad + lks, :] for b in range(B)]   # 8-aligned offsets
        if B * lks < ks_rows:
            feats.append(jnp.zeros((ks_rows - B * lks, C), f32))
        feat = jnp.concatenate(feats, axis=0)                     # (ks_rows, C)
        hk = jnp.maximum(dot(feat, ksp_w1_ref[idx]) + ksp_b1_ref[idx], 0.0)
        o = dot(hk, ksp_w2_ref[idx]) + ksp_b2_ref[idx]            # (ks_rows, 128)
        ks_out_ref[idx * ks_rows:(idx + 1) * ks_rows, :] = o      # full-tile store


# ------------------------------ parameters (fused layout) ------------------------------

def make_params(cfg, key):
    C = cfg.n_embd
    L = cfg.n_layer
    ksd = int(cfg.cot_decoder)
    n_ksp = len(cfg.key_state_loss)
    keys = iter(jax.random.split(key, 64))

    def w(*shape):
        return 0.02 * jax.random.normal(next(keys), shape, jnp.float32)

    z = lambda *shape: jnp.zeros(shape, jnp.float32)
    one = lambda *shape: jnp.ones(shape, jnp.float32)

    return dict(
        local_pe=w(cfg.block_size, C),
        global_pe=w(cfg.max_timestep, C),
        ks_pe=w(cfg.len_key_states, C),
        # state encoder MLP
        se_w1=w(STATE_DIM, 256), se_b1=z(1, 256),
        se_w2=w(256, C), se_b2=z(1, C),
        # per-block params, stacked along a leading layer dim
        ln1_g=one(L, 1, C), ln1_b=z(L, 1, C),
        ln2_g=one(L, 1, C), ln2_b=z(L, 1, C),
        qkv_w=w(L, C, 3 * C), qkv_b=z(L, 1, 3 * C),     # fused [q|k|v] projection
        proj_w=w(L, C, C), proj_b=z(L, 1, C),           # natural output projection
        fc_w=w(L, C, 4 * C), fc_b=z(L, 1, 4 * C),
        fcp_w=w(L, 4 * C, C), fcp_b=z(L, 1, C),
        lnf_g=one(1, C), lnf_b=z(1, C),
        # action predictor MLP
        ap_w1=w(C, 256), ap_b1=z(1, 256),
        ap_w2=w(256, 256), ap_b2=z(1, 256),
        ap_w3=w(256, ACTION_DIM), ap_b3=z(1, ACTION_DIM),
        # key-state predictors, stacked
        ksp_w1=w(n_ksp, C, ksd), ksp_b1=z(n_ksp, 1, ksd),
        ksp_w2=w(n_ksp, ksd, STATE_DIM), ksp_b2=z(n_ksp, 1, STATE_DIM),
    )


# ------------------------------ forward wrapper ------------------------------

def _default_mm_dtype():
    # bf16 operands (f32 accumulation) on v6e / v7x class MXUs; f32 on v5 and older
    # (no bf16 VALU there, the pack/unpack casts would land on the critical path).
    try:
        kind = jax.devices()[0].device_kind.lower()
    except Exception:
        return jnp.float32
    for old in ("v2", "v3", "v4", "v5"):
        if old in kind:
            return jnp.float32
    return jnp.bfloat16


def _build_mask(B, Tpad, lks, block_size, r):
    """Block-diagonal additive attention mask over the batch-folded (B*Tpad) rows."""
    rows = B * Tpad
    ridx = jnp.arange(rows, dtype=jnp.int32)
    row_b = ridx // Tpad
    row_l = ridx % Tpad
    col_b = row_b[None, :]
    col_l = row_l[None, :]
    row_b = row_b[:, None]
    row_l = row_l[:, None]
    cross = row_b != col_b                                        # cross-batch blocks
    causal = jnp.logical_and(col_l > row_l, row_l >= lks)         # causal for non-ks rows
    r_row = r.reshape(-1).astype(jnp.int32)[row_b[:, 0]][:, None]
    ks_blk = jnp.logical_and(
        row_l < lks,
        jnp.logical_or(col_l > r_row + lks, col_l >= lks + block_size))
    blocked = cross | causal | ks_blk
    return jnp.where(blocked, jnp.float32(-1e30), jnp.float32(0.0))


def gpt_forward(params, cfg, states, timesteps, r, mm_dtype=None):
    """Single fused pallas_call for the whole GPTWithCoT forward.

    `r` is the per-batch scalar used by BlocksWithCoT to build key_state_mask
    when none is provided (columns > r + len_key_states are masked for the
    key-state query rows).
    """
    # TODO(synk): arbitrary externally-provided dense key_state_mask tensors are
    # not plumbed into the fused kernel; the mask is parameterized by per-batch r
    # exactly as BlocksWithCoT generates it (identical across heads).
    # TODO(synk): the '+a' (interleaved action tokens) model_type path is not implemented.
    if mm_dtype is None:
        mm_dtype = _default_mm_dtype()

    B, T, _ = states.shape
    C = cfg.n_embd
    lks = cfg.len_key_states
    nh = cfg.n_head
    hd = C // nh
    block_size = cfg.block_size
    Ttot = block_size + lks
    Tpad = -(-Ttot // 8) * 8                  # pad total sequence to an 8-sublane boundary
    rows = B * Tpad
    ks_layers = tuple(int(c) for c in cfg.key_state_loss)
    n_ksp = len(ks_layers)
    ks_rows = -(-(B * lks) // 8) * 8          # rows per key-state predictor block (8-aligned)

    # wrapper-side prep (tiny): global pos-emb gather, additive mask, lane padding
    gpe_b = jnp.take(params["global_pe"], timesteps.reshape(-1).astype(jnp.int32), axis=0)
    mask = _build_mask(B, Tpad, lks, block_size, r)
    ap_w3p = jnp.pad(params["ap_w3"], ((0, 0), (0, LANE - ACTION_DIM)))
    ap_b3p = jnp.pad(params["ap_b3"], ((0, 0), (0, LANE - ACTION_DIM)))
    ksp_w2p = jnp.pad(params["ksp_w2"], ((0, 0), (0, 0), (0, LANE - STATE_DIM)))
    ksp_b2p = jnp.pad(params["ksp_b2"], ((0, 0), (0, 0), (0, LANE - STATE_DIM)))

    inputs = [
        states.reshape(B * T, STATE_DIM).astype(jnp.float32),
        gpe_b, params["local_pe"], params["ks_pe"], mask,
        params["se_w1"], params["se_b1"], params["se_w2"], params["se_b2"],
        params["ln1_g"], params["ln1_b"], params["ln2_g"], params["ln2_b"],
        params["qkv_w"], params["qkv_b"], params["proj_w"], params["proj_b"],
        params["fc_w"], params["fc_b"], params["fcp_w"], params["fcp_b"],
        params["lnf_g"], params["lnf_b"],
        params["ap_w1"], params["ap_b1"], params["ap_w2"], params["ap_b2"],
        ap_w3p, ap_b3p,
        params["ksp_w1"], params["ksp_b1"], ksp_w2p, ksp_b2p,
    ]

    def vmem_full(a):
        nd = a.ndim
        return pl.BlockSpec(a.shape, lambda i, _nd=nd: (0,) * _nd)

    kernel = functools.partial(
        _gpt_forward_kernel,
        B=B, T=T, block_size=block_size, lks=lks, Tpad=Tpad, C=C, nh=nh, hd=hd,
        n_layer=cfg.n_layer, ks_layers=ks_layers, ks_rows=ks_rows, mm_dtype=mm_dtype)

    out_shape = (jax.ShapeDtypeStruct((rows, LANE), jnp.float32),
                 jax.ShapeDtypeStruct((n_ksp * ks_rows, LANE), jnp.float32))
    out_specs = (pl.BlockSpec((rows, LANE), lambda i: (0, 0)),
                 pl.BlockSpec((n_ksp * ks_rows, LANE), lambda i: (0, 0)))

    act_full, ks_full = pl.pallas_call(
        kernel,
        out_shape=out_shape,
        grid_spec=pltpu.PrefetchScalarGridSpec(
            num_scalar_prefetch=0,
            grid=(1,),
            in_specs=[vmem_full(a) for a in inputs],
            out_specs=out_specs,
        ),
        compiler_params=pltpu.CompilerParams(
            dimension_semantics=("arbitrary",)),
    )(*inputs)

    act_preds = act_full.reshape(B, Tpad, LANE)[:, lks:lks + block_size, :ACTION_DIM]
    key_state_preds = [
        ks_full[i * ks_rows:i * ks_rows + B * lks, :STATE_DIM].reshape(B, lks, STATE_DIM)
        for i in range(n_ksp)
    ]
    return act_preds, key_state_preds


# ------------------------------ driver ------------------------------

if __name__ == "__main__":
    cfg = Config()
    B, T = 2, cfg.block_size

    root = jax.random.PRNGKey(0)
    k_params, k_states = jax.random.split(root)
    params = make_params(cfg, k_params)

    states = jax.random.normal(k_states, (B, T, STATE_DIM), jnp.float32)
    timesteps = jnp.array([[3], [7]], dtype=jnp.int32)
    # deterministic stand-in for the torch.randint-generated r in BlocksWithCoT
    r = jnp.array([1, 3], dtype=jnp.int32)

    mm_dtype = _default_mm_dtype()
    fwd = jax.jit(lambda p, s, t, rr: gpt_forward(p, cfg, s, t, rr, mm_dtype=mm_dtype))
    act_preds, key_state_preds = fwd(params, states, timesteps, r)

    jax.block_until_ready(act_preds)
    for ks in key_state_preds:
        jax.block_until_ready(ks)

    assert act_preds.shape == (B, cfg.block_size, ACTION_DIM)
    assert len(key_state_preds) == len(cfg.key_state_loss)
    assert key_state_preds[0].shape == (B, cfg.len_key_states, STATE_DIM)
    assert bool(jnp.all(jnp.isfinite(act_preds)))
    print("KERNEL_OK")
</pallas_src>

<mosaic_0001>
module attributes {stable_mosaic.version = 11 : i64} {
  func.func @_gpt_forward_kernel(%arg0: i32, %arg1: memref<16x16xf32, #tpu.memory_space<vmem>>, %arg2: memref<2x32xf32, #tpu.memory_space<vmem>>, %arg3: memref<8x32xf32, #tpu.memory_space<vmem>>, %arg4: memref<2x32xf32, #tpu.memory_space<vmem>>, %arg5: memref<32x32xf32, #tpu.memory_space<vmem>>, %arg6: memref<16x256xf32, #tpu.memory_space<vmem>>, %arg7: memref<1x256xf32, #tpu.memory_space<vmem>>, %arg8: memref<256x32xf32, #tpu.memory_space<vmem>>, %arg9: memref<1x32xf32, #tpu.memory_space<vmem>>, %arg10: memref<2x1x32xf32, #tpu.memory_space<vmem>>, %arg11: memref<2x1x32xf32, #tpu.memory_space<vmem>>, %arg12: memref<2x1x32xf32, #tpu.memory_space<vmem>>, %arg13: memref<2x1x32xf32, #tpu.memory_space<vmem>>, %arg14: memref<2x32x96xf32, #tpu.memory_space<vmem>>, %arg15: memref<2x1x96xf32, #tpu.memory_space<vmem>>, %arg16: memref<2x32x32xf32, #tpu.memory_space<vmem>>, %arg17: memref<2x1x32xf32, #tpu.memory_space<vmem>>, %arg18: memref<2x32x128xf32, #tpu.memory_space<vmem>>, %arg19: memref<2x1x128xf32, #tpu.memory_space<vmem>>, %arg20: memref<2x128x32xf32, #tpu.memory_space<vmem>>, %arg21: memref<2x1x32xf32, #tpu.memory_space<vmem>>, %arg22: memref<1x32xf32, #tpu.memory_space<vmem>>, %arg23: memref<1x32xf32, #tpu.memory_space<vmem>>, %arg24: memref<32x256xf32, #tpu.memory_space<vmem>>, %arg25: memref<1x256xf32, #tpu.memory_space<vmem>>, %arg26: memref<256x256xf32, #tpu.memory_space<vmem>>, %arg27: memref<1x256xf32, #tpu.memory_space<vmem>>, %arg28: memref<256x128xf32, #tpu.memory_space<vmem>>, %arg29: memref<1x128xf32, #tpu.memory_space<vmem>>, %arg30: memref<2x32x64xf32, #tpu.memory_space<vmem>>, %arg31: memref<2x1x64xf32, #tpu.memory_space<vmem>>, %arg32: memref<2x64x128xf32, #tpu.memory_space<vmem>>, %arg33: memref<2x1x128xf32, #tpu.memory_space<vmem>>, %arg34: memref<32x128xf32, #tpu.memory_space<vmem>>, %arg35: memref<16x128xf32, #tpu.memory_space<vmem>>) attributes {dimension_semantics = [#tpu.dimension_semantics<arbitrary>], iteration_bounds = array<i64: 1>, scalar_prefetch = 0 : i64, scratch_operands = 0 : i64, tpu.core_type = #tpu.core_type<tc>, window_params = [{pipeline_mode = #tpu.pipeline_mode<synchronous>, transform_indices = @transform_0, window_bounds = array<i64: 16, 16>}, {pipeline_mode = #tpu.pipeline_mode<synchronous>, transform_indices = @transform_1, window_bounds = array<i64: 2, 32>}, {pipeline_mode = #tpu.pipeline_mode<synchronous>, transform_indices = @transform_2, window_bounds = array<i64: 8, 32>}, {pipeline_mode = #tpu.pipeline_mode<synchronous>, transform_indices = @transform_3, window_bounds = array<i64: 2, 32>}, {pipeline_mode = #tpu.pipeline_mode<synchronous>, transform_indices = @transform_4, window_bounds = array<i64: 32, 32>}, {pipeline_mode = #tpu.pipeline_mode<synchronous>, transform_indices = @transform_5, window_bounds = array<i64: 16, 256>}, {pipeline_mode = #tpu.pipeline_mode<synchronous>, transform_indices = @transform_6, window_bounds = array<i64: 1, 256>}, {pipeline_mode = #tpu.pipeline_mode<synchronous>, transform_indices = @transform_7, window_bounds = array<i64: 256, 32>}, {pipeline_mode = #tpu.pipeline_mode<synchronous>, transform_indices = @transform_8, window_bounds = array<i64: 1, 32>}, {pipeline_mode = #tpu.pipeline_mode<synchronous>, transform_indices = @transform_9, window_bounds = array<i64: 2, 1, 32>}, {pipeline_mode = #tpu.pipeline_mode<synchronous>, transform_indices = @transform_10, window_bounds = array<i64: 2, 1, 32>}, {pipeline_mode = #tpu.pipeline_mode<synchronous>, transform_indices = @transform_11, window_bounds = array<i64: 2, 1, 32>}, {pipeline_mode = #tpu.pipeline_mode<synchronous>, transform_indices = @transform_12, window_bounds = array<i64: 2, 1, 32>}, {pipeline_mode = #tpu.pipeline_mode<synchronous>, transform_indices = @transform_13, window_bounds = array<i64: 2, 32, 96>}, {pipeline_mode = #tpu.pipeline_mode<synchronous>, transform_indices = @transform_14, window_bounds = array<i64: 2, 1, 96>}, {pipeline_mode = #tpu.pipeline_mode<synchronous>, transform_indices = @transform_15, window_bounds = array<i64: 2, 32, 32>}, {pipeline_mode = #tpu.pipeline_mode<synchronous>, transform_indices = @transform_16, window_bounds = array<i64: 2, 1, 32>}, {pipeline_mode = #tpu.pipeline_mode<synchronous>, transform_indices = @transform_17, window_bounds = array<i64: 2, 32, 128>}, {pipeline_mode = #tpu.pipeline_mode<synchronous>, transform_indices = @transform_18, window_bounds = array<i64: 2, 1, 128>}, {pipeline_mode = #tpu.pipeline_mode<synchronous>, transform_indices = @transform_19, window_bounds = array<i64: 2, 128, 32>}, {pipeline_mode = #tpu.pipeline_mode<synchronous>, transform_indices = @transform_20, window_bounds = array<i64: 2, 1, 32>}, {pipeline_mode = #tpu.pipeline_mode<synchronous>, transform_indices = @transform_21, window_bounds = array<i64: 1, 32>}, {pipeline_mode = #tpu.pipeline_mode<synchronous>, transform_indices = @transform_22, window_bounds = array<i64: 1, 32>}, {pipeline_mode = #tpu.pipeline_mode<synchronous>, transform_indices = @transform_23, window_bounds = array<i64: 32, 256>}, {pipeline_mode = #tpu.pipeline_mode<synchronous>, transform_indices = @transform_24, window_bounds = array<i64: 1, 256>}, {pipeline_mode = #tpu.pipeline_mode<synchronous>, transform_indices = @transform_25, window_bounds = array<i64: 256, 256>}, {pipeline_mode = #tpu.pipeline_mode<synchronous>, transform_indices = @transform_26, window_bounds = array<i64: 1, 256>}, {pipeline_mode = #tpu.pipeline_mode<synchronous>, transform_indices = @transform_27, window_bounds = array<i64: 256, 128>}, {pipeline_mode = #tpu.pipeline_mode<synchronous>, transform_indices = @transform_28, window_bounds = array<i64: 1, 128>}, {pipeline_mode = #tpu.pipeline_mode<synchronous>, transform_indices = @transform_29, window_bounds = array<i64: 2, 32, 64>}, {pipeline_mode = #tpu.pipeline_mode<synchronous>, transform_indices = @transform_30, window_bounds = array<i64: 2, 1, 64>}, {pipeline_mode = #tpu.pipeline_mode<synchronous>, transform_indices = @transform_31, window_bounds = array<i64: 2, 64, 128>}, {pipeline_mode = #tpu.pipeline_mode<synchronous>, transform_indices = @transform_32, window_bounds = array<i64: 2, 1, 128>}, {pipeline_mode = #tpu.pipeline_mode<synchronous>, transform_indices = @transform_33, window_bounds = array<i64: 32, 128>}, {pipeline_mode = #tpu.pipeline_mode<synchronous>, transform_indices = @transform_34, window_bounds = array<i64: 16, 128>}]} {
    %c0 = arith.constant 0 : index
    %c0_0 = arith.constant 0 : index
    %0 = vector.load %arg1[%c0, %c0_0] : memref<16x16xf32, #tpu.memory_space<vmem>>, vector<16x16xf32>
    %c0_1 = arith.constant 0 : index
    %c0_2 = arith.constant 0 : index
    %1 = vector.load %arg6[%c0_1, %c0_2] : memref<16x256xf32, #tpu.memory_space<vmem>>, vector<16x256xf32>
    %2 = arith.truncf %0 : vector<16x16xf32> to vector<16x16xbf16>
    %3 = arith.truncf %1 : vector<16x256xf32> to vector<16x256xbf16>
    %cst = arith.constant dense<0.000000e+00> : vector<16x256xf32>
    %4 = tpu.matmul %2, %3, %cst {dimension_numbers = #tpu.dot_dimension_numbers<[1], [0], [0], [1], [0, 0, 1, 1], [], []>} : vector<16x16xbf16>, vector<16x256xbf16>, vector<16x256xf32> -> vector<16x256xf32>
    %c0_3 = arith.constant 0 : index
    %c0_4 = arith.constant 0 : index
    %5 = vector.load %arg7[%c0_3, %c0_4] : memref<1x256xf32, #tpu.memory_space<vmem>>, vector<1x256xf32>
    %6 = vector.broadcast %5 : vector<1x256xf32> to vector<16x256xf32>
    %7 = arith.addf %4, %6 : vector<16x256xf32>
    %cst_5 = arith.constant 0.000000e+00 : f32
    %8 = vector.broadcast %cst_5 : f32 to vector<16x256xf32>
    %9 = arith.maximumf %7, %8 : vector<16x256xf32>
    %c0_6 = arith.constant 0 : index
    %c0_7 = arith.constant 0 : index
    %10 = vector.load %arg8[%c0_6, %c0_7] : memref<256x32xf32, #tpu.memory_space<vmem>>, vector<256x32xf32>
    %11 = arith.truncf %9 : vector<16x256xf32> to vector<16x256xbf16>
    %12 = arith.truncf %10 : vector<256x32xf32> to vector<256x32xbf16>
    %cst_8 = arith.constant dense<0.000000e+00> : vector<16x32xf32>
    %13 = tpu.matmul %11, %12, %cst_8 {dimension_numbers = #tpu.dot_dimension_numbers<[1], [0], [0], [1], [0, 0, 1, 1], [], []>} : vector<16x256xbf16>, vector<256x32xbf16>, vector<16x32xf32> -> vector<16x32xf32>
    %c0_9 = arith.constant 0 : index
    %c0_10 = arith.constant 0 : index
    %14 = vector.load %arg9[%c0_9, %c0_10] : memref<1x32xf32, #tpu.memory_space<vmem>>, vector<1x32xf32>
    %15 = vector.broadcast %14 : vector<1x32xf32> to vector<16x32xf32>
    %16 = arith.addf %13, %15 : vector<16x32xf32>
    %c0_11 = arith.constant 0 : index
    %c0_12 = arith.constant 0 : index
    %17 = vector.load %arg3[%c0_11, %c0_12] : memref<8x32xf32, #tpu.memory_space<vmem>>, vector<8x32xf32>
    %c0_13 = arith.constant 0 : index
    %c0_14 = arith.constant 0 : index
    %18 = vector.load %arg4[%c0_13, %c0_14] : memref<2x32xf32, #tpu.memory_space<vmem>>, vector<2x32xf32>
    %19 = vector.extract_strided_slice %16 {offsets = [0, 0], sizes = [8, 32], strides = [1, 1]} : vector<16x32xf32> to vector<8x32xf32>
    %c0_15 = arith.constant 0 : index
    %c0_16 = arith.constant 0 : index
    %20 = vector.load %arg2[%c0_15, %c0_16] : memref<2x32xf32, #tpu.memory_space<vmem>>, vector<1x32xf32>
    %21 = vector.broadcast %20 : vector<1x32xf32> to vector<8x32xf32>
    %22 = arith.addf %19, %21 : vector<8x32xf32>
    %23 = arith.addf %22, %17 : vector<8x32xf32>
    %cst_17 = arith.constant 0.000000e+00 : f32
    %24 = vector.broadcast %cst_17 : f32 to vector<6x32xf32>
    %25 = vector.extract_strided_slice %16 {offsets = [8, 0], sizes = [8, 32], strides = [1, 1]} : vector<16x32xf32> to vector<8x32xf32>
    %c1 = arith.constant 1 : index
    %c0_18 = arith.constant 0 : index
    %26 = vector.load %arg2[%c1, %c0_18] : memref<2x32xf32, #tpu.memory_space<vmem>>, vector<1x32xf32>
    %27 = vector.broadcast %26 : vector<1x32xf32> to vector<8x32xf32>
    %28 = arith.addf %25, %27 : vector<8x32xf32>
    %29 = arith.addf %28, %17 : vector<8x32xf32>
    %cst_19 = arith.constant 0.000000e+00 : f32
    %30 = vector.broadcast %cst_19 : f32 to vector<6x32xf32>
    %31 = tpu.concatenate %18, %23, %24, %18, %29, %30 in 0 : vector<2x32xf32>, vector<8x32xf32>, vector<6x32xf32>, vector<2x32xf32>, vector<8x32xf32>, vector<6x32xf32> -> vector<32x32xf32>
    %c0_20 = arith.constant 0 : index
    %c0_21 = arith.constant 0 : index
    %32 = vector.load %arg5[%c0_20, %c0_21] : memref<32x32xf32, #tpu.memory_space<vmem>>, vector<32x32xf32>
    %c0_22 = arith.constant 0 : index
    %c0_23 = arith.constant 0 : index
    %c0_24 = arith.constant 0 : index
    %33 = vector.load %arg10[%c0_22, %c0_23, %c0_24] : memref<2x1x32xf32, #tpu.memory_space<vmem>>, vector<1x1x32xf32>
    %34 = vector.shape_cast %33 : vector<1x1x32xf32> to vector<1x32xf32>
    %c0_25 = arith.constant 0 : index
    %c0_26 = arith.constant 0 : index
    %c0_27 = arith.constant 0 : index
    %35 = vector.load %arg11[%c0_25, %c0_26, %c0_27] : memref<2x1x32xf32, #tpu.memory_space<vmem>>, vector<1x1x32xf32>
    %36 = vector.shape_cast %35 : vector<1x1x32xf32> to vector<1x32xf32>
    %cst_28 = arith.constant dense<0.000000e+00> : vector<32xf32>
    %37 = vector.multi_reduction <add>, %31, %cst_28 [1] : vector<32x32xf32> to vector<32xf32>
    %38 = vector.shape_cast %37 : vector<32xf32> to vector<32x1xf32>
    %cst_29 = arith.constant 3.200000e+01 : f32
    %39 = vector.broadcast %cst_29 : f32 to vector<32x1xf32>
    %40 = arith.divf %38, %39 : vector<32x1xf32>
    %41 = vector.broadcast %40 : vector<32x1xf32> to vector<32x32xf32>
    %42 = arith.subf %31, %41 : vector<32x32xf32>
    %43 = arith.mulf %42, %42 : vector<32x32xf32>
    %cst_30 = arith.constant dense<0.000000e+00> : vector<32xf32>
    %44 = vector.multi_reduction <add>, %43, %cst_30 [1] : vector<32x32xf32> to vector<32xf32>
    %45 = vector.shape_cast %44 : vector<32xf32> to vector<32x1xf32>
    %cst_31 = arith.constant 3.200000e+01 : f32
    %46 = vector.broadcast %cst_31 : f32 to vector<32x1xf32>
    %47 = arith.divf %45, %46 : vector<32x1xf32>
    %48 = vector.broadcast %40 : vector<32x1xf32> to vector<32x32xf32>
    %49 = arith.subf %31, %48 : vector<32x32xf32>
    %cst_32 = arith.constant 9.99999974E-6 : f32
    %50 = vector.broadcast %cst_32 : f32 to vector<32x1xf32>
    %51 = arith.addf %47, %50 : vector<32x1xf32>
    %52 = math.rsqrt %51 : vector<32x1xf32>
    %53 = vector.broadcast %52 : vector<32x1xf32> to vector<32x32xf32>
    %54 = arith.mulf %49, %53 : vector<32x32xf32>
    %55 = vector.broadcast %34 : vector<1x32xf32> to vector<32x32xf32>
    %56 = arith.mulf %54, %55 : vector<32x32xf32>
    %57 = vector.broadcast %36 : vector<1x32xf32> to vector<32x32xf32>
    %58 = arith.addf %56, %57 : vector<32x32xf32>
    %c0_33 = arith.constant 0 : index
    %c0_34 = arith.constant 0 : index
    %c0_35 = arith.constant 0 : index
    %59 = vector.load %arg14[%c0_33, %c0_34, %c0_35] : memref<2x32x96xf32, #tpu.memory_space<vmem>>, vector<1x32x96xf32>
    %60 = vector.shape_cast %59 : vector<1x32x96xf32> to vector<32x96xf32>
    %61 = arith.truncf %58 : vector<32x32xf32> to vector<32x32xbf16>
    %62 = arith.truncf %60 : vector<32x96xf32> to vector<32x96xbf16>
    %cst_36 = arith.constant dense<0.000000e+00> : vector<32x96xf32>
    %63 = tpu.matmul %61, %62, %cst_36 {dimension_numbers = #tpu.dot_dimension_numbers<[1], [0], [0], [1], [0, 0, 1, 1], [], []>} : vector<32x32xbf16>, vector<32x96xbf16>, vector<32x96xf32> -> vector<32x96xf32>
    %c0_37 = arith.constant 0 : index
    %c0_38 = arith.constant 0 : index
    %c0_39 = arith.constant 0 : index
    %64 = vector.load %arg15[%c0_37, %c0_38, %c0_39] : memref<2x1x96xf32, #tpu.memory_space<vmem>>, vector<1x1x96xf32>
    %65 = vector.shape_cast %64 : vector<1x1x96xf32> to vector<1x96xf32>
    %66 = vector.broadcast %65 : vector<1x96xf32> to vector<32x96xf32>
    %67 = arith.addf %63, %66 : vector<32x96xf32>
    %68 = vector.extract_strided_slice %67 {offsets = [0, 0], sizes = [32, 8], strides = [1, 1]} : vector<32x96xf32> to vector<32x8xf32>
    %69 = vector.extract_strided_slice %67 {offsets = [0, 32], sizes = [32, 8], strides = [1, 1]} : vector<32x96xf32> to vector<32x8xf32>
    %70 = vector.extract_strided_slice %67 {offsets = [0, 64], sizes = [32, 8], strides = [1, 1]} : vector<32x96xf32> to vector<32x8xf32>
    %71 = arith.truncf %68 : vector<32x8xf32> to vector<32x8xbf16>
    %72 = arith.truncf %69 : vector<32x8xf32> to vector<32x8xbf16>
    %cst_40 = arith.constant dense<0.000000e+00> : vector<32x32xf32>
    %73 = tpu.matmul %71, %72, %cst_40 {dimension_numbers = #tpu.dot_dimension_numbers<[1], [1], [0], [0], [0, 0, 1, 0], [], []>} : vector<32x8xbf16>, vector<32x8xbf16>, vector<32x32xf32> -> vector<32x32xf32>
    %cst_41 = arith.constant 0.353553385 : f32
    %74 = vector.broadcast %cst_41 : f32 to vector<32x32xf32>
    %75 = arith.mulf %73, %74 : vector<32x32xf32>
    %76 = arith.addf %75, %32 : vector<32x32xf32>
    %cst_42 = arith.constant dense<0xFF800000> : vector<32xf32>
    %77 = vector.multi_reduction <maximumf>, %76, %cst_42 [1] : vector<32x32xf32> to vector<32xf32>
    %78 = vector.shape_cast %77 : vector<32xf32> to vector<32x1xf32>
    %79 = vector.broadcast %78 : vector<32x1xf32> to vector<32x32xf32>
    %80 = arith.subf %76, %79 : vector<32x32xf32>
    %81 = math.exp %80 : vector<32x32xf32>
    %cst_43 = arith.constant dense<0.000000e+00> : vector<32xf32>
    %82 = vector.multi_reduction <add>, %81, %cst_43 [1] : vector<32x32xf32> to vector<32xf32>
    %83 = vector.shape_cast %82 : vector<32xf32> to vector<32x1xf32>
    %84 = tpu.reciprocal %83 {approx = true} : vector<32x1xf32> -> vector<32x1xf32>
    %85 = vector.broadcast %84 : vector<32x1xf32> to vector<32x32xf32>
    %86 = arith.mulf %81, %85 : vector<32x32xf32>
    %87 = arith.truncf %86 : vector<32x32xf32> to vector<32x32xbf16>
    %88 = arith.truncf %70 : vector<32x8xf32> to vector<32x8xbf16>
    %cst_44 = arith.constant dense<0.000000e+00> : vector<32x8xf32>
    %89 = tpu.matmul %87, %88, %cst_44 {dimension_numbers = #tpu.dot_dimension_numbers<[1], [0], [0], [1], [0, 0, 1, 1], [], []>} : vector<32x32xbf16>, vector<32x8xbf16>, vector<32x8xf32> -> vector<32x8xf32>
    %90 = vector.extract_strided_slice %67 {offsets = [0, 8], sizes = [32, 8], strides = [1, 1]} : vector<32x96xf32> to vector<32x8xf32>
    %91 = vector.extract_strided_slice %67 {offsets = [0, 40], sizes = [32, 8], strides = [1, 1]} : vector<32x96xf32> to vector<32x8xf32>
    %92 = vector.extract_strided_slice %67 {offsets = [0, 72], sizes = [32, 8], strides = [1, 1]} : vector<32x96xf32> to vector<32x8xf32>
    %93 = arith.truncf %90 : vector<32x8xf32> to vector<32x8xbf16>
    %94 = arith.truncf %91 : vector<32x8xf32> to vector<32x8xbf16>
    %cst_45 = arith.constant dense<0.000000e+00> : vector<32x32xf32>
    %95 = tpu.matmul %93, %94, %cst_45 {dimension_numbers = #tpu.dot_dimension_numbers<[1], [1], [0], [0], [0, 0, 1, 0], [], []>} : vector<32x8xbf16>, vector<32x8xbf16>, vector<32x32xf32> -> vector<32x32xf32>
    %cst_46 = arith.constant 0.353553385 : f32
    %96 = vector.broadcast %cst_46 : f32 to vector<32x32xf32>
    %97 = arith.mulf %95, %96 : vector<32x32xf32>
    %98 = arith.addf %97, %32 : vector<32x32xf32>
    %cst_47 = arith.constant dense<0xFF800000> : vector<32xf32>
    %99 = vector.multi_reduction <maximumf>, %98, %cst_47 [1] : vector<32x32xf32> to vector<32xf32>
    %100 = vector.shape_cast %99 : vector<32xf32> to vector<32x1xf32>
    %101 = vector.broadcast %100 : vector<32x1xf32> to vector<32x32xf32>
    %102 = arith.subf %98, %101 : vector<32x32xf32>
    %103 = math.exp %102 : vector<32x32xf32>
    %cst_48 = arith.constant dense<0.000000e+00> : vector<32xf32>
    %104 = vector.multi_reduction <add>, %103, %cst_48 [1] : vector<32x32xf32> to vector<32xf32>
    %105 = vector.shape_cast %104 : vector<32xf32> to vector<32x1xf32>
    %106 = tpu.reciprocal %105 {approx = true} : vector<32x1xf32> -> vector<32x1xf32>
    %107 = vector.broadcast %106 : vector<32x1xf32> to vector<32x32xf32>
    %108 = arith.mulf %103, %107 : vector<32x32xf32>
    %109 = arith.truncf %108 : vector<32x32xf32> to vector<32x32xbf16>
    %110 = arith.truncf %92 : vector<32x8xf32> to vector<32x8xbf16>
    %cst_49 = arith.constant dense<0.000000e+00> : vector<32x8xf32>
    %111 = tpu.matmul %109, %110, %cst_49 {dimension_numbers = #tpu.dot_dimension_numbers<[1], [0], [0], [1], [0, 0, 1, 1], [], []>} : vector<32x32xbf16>, vector<32x8xbf16>, vector<32x8xf32> -> vector<32x8xf32>
    %112 = vector.extract_strided_slice %67 {offsets = [0, 16], sizes = [32, 8], strides = [1, 1]} : vector<32x96xf32> to vector<32x8xf32>
    %113 = vector.extract_strided_slice %67 {offsets = [0, 48], sizes = [32, 8], strides = [1, 1]} : vector<32x96xf32> to vector<32x8xf32>
    %114 = vector.extract_strided_slice %67 {offsets = [0, 80], sizes = [32, 8], strides = [1, 1]} : vector<32x96xf32> to vector<32x8xf32>
    %115 = arith.truncf %112 : vector<32x8xf32> to vector<32x8xbf16>
    %116 = arith.truncf %113 : vector<32x8xf32> to vector<32x8xbf16>
    %cst_50 = arith.constant dense<0.000000e+00> : vector<32x32xf32>
    %117 = tpu.matmul %115, %116, %cst_50 {dimension_numbers = #tpu.dot_dimension_numbers<[1], [1], [0], [0], [0, 0, 1, 0], [], []>} : vector<32x8xbf16>, vector<32x8xbf16>, vector<32x32xf32> -> vector<32x32xf32>
    %cst_51 = arith.constant 0.353553385 : f32
    %118 = vector.broadcast %cst_51 : f32 to vector<32x32xf32>
    %119 = arith.mulf %117, %118 : vector<32x32xf32>
    %120 = arith.addf %119, %32 : vector<32x32xf32>
    %cst_52 = arith.constant dense<0xFF800000> : vector<32xf32>
    %121 = vector.multi_reduction <maximumf>, %120, %cst_52 [1] : vector<32x32xf32> to vector<32xf32>
    %122 = vector.shape_cast %121 : vector<32xf32> to vector<32x1xf32>
    %123 = vector.broadcast %122 : vector<32x1xf32> to vector<32x32xf32>
    %124 = arith.subf %120, %123 : vector<32x32xf32>
    %125 = math.exp %124 : vector<32x32xf32>
    %cst_53 = arith.constant dense<0.000000e+00> : vector<32xf32>
    %126 = vector.multi_reduction <add>, %125, %cst_53 [1] : vector<32x32xf32> to vector<32xf32>
    %127 = vector.shape_cast %126 : vector<32xf32> to vector<32x1xf32>
    %128 = tpu.reciprocal %127 {approx = true} : vector<32x1xf32> -> vector<32x1xf32>
    %129 = vector.broadcast %128 : vector<32x1xf32> to vector<32x32xf32>
    %130 = arith.mulf %125, %129 : vector<32x32xf32>
    %131 = arith.truncf %130 : vector<32x32xf32> to vector<32x32xbf16>
    %132 = arith.truncf %114 : vector<32x8xf32> to vector<32x8xbf16>
    %cst_54 = arith.constant dense<0.000000e+00> : vector<32x8xf32>
    %133 = tpu.matmul %131, %132, %cst_54 {dimension_numbers = #tpu.dot_dimension_numbers<[1], [0], [0], [1], [0, 0, 1, 1], [], []>} : vector<32x32xbf16>, vector<32x8xbf16>, vector<32x8xf32> -> vector<32x8xf32>
    %134 = vector.extract_strided_slice %67 {offsets = [0, 24], sizes = [32, 8], strides = [1, 1]} : vector<32x96xf32> to vector<32x8xf32>
    %135 = vector.extract_strided_slice %67 {offsets = [0, 56], sizes = [32, 8], strides = [1, 1]} : vector<32x96xf32> to vector<32x8xf32>
    %136 = vector.extract_strided_slice %67 {offsets = [0, 88], sizes = [32, 8], strides = [1, 1]} : vector<32x96xf32> to vector<32x8xf32>
    %137 = arith.truncf %134 : vector<32x8xf32> to vector<32x8xbf16>
    %138 = arith.truncf %135 : vector<32x8xf32> to vector<32x8xbf16>
    %cst_55 = arith.constant dense<0.000000e+00> : vector<32x32xf32>
    %139 = tpu.matmul %137, %138, %cst_55 {dimension_numbers = #tpu.dot_dimension_numbers<[1], [1], [0], [0], [0, 0, 1, 0], [], []>} : vector<32x8xbf16>, vector<32x8xbf16>, vector<32x32xf32> -> vector<32x32xf32>
    %cst_56 = arith.constant 0.353553385 : f32
    %140 = vector.broadcast %cst_56 : f32 to vector<32x32xf32>
    %141 = arith.mulf %139, %140 : vector<32x32xf32>
    %142 = arith.addf %141, %32 : vector<32x32xf32>
    %cst_57 = arith.constant dense<0xFF800000> : vector<32xf32>
    %143 = vector.multi_reduction <maximumf>, %142, %cst_57 [1] : vector<32x32xf32> to vector<32xf32>
    %144 = vector.shape_cast %143 : vector<32xf32> to vector<32x1xf32>
    %145 = vector.broadcast %144 : vector<32x1xf32> to vector<32x32xf32>
    %146 = arith.subf %142, %145 : vector<32x32xf32>
    %147 = math.exp %146 : vector<32x32xf32>
    %cst_58 = arith.constant dense<0.000000e+00> : vector<32xf32>
    %148 = vector.multi_reduction <add>, %147, %cst_58 [1] : vector<32x32xf32> to vector<32xf32>
    %149 = vector.shape_cast %148 : vector<32xf32> to vector<32x1xf32>
    %150 = tpu.reciprocal %149 {approx = true} : vector<32x1xf32> -> vector<32x1xf32>
    %151 = vector.broadcast %150 : vector<32x1xf32> to vector<32x32xf32>
    %152 = arith.mulf %147, %151 : vector<32x32xf32>
    %153 = arith.truncf %152 : vector<32x32xf32> to vector<32x32xbf16>
    %154 = arith.truncf %136 : vector<32x8xf32> to vector<32x8xbf16>
    %cst_59 = arith.constant dense<0.000000e+00> : vector<32x8xf32>
    %155 = tpu.matmul %153, %154, %cst_59 {dimension_numbers = #tpu.dot_dimension_numbers<[1], [0], [0], [1], [0, 0, 1, 1], [], []>} : vector<32x32xbf16>, vector<32x8xbf16>, vector<32x8xf32> -> vector<32x8xf32>
    %156 = tpu.concatenate %89, %111, %133, %155 in 1 : vector<32x8xf32>, vector<32x8xf32>, vector<32x8xf32>, vector<32x8xf32> -> vector<32x32xf32>
    %c0_60 = arith.constant 0 : index
    %c0_61 = arith.constant 0 : index
    %c0_62 = arith.constant 0 : index
    %157 = vector.load %arg16[%c0_60, %c0_61, %c0_62] : memref<2x32x32xf32, #tpu.memory_space<vmem>>, vector<1x32x32xf32>
    %158 = vector.shape_cast %157 : vector<1x32x32xf32> to vector<32x32xf32>
    %159 = arith.truncf %156 : vector<32x32xf32> to vector<32x32xbf16>
    %160 = arith.truncf %158 : vector<32x32xf32> to vector<32x32xbf16>
    %cst_63 = arith.constant dense<0.000000e+00> : vector<32x32xf32>
    %161 = tpu.matmul %159, %160, %cst_63 {dimension_numbers = #tpu.dot_dimension_numbers<[1], [0], [0], [1], [0, 0, 1, 1], [], []>} : vector<32x32xbf16>, vector<32x32xbf16>, vector<32x32xf32> -> vector<32x32xf32>
    %162 = arith.addf %31, %161 : vector<32x32xf32>
    %c0_64 = arith.constant 0 : index
    %c0_65 = arith.constant 0 : index
    %c0_66 = arith.constant 0 : index
    %163 = vector.load %arg17[%c0_64, %c0_65, %c0_66] : memref<2x1x32xf32, #tpu.memory_space<vmem>>, vector<1x1x32xf32>
    %164 = vector.shape_cast %163 : vector<1x1x32xf32> to vector<1x32xf32>
    %165 = vector.broadcast %164 : vector<1x32xf32> to vector<32x32xf32>
    %166 = arith.addf %162, %165 : vector<32x32xf32>
    %c0_67 = arith.constant 0 : index
    %c0_68 = arith.constant 0 : index
    %c0_69 = arith.constant 0 : index
    %167 = vector.load %arg12[%c0_67, %c0_68, %c0_69] : memref<2x1x32xf32, #tpu.memory_space<vmem>>, vector<1x1x32xf32>
    %168 = vector.shape_cast %167 : vector<1x1x32xf32> to vector<1x32xf32>
    %c0_70 = arith.constant 0 : index
    %c0_71 = arith.constant 0 : index
    %c0_72 = arith.constant 0 : index
    %169 = vector.load %arg13[%c0_70, %c0_71, %c0_72] : memref<2x1x32xf32, #tpu.memory_space<vmem>>, vector<1x1x32xf32>
    %170 = vector.shape_cast %169 : vector<1x1x32xf32> to vector<1x32xf32>
    %cst_73 = arith.constant dense<0.000000e+00> : vector<32xf32>
    %171 = vector.multi_reduction <add>, %166, %cst_73 [1] : vector<32x32xf32> to vector<32xf32>
    %172 = vector.shape_cast %171 : vector<32xf32> to vector<32x1xf32>
    %cst_74 = arith.constant 3.200000e+01 : f32
    %173 = vector.broadcast %cst_74 : f32 to vector<32x1xf32>
    %174 = arith.divf %172, %173 : vector<32x1xf32>
    %175 = vector.broadcast %174 : vector<32x1xf32> to vector<32x32xf32>
    %176 = arith.subf %166, %175 : vector<32x32xf32>
    %177 = arith.mulf %176, %176 : vector<32x32xf32>
    %cst_75 = arith.constant dense<0.000000e+00> : vector<32xf32>
    %178 = vector.multi_reduction <add>, %177, %cst_75 [1] : vector<32x32xf32> to vector<32xf32>
    %179 = vector.shape_cast %178 : vector<32xf32> to vector<32x1xf32>
    %cst_76 = arith.constant 3.200000e+01 : f32
    %180 = vector.broadcast %cst_76 : f32 to vector<32x1xf32>
    %181 = arith.divf %179, %180 : vector<32x1xf32>
    %182 = vector.broadcast %174 : vector<32x1xf32> to vector<32x32xf32>
    %183 = arith.subf %166, %182 : vector<32x32xf32>
    %cst_77 = arith.constant 9.99999974E-6 : f32
    %184 = vector.broadcast %cst_77 : f32 to vector<32x1xf32>
    %185 = arith.addf %181, %184 : vector<32x1xf32>
    %186 = math.rsqrt %185 : vector<32x1xf32>
    %187 = vector.broadcast %186 : vector<32x1xf32> to vector<32x32xf32>
    %188 = arith.mulf %183, %187 : vector<32x32xf32>
    %189 = vector.broadcast %168 : vector<1x32xf32> to vector<32x32xf32>
    %190 = arith.mulf %188, %189 : vector<32x32xf32>
    %191 = vector.broadcast %170 : vector<1x32xf32> to vector<32x32xf32>
    %192 = arith.addf %190, %191 : vector<32x32xf32>
    %c0_78 = arith.constant 0 : index
    %c0_79 = arith.constant 0 : index
    %c0_80 = arith.constant 0 : index
    %193 = vector.load %arg18[%c0_78, %c0_79, %c0_80] : memref<2x32x128xf32, #tpu.memory_space<vmem>>, vector<1x32x128xf32>
    %194 = vector.shape_cast %193 : vector<1x32x128xf32> to vector<32x128xf32>
    %195 = arith.truncf %192 : vector<32x32xf32> to vector<32x32xbf16>
    %196 = arith.truncf %194 : vector<32x128xf32> to vector<32x128xbf16>
    %cst_81 = arith.constant dense<0.000000e+00> : vector<32x128xf32>
    %197 = tpu.matmul %195, %196, %cst_81 {dimension_numbers = #tpu.dot_dimension_numbers<[1], [0], [0], [1], [0, 0, 1, 1], [], []>} : vector<32x32xbf16>, vector<32x128xbf16>, vector<32x128xf32> -> vector<32x128xf32>
    %c0_82 = arith.constant 0 : index
    %c0_83 = arith.constant 0 : index
    %c0_84 = arith.constant 0 : index
    %198 = vector.load %arg19[%c0_82, %c0_83, %c0_84] : memref<2x1x128xf32, #tpu.memory_space<vmem>>, vector<1x1x128xf32>
    %199 = vector.shape_cast %198 : vector<1x1x128xf32> to vector<1x128xf32>
    %200 = vector.broadcast %199 : vector<1x128xf32> to vector<32x128xf32>
    %201 = arith.addf %197, %200 : vector<32x128xf32>
    %cst_85 = arith.constant 5.000000e-01 : f32
    %202 = vector.broadcast %cst_85 : f32 to vector<32x128xf32>
    %203 = arith.mulf %202, %201 : vector<32x128xf32>
    %cst_86 = arith.constant 0.707106769 : f32
    %204 = vector.broadcast %cst_86 : f32 to vector<32x128xf32>
    %205 = arith.mulf %201, %204 : vector<32x128xf32>
    %cst_87 = arith.constant 0.000000e+00 : f32
    %206 = vector.broadcast %cst_87 : f32 to vector<32x128xf32>
    %207 = arith.cmpf oge, %205, %206 : vector<32x128xf32>
    %cst_88 = arith.constant 1.000000e+00 : f32
    %cst_89 = arith.constant -1.000000e+00 : f32
    %208 = vector.broadcast %cst_88 : f32 to vector<32x128xf32>
    %209 = vector.broadcast %cst_89 : f32 to vector<32x128xf32>
    %210 = arith.select %207, %208, %209 : vector<32x128xi1>, vector<32x128xf32>
    %211 = math.absf %205 : vector<32x128xf32>
    %cst_90 = arith.constant 0.327591091 : f32
    %212 = vector.broadcast %cst_90 : f32 to vector<32x128xf32>
    %213 = arith.mulf %212, %211 : vector<32x128xf32>
    %cst_91 = arith.constant 1.000000e+00 : f32
    %214 = vector.broadcast %cst_91 : f32 to vector<32x128xf32>
    %215 = arith.addf %214, %213 : vector<32x128xf32>
    %cst_92 = arith.constant 1.000000e+00 : f32
    %216 = vector.broadcast %cst_92 : f32 to vector<32x128xf32>
    %217 = arith.divf %216, %215 : vector<32x128xf32>
    %cst_93 = arith.constant 1.06140542 : f32
    %218 = vector.broadcast %cst_93 : f32 to vector<32x128xf32>
    %219 = arith.mulf %218, %217 : vector<32x128xf32>
    %cst_94 = arith.constant -1.45315206 : f32
    %220 = vector.broadcast %cst_94 : f32 to vector<32x128xf32>
    %221 = arith.addf %219, %220 : vector<32x128xf32>
    %222 = arith.mulf %221, %217 : vector<32x128xf32>
    %cst_95 = arith.constant 1.42141378 : f32
    %223 = vector.broadcast %cst_95 : f32 to vector<32x128xf32>
    %224 = arith.addf %222, %223 : vector<32x128xf32>
    %225 = arith.mulf %224, %217 : vector<32x128xf32>
    %cst_96 = arith.constant -0.284496725 : f32
    %226 = vector.broadcast %cst_96 : f32 to vector<32x128xf32>
    %227 = arith.addf %225, %226 : vector<32x128xf32>
    %228 = arith.mulf %227, %217 : vector<32x128xf32>
    %cst_97 = arith.constant 0.254829586 : f32
    %229 = vector.broadcast %cst_97 : f32 to vector<32x128xf32>
    %230 = arith.addf %228, %229 : vector<32x128xf32>
    %231 = arith.mulf %230, %217 : vector<32x128xf32>
    %cst_98 = arith.constant 0.000000e+00 : f32
    %232 = vector.broadcast %cst_98 : f32 to vector<32x128xf32>
    %233 = arith.subf %232, %211 : vector<32x128xf32>
    %234 = arith.mulf %233, %211 : vector<32x128xf32>
    %235 = math.exp %234 : vector<32x128xf32>
    %236 = arith.mulf %231, %235 : vector<32x128xf32>
    %cst_99 = arith.constant 1.000000e+00 : f32
    %237 = vector.broadcast %cst_99 : f32 to vector<32x128xf32>
    %238 = arith.subf %237, %236 : vector<32x128xf32>
    %239 = arith.mulf %210, %238 : vector<32x128xf32>
    %cst_100 = arith.constant 1.000000e+00 : f32
    %240 = vector.broadcast %cst_100 : f32 to vector<32x128xf32>
    %241 = arith.addf %240, %239 : vector<32x128xf32>
    %242 = arith.mulf %203, %241 : vector<32x128xf32>
    %c0_101 = arith.constant 0 : index
    %c0_102 = arith.constant 0 : index
    %c0_103 = arith.constant 0 : index
    %243 = vector.load %arg20[%c0_101, %c0_102, %c0_103] : memref<2x128x32xf32, #tpu.memory_space<vmem>>, vector<1x128x32xf32>
    %244 = vector.shape_cast %243 : vector<1x128x32xf32> to vector<128x32xf32>
    %245 = arith.truncf %242 : vector<32x128xf32> to vector<32x128xbf16>
    %246 = arith.truncf %244 : vector<128x32xf32> to vector<128x32xbf16>
    %cst_104 = arith.constant dense<0.000000e+00> : vector<32x32xf32>
    %247 = tpu.matmul %245, %246, %cst_104 {dimension_numbers = #tpu.dot_dimension_numbers<[1], [0], [0], [1], [0, 0, 1, 1], [], []>} : vector<32x128xbf16>, vector<128x32xbf16>, vector<32x32xf32> -> vector<32x32xf32>
    %248 = arith.addf %166, %247 : vector<32x32xf32>
    %c0_105 = arith.constant 0 : index
    %c0_106 = arith.constant 0 : index
    %c0_107 = arith.constant 0 : index
    %249 = vector.load %arg21[%c0_105, %c0_106, %c0_107] : memref<2x1x32xf32, #tpu.memory_space<vmem>>, vector<1x1x32xf32>
    %250 = vector.shape_cast %249 : vector<1x1x32xf32> to vector<1x32xf32>
    %251 = vector.broadcast %250 : vector<1x32xf32> to vector<32x32xf32>
    %252 = arith.addf %248, %251 : vector<32x32xf32>
    %c1_108 = arith.constant 1 : index
    %c0_109 = arith.constant 0 : index
    %c0_110 = arith.constant 0 : index
    %253 = vector.load %arg10[%c1_108, %c0_109, %c0_110] : memref<2x1x32xf32, #tpu.memory_space<vmem>>, vector<1x1x32xf32>
    %254 = vector.shape_cast %253 : vector<1x1x32xf32> to vector<1x32xf32>
    %c1_111 = arith.constant 1 : index
    %c0_112 = arith.constant 0 : index
    %c0_113 = arith.constant 0 : index
    %255 = vector.load %arg11[%c1_111, %c0_112, %c0_113] : memref<2x1x32xf32, #tpu.memory_space<vmem>>, vector<1x1x32xf32>
    %256 = vector.shape_cast %255 : vector<1x1x32xf32> to vector<1x32xf32>
    %cst_114 = arith.constant dense<0.000000e+00> : vector<32xf32>
    %257 = vector.multi_reduction <add>, %252, %cst_114 [1] : vector<32x32xf32> to vector<32xf32>
    %258 = vector.shape_cast %257 : vector<32xf32> to vector<32x1xf32>
    %cst_115 = arith.constant 3.200000e+01 : f32
    %259 = vector.broadcast %cst_115 : f32 to vector<32x1xf32>
    %260 = arith.divf %258, %259 : vector<32x1xf32>
    %261 = vector.broadcast %260 : vector<32x1xf32> to vector<32x32xf32>
    %262 = arith.subf %252, %261 : vector<32x32xf32>
    %263 = arith.mulf %262, %262 : vector<32x32xf32>
    %cst_116 = arith.constant dense<0.000000e+00> : vector<32xf32>
    %264 = vector.multi_reduction <add>, %263, %cst_116 [1] : vector<32x32xf32> to vector<32xf32>
    %265 = vector.shape_cast %264 : vector<32xf32> to vector<32x1xf32>
    %cst_117 = arith.constant 3.200000e+01 : f32
    %266 = vector.broadcast %cst_117 : f32 to vector<32x1xf32>
    %267 = arith.divf %265, %266 : vector<32x1xf32>
    %268 = vector.broadcast %260 : vector<32x1xf32> to vector<32x32xf32>
    %269 = arith.subf %252, %268 : vector<32x32xf32>
    %cst_118 = arith.constant 9.99999974E-6 : f32
    %270 = vector.broadcast %cst_118 : f32 to vector<32x1xf32>
    %271 = arith.addf %267, %270 : vector<32x1xf32>
    %272 = math.rsqrt %271 : vector<32x1xf32>
    %273 = vector.broadcast %272 : vector<32x1xf32> to vector<32x32xf32>
    %274 = arith.mulf %269, %273 : vector<32x32xf32>
    %275 = vector.broadcast %254 : vector<1x32xf32> to vector<32x32xf32>
    %276 = arith.mulf %274, %275 : vector<32x32xf32>
    %277 = vector.broadcast %256 : vector<1x32xf32> to vector<32x32xf32>
    %278 = arith.addf %276, %277 : vector<32x32xf32>
    %c1_119 = arith.constant 1 : index
    %c0_120 = arith.constant 0 : index
    %c0_121 = arith.constant 0 : index
    %279 = vector.load %arg14[%c1_119, %c0_120, %c0_121] : memref<2x32x96xf32, #tpu.memory_space<vmem>>, vector<1x32x96xf32>
    %280 = vector.shape_cast %279 : vector<1x32x96xf32> to vector<32x96xf32>
    %281 = arith.truncf %278 : vector<32x32xf32> to vector<32x32xbf16>
    %282 = arith.truncf %280 : vector<32x96xf32> to vector<32x96xbf16>
    %cst_122 = arith.constant dense<0.000000e+00> : vector<32x96xf32>
    %283 = tpu.matmul %281, %282, %cst_122 {dimension_numbers = #tpu.dot_dimension_numbers<[1], [0], [0], [1], [0, 0, 1, 1], [], []>} : vector<32x32xbf16>, vector<32x96xbf16>, vector<32x96xf32> -> vector<32x96xf32>
    %c1_123 = arith.constant 1 : index
    %c0_124 = arith.constant 0 : index
    %c0_125 = arith.constant 0 : index
    %284 = vector.load %arg15[%c1_123, %c0_124, %c0_125] : memref<2x1x96xf32, #tpu.memory_space<vmem>>, vector<1x1x96xf32>
    %285 = vector.shape_cast %284 : vector<1x1x96xf32> to vector<1x96xf32>
    %286 = vector.broadcast %285 : vector<1x96xf32> to vector<32x96xf32>
    %287 = arith.addf %283, %286 : vector<32x96xf32>
    %288 = vector.extract_strided_slice %287 {offsets = [0, 0], sizes = [32, 8], strides = [1, 1]} : vector<32x96xf32> to vector<32x8xf32>
    %289 = vector.extract_strided_slice %287 {offsets = [0, 32], sizes = [32, 8], strides = [1, 1]} : vector<32x96xf32> to vector<32x8xf32>
    %290 = vector.extract_strided_slice %287 {offsets = [0, 64], sizes = [32, 8], strides = [1, 1]} : vector<32x96xf32> to vector<32x8xf32>
    %291 = arith.truncf %288 : vector<32x8xf32> to vector<32x8xbf16>
    %292 = arith.truncf %289 : vector<32x8xf32> to vector<32x8xbf16>
    %cst_126 = arith.constant dense<0.000000e+00> : vector<32x32xf32>
    %293 = tpu.matmul %291, %292, %cst_126 {dimension_numbers = #tpu.dot_dimension_numbers<[1], [1], [0], [0], [0, 0, 1, 0], [], []>} : vector<32x8xbf16>, vector<32x8xbf16>, vector<32x32xf32> -> vector<32x32xf32>
    %cst_127 = arith.constant 0.353553385 : f32
    %294 = vector.broadcast %cst_127 : f32 to vector<32x32xf32>
    %295 = arith.mulf %293, %294 : vector<32x32xf32>
    %296 = arith.addf %295, %32 : vector<32x32xf32>
    %cst_128 = arith.constant dense<0xFF800000> : vector<32xf32>
    %297 = vector.multi_reduction <maximumf>, %296, %cst_128 [1] : vector<32x32xf32> to vector<32xf32>
    %298 = vector.shape_cast %297 : vector<32xf32> to vector<32x1xf32>
    %299 = vector.broadcast %298 : vector<32x1xf32> to vector<32x32xf32>
    %300 = arith.subf %296, %299 : vector<32x32xf32>
    %301 = math.exp %300 : vector<32x32xf32>
    %cst_129 = arith.constant dense<0.000000e+00> : vector<32xf32>
    %302 = vector.multi_reduction <add>, %301, %cst_129 [1] : vector<32x32xf32> to vector<32xf32>
    %303 = vector.shape_cast %302 : vector<32xf32> to vector<32x1xf32>
    %304 = tpu.reciprocal %303 {approx = true} : vector<32x1xf32> -> vector<32x1xf32>
    %305 = vector.broadcast %304 : vector<32x1xf32> to vector<32x32xf32>
    %306 = arith.mulf %301, %305 : vector<32x32xf32>
    %307 = arith.truncf %306 : vector<32x32xf32> to vector<32x32xbf16>
    %308 = arith.truncf %290 : vector<32x8xf32> to vector<32x8xbf16>
    %cst_130 = arith.constant dense<0.000000e+00> : vector<32x8xf32>
    %309 = tpu.matmul %307, %308, %cst_130 {dimension_numbers = #tpu.dot_dimension_numbers<[1], [0], [0], [1], [0, 0, 1, 1], [], []>} : vector<32x32xbf16>, vector<32x8xbf16>, vector<32x8xf32> -> vector<32x8xf32>
    %310 = vector.extract_strided_slice %287 {offsets = [0, 8], sizes = [32, 8], strides = [1, 1]} : vector<32x96xf32> to vector<32x8xf32>
    %311 = vector.extract_strided_slice %287 {offsets = [0, 40], sizes = [32, 8], strides = [1, 1]} : vector<32x96xf32> to vector<32x8xf32>
    %312 = vector.extract_strided_slice %287 {offsets = [0, 72], sizes = [32, 8], strides = [1, 1]} : vector<32x96xf32> to vector<32x8xf32>
    %313 = arith.truncf %310 : vector<32x8xf32> to vector<32x8xbf16>
    %314 = arith.truncf %311 : vector<32x8xf32> to vector<32x8xbf16>
    %cst_131 = arith.constant dense<0.000000e+00> : vector<32x32xf32>
    %315 = tpu.matmul %313, %314, %cst_131 {dimension_numbers = #tpu.dot_dimension_numbers<[1], [1], [0], [0], [0, 0, 1, 0], [], []>} : vector<32x8xbf16>, vector<32x8xbf16>, vector<32x32xf32> -> vector<32x32xf32>
    %cst_132 = arith.constant 0.353553385 : f32
    %316 = vector.broadcast %cst_132 : f32 to vector<32x32xf32>
    %317 = arith.mulf %315, %316 : vector<32x32xf32>
    %318 = arith.addf %317, %32 : vector<32x32xf32>
    %cst_133 = arith.constant dense<0xFF800000> : vector<32xf32>
    %319 = vector.multi_reduction <maximumf>, %318, %cst_133 [1] : vector<32x32xf32> to vector<32xf32>
    %320 = vector.shape_cast %319 : vector<32xf32> to vector<32x1xf32>
    %321 = vector.broadcast %320 : vector<32x1xf32> to vector<32x32xf32>
    %322 = arith.subf %318, %321 : vector<32x32xf32>
    %323 = math.exp %322 : vector<32x32xf32>
    %cst_134 = arith.constant dense<0.000000e+00> : vector<32xf32>
    %324 = vector.multi_reduction <add>, %323, %cst_134 [1] : vector<32x32xf32> to vector<32xf32>
    %325 = vector.shape_cast %324 : vector<32xf32> to vector<32x1xf32>
    %326 = tpu.reciprocal %325 {approx = true} : vector<32x1xf32> -> vector<32x1xf32>
    %327 = vector.broadcast %326 : vector<32x1xf32> to vector<32x32xf32>
    %328 = arith.mulf %323, %327 : vector<32x32xf32>
    %329 = arith.truncf %328 : vector<32x32xf32> to vector<32x32xbf16>
    %330 = arith.truncf %312 : vector<32x8xf32> to vector<32x8xbf16>
    %cst_135 = arith.constant dense<0.000000e+00> : vector<32x8xf32>
    %331 = tpu.matmul %329, %330, %cst_135 {dimension_numbers = #tpu.dot_dimension_numbers<[1], [0], [0], [1], [0, 0, 1, 1], [], []>} : vector<32x32xbf16>, vector<32x8xbf16>, vector<32x8xf32> -> vector<32x8xf32>
    %332 = vector.extract_strided_slice %287 {offsets = [0, 16], sizes = [32, 8], strides = [1, 1]} : vector<32x96xf32> to vector<32x8xf32>
    %333 = vector.extract_strided_slice %287 {offsets = [0, 48], sizes = [32, 8], strides = [1, 1]} : vector<32x96xf32> to vector<32x8xf32>
    %334 = vector.extract_strided_slice %287 {offsets = [0, 80], sizes = [32, 8], strides = [1, 1]} : vector<32x96xf32> to vector<32x8xf32>
    %335 = arith.truncf %332 : vector<32x8xf32> to vector<32x8xbf16>
    %336 = arith.truncf %333 : vector<32x8xf32> to vector<32x8xbf16>
    %cst_136 = arith.constant dense<0.000000e+00> : vector<32x32xf32>
    %337 = tpu.matmul %335, %336, %cst_136 {dimension_numbers = #tpu.dot_dimension_numbers<[1], [1], [0], [0], [0, 0, 1, 0], [], []>} : vector<32x8xbf16>, vector<32x8xbf16>, vector<32x32xf32> -> vector<32x32xf32>
    %cst_137 = arith.constant 0.353553385 : f32
    %338 = vector.broadcast %cst_137 : f32 to vector<32x32xf32>
    %339 = arith.mulf %337, %338 : vector<32x32xf32>
    %340 = arith.addf %339, %32 : vector<32x32xf32>
    %cst_138 = arith.constant dense<0xFF800000> : vector<32xf32>
    %341 = vector.multi_reduction <maximumf>, %340, %cst_138 [1] : vector<32x32xf32> to vector<32xf32>
    %342 = vector.shape_cast %341 : vector<32xf32> to vector<32x1xf32>
    %343 = vector.broadcast %342 : vector<32x1xf32> to vector<32x32xf32>
    %344 = arith.subf %340, %343 : vector<32x32xf32>
    %345 = math.exp %344 : vector<32x32xf32>
    %cst_139 = arith.constant dense<0.000000e+00> : vector<32xf32>
    %346 = vector.multi_reduction <add>, %345, %cst_139 [1] : vector<32x32xf32> to vector<32xf32>
    %347 = vector.shape_cast %346 : vector<32xf32> to vector<32x1xf32>
    %348 = tpu.reciprocal %347 {approx = true} : vector<32x1xf32> -> vector<32x1xf32>
    %349 = vector.broadcast %348 : vector<32x1xf32> to vector<32x32xf32>
    %350 = arith.mulf %345, %349 : vector<32x32xf32>
    %351 = arith.truncf %350 : vector<32x32xf32> to vector<32x32xbf16>
    %352 = arith.truncf %334 : vector<32x8xf32> to vector<32x8xbf16>
    %cst_140 = arith.constant dense<0.000000e+00> : vector<32x8xf32>
    %353 = tpu.matmul %351, %352, %cst_140 {dimension_numbers = #tpu.dot_dimension_numbers<[1], [0], [0], [1], [0, 0, 1, 1], [], []>} : vector<32x32xbf16>, vector<32x8xbf16>, vector<32x8xf32> -> vector<32x8xf32>
    %354 = vector.extract_strided_slice %287 {offsets = [0, 24], sizes = [32, 8], strides = [1, 1]} : vector<32x96xf32> to vector<32x8xf32>
    %355 = vector.extract_strided_slice %287 {offsets = [0, 56], sizes = [32, 8], strides = [1, 1]} : vector<32x96xf32> to vector<32x8xf32>
    %356 = vector.extract_strided_slice %287 {offsets = [0, 88], sizes = [32, 8], strides = [1, 1]} : vector<32x96xf32> to vector<32x8xf32>
    %357 = arith.truncf %354 : vector<32x8xf32> to vector<32x8xbf16>
    %358 = arith.truncf %355 : vector<32x8xf32> to vector<32x8xbf16>
    %cst_141 = arith.constant dense<0.000000e+00> : vector<32x32xf32>
    %359 = tpu.matmul %357, %358, %cst_141 {dimension_numbers = #tpu.dot_dimension_numbers<[1], [1], [0], [0], [0, 0, 1, 0], [], []>} : vector<32x8xbf16>, vector<32x8xbf16>, vector<32x32xf32> -> vector<32x32xf32>
    %cst_142 = arith.constant 0.353553385 : f32
    %360 = vector.broadcast %cst_142 : f32 to vector<32x32xf32>
    %361 = arith.mulf %359, %360 : vector<32x32xf32>
    %362 = arith.addf %361, %32 : vector<32x32xf32>
    %cst_143 = arith.constant dense<0xFF800000> : vector<32xf32>
    %363 = vector.multi_reduction <maximumf>, %362, %cst_143 [1] : vector<32x32xf32> to vector<32xf32>
    %364 = vector.shape_cast %363 : vector<32xf32> to vector<32x1xf32>
    %365 = vector.broadcast %364 : vector<32x1xf32> to vector<32x32xf32>
    %366 = arith.subf %362, %365 : vector<32x32xf32>
    %367 = math.exp %366 : vector<32x32xf32>
    %cst_144 = arith.constant dense<0.000000e+00> : vector<32xf32>
    %368 = vector.multi_reduction <add>, %367, %cst_144 [1] : vector<32x32xf32> to vector<32xf32>
    %369 = vector.shape_cast %368 : vector<32xf32> to vector<32x1xf32>
    %370 = tpu.reciprocal %369 {approx = true} : vector<32x1xf32> -> vector<32x1xf32>
    %371 = vector.broadcast %370 : vector<32x1xf32> to vector<32x32xf32>
    %372 = arith.mulf %367, %371 : vector<32x32xf32>
    %373 = arith.truncf %372 : vector<32x32xf32> to vector<32x32xbf16>
    %374 = arith.truncf %356 : vector<32x8xf32> to vector<32x8xbf16>
    %cst_145 = arith.constant dense<0.000000e+00> : vector<32x8xf32>
    %375 = tpu.matmul %373, %374, %cst_145 {dimension_numbers = #tpu.dot_dimension_numbers<[1], [0], [0], [1], [0, 0, 1, 1], [], []>} : vector<32x32xbf16>, vector<32x8xbf16>, vector<32x8xf32> -> vector<32x8xf32>
    %376 = tpu.concatenate %309, %331, %353, %375 in 1 : vector<32x8xf32>, vector<32x8xf32>, vector<32x8xf32>, vector<32x8xf32> -> vector<32x32xf32>
    %c1_146 = arith.constant 1 : index
    %c0_147 = arith.constant 0 : index
    %c0_148 = arith.constant 0 : index
    %377 = vector.load %arg16[%c1_146, %c0_147, %c0_148] : memref<2x32x32xf32, #tpu.memory_space<vmem>>, vector<1x32x32xf32>
    %378 = vector.shape_cast %377 : vector<1x32x32xf32> to vector<32x32xf32>
    %379 = arith.truncf %376 : vector<32x32xf32> to vector<32x32xbf16>
    %380 = arith.truncf %378 : vector<32x32xf32> to vector<32x32xbf16>
    %cst_149 = arith.constant dense<0.000000e+00> : vector<32x32xf32>
    %381 = tpu.matmul %379, %380, %cst_149 {dimension_numbers = #tpu.dot_dimension_numbers<[1], [0], [0], [1], [0, 0, 1, 1], [], []>} : vector<32x32xbf16>, vector<32x32xbf16>, vector<32x32xf32> -> vector<32x32xf32>
    %382 = arith.addf %252, %381 : vector<32x32xf32>
    %c1_150 = arith.constant 1 : index
    %c0_151 = arith.constant 0 : index
    %c0_152 = arith.constant 0 : index
    %383 = vector.load %arg17[%c1_150, %c0_151, %c0_152] : memref<2x1x32xf32, #tpu.memory_space<vmem>>, vector<1x1x32xf32>
    %384 = vector.shape_cast %383 : vector<1x1x32xf32> to vector<1x32xf32>
    %385 = vector.broadcast %384 : vector<1x32xf32> to vector<32x32xf32>
    %386 = arith.addf %382, %385 : vector<32x32xf32>
    %c1_153 = arith.constant 1 : index
    %c0_154 = arith.constant 0 : index
    %c0_155 = arith.constant 0 : index
    %387 = vector.load %arg12[%c1_153, %c0_154, %c0_155] : memref<2x1x32xf32, #tpu.memory_space<vmem>>, vector<1x1x32xf32>
    %388 = vector.shape_cast %387 : vector<1x1x32xf32> to vector<1x32xf32>
    %c1_156 = arith.constant 1 : index
    %c0_157 = arith.constant 0 : index
    %c0_158 = arith.constant 0 : index
    %389 = vector.load %arg13[%c1_156, %c0_157, %c0_158] : memref<2x1x32xf32, #tpu.memory_space<vmem>>, vector<1x1x32xf32>
    %390 = vector.shape_cast %389 : vector<1x1x32xf32> to vector<1x32xf32>
    %cst_159 = arith.constant dense<0.000000e+00> : vector<32xf32>
    %391 = vector.multi_reduction <add>, %386, %cst_159 [1] : vector<32x32xf32> to vector<32xf32>
    %392 = vector.shape_cast %391 : vector<32xf32> to vector<32x1xf32>
    %cst_160 = arith.constant 3.200000e+01 : f32
    %393 = vector.broadcast %cst_160 : f32 to vector<32x1xf32>
    %394 = arith.divf %392, %393 : vector<32x1xf32>
    %395 = vector.broadcast %394 : vector<32x1xf32> to vector<32x32xf32>
    %396 = arith.subf %386, %395 : vector<32x32xf32>
    %397 = arith.mulf %396, %396 : vector<32x32xf32>
    %cst_161 = arith.constant dense<0.000000e+00> : vector<32xf32>
    %398 = vector.multi_reduction <add>, %397, %cst_161 [1] : vector<32x32xf32> to vector<32xf32>
    %399 = vector.shape_cast %398 : vector<32xf32> to vector<32x1xf32>
    %cst_162 = arith.constant 3.200000e+01 : f32
    %400 = vector.broadcast %cst_162 : f32 to vector<32x1xf32>
    %401 = arith.divf %399, %400 : vector<32x1xf32>
    %402 = vector.broadcast %394 : vector<32x1xf32> to vector<32x32xf32>
    %403 = arith.subf %386, %402 : vector<32x32xf32>
    %cst_163 = arith.constant 9.99999974E-6 : f32
    %404 = vector.broadcast %cst_163 : f32 to vector<32x1xf32>
    %405 = arith.addf %401, %404 : vector<32x1xf32>
    %406 = math.rsqrt %405 : vector<32x1xf32>
    %407 = vector.broadcast %406 : vector<32x1xf32> to vector<32x32xf32>
    %408 = arith.mulf %403, %407 : vector<32x32xf32>
    %409 = vector.broadcast %388 : vector<1x32xf32> to vector<32x32xf32>
    %410 = arith.mulf %408, %409 : vector<32x32xf32>
    %411 = vector.broadcast %390 : vector<1x32xf32> to vector<32x32xf32>
    %412 = arith.addf %410, %411 : vector<32x32xf32>
    %c1_164 = arith.constant 1 : index
    %c0_165 = arith.constant 0 : index
    %c0_166 = arith.constant 0 : index
    %413 = vector.load %arg18[%c1_164, %c0_165, %c0_166] : memref<2x32x128xf32, #tpu.memory_space<vmem>>, vector<1x32x128xf32>
    %414 = vector.shape_cast %413 : vector<1x32x128xf32> to vector<32x128xf32>
    %415 = arith.truncf %412 : vector<32x32xf32> to vector<32x32xbf16>
    %416 = arith.truncf %414 : vector<32x128xf32> to vector<32x128xbf16>
    %cst_167 = arith.constant dense<0.000000e+00> : vector<32x128xf32>
    %417 = tpu.matmul %415, %416, %cst_167 {dimension_numbers = #tpu.dot_dimension_numbers<[1], [0], [0], [1], [0, 0, 1, 1], [], []>} : vector<32x32xbf16>, vector<32x128xbf16>, vector<32x128xf32> -> vector<32x128xf32>
    %c1_168 = arith.constant 1 : index
    %c0_169 = arith.constant 0 : index
    %c0_170 = arith.constant 0 : index
    %418 = vector.load %arg19[%c1_168, %c0_169, %c0_170] : memref<2x1x128xf32, #tpu.memory_space<vmem>>, vector<1x1x128xf32>
    %419 = vector.shape_cast %418 : vector<1x1x128xf32> to vector<1x128xf32>
    %420 = vector.broadcast %419 : vector<1x128xf32> to vector<32x128xf32>
    %421 = arith.addf %417, %420 : vector<32x128xf32>
    %cst_171 = arith.constant 5.000000e-01 : f32
    %422 = vector.broadcast %cst_171 : f32 to vector<32x128xf32>
    %423 = arith.mulf %422, %421 : vector<32x128xf32>
    %cst_172 = arith.constant 0.707106769 : f32
    %424 = vector.broadcast %cst_172 : f32 to vector<32x128xf32>
    %425 = arith.mulf %421, %424 : vector<32x128xf32>
    %cst_173 = arith.constant 0.000000e+00 : f32
    %426 = vector.broadcast %cst_173 : f32 to vector<32x128xf32>
    %427 = arith.cmpf oge, %425, %426 : vector<32x128xf32>
    %cst_174 = arith.constant 1.000000e+00 : f32
    %cst_175 = arith.constant -1.000000e+00 : f32
    %428 = vector.broadcast %cst_174 : f32 to vector<32x128xf32>
    %429 = vector.broadcast %cst_175 : f32 to vector<32x128xf32>
    %430 = arith.select %427, %428, %429 : vector<32x128xi1>, vector<32x128xf32>
    %431 = math.absf %425 : vector<32x128xf32>
    %cst_176 = arith.constant 0.327591091 : f32
    %432 = vector.broadcast %cst_176 : f32 to vector<32x128xf32>
    %433 = arith.mulf %432, %431 : vector<32x128xf32>
    %cst_177 = arith.constant 1.000000e+00 : f32
    %434 = vector.broadcast %cst_177 : f32 to vector<32x128xf32>
    %435 = arith.addf %434, %433 : vector<32x128xf32>
    %cst_178 = arith.constant 1.000000e+00 : f32
    %436 = vector.broadcast %cst_178 : f32 to vector<32x128xf32>
    %437 = arith.divf %436, %435 : vector<32x128xf32>
    %cst_179 = arith.constant 1.06140542 : f32
    %438 = vector.broadcast %cst_179 : f32 to vector<32x128xf32>
    %439 = arith.mulf %438, %437 : vector<32x128xf32>
    %cst_180 = arith.constant -1.45315206 : f32
    %440 = vector.broadcast %cst_180 : f32 to vector<32x128xf32>
    %441 = arith.addf %439, %440 : vector<32x128xf32>
    %442 = arith.mulf %441, %437 : vector<32x128xf32>
    %cst_181 = arith.constant 1.42141378 : f32
    %443 = vector.broadcast %cst_181 : f32 to vector<32x128xf32>
    %444 = arith.addf %442, %443 : vector<32x128xf32>
    %445 = arith.mulf %444, %437 : vector<32x128xf32>
    %cst_182 = arith.constant -0.284496725 : f32
    %446 = vector.broadcast %cst_182 : f32 to vector<32x128xf32>
    %447 = arith.addf %445, %446 : vector<32x128xf32>
    %448 = arith.mulf %447, %437 : vector<32x128xf32>
    %cst_183 = arith.constant 0.254829586 : f32
    %449 = vector.broadcast %cst_183 : f32 to vector<32x128xf32>
    %450 = arith.addf %448, %449 : vector<32x128xf32>
    %451 = arith.mulf %450, %437 : vector<32x128xf32>
    %cst_184 = arith.constant 0.000000e+00 : f32
    %452 = vector.broadcast %cst_184 : f32 to vector<32x128xf32>
    %453 = arith.subf %452, %431 : vector<32x128xf32>
    %454 = arith.mulf %453, %431 : vector<32x128xf32>
    %455 = math.exp %454 : vector<32x128xf32>
    %456 = arith.mulf %451, %455 : vector<32x128xf32>
    %cst_185 = arith.constant 1.000000e+00 : f32
    %457 = vector.broadcast %cst_185 : f32 to vector<32x128xf32>
    %458 = arith.subf %457, %456 : vector<32x128xf32>
    %459 = arith.mulf %430, %458 : vector<32x128xf32>
    %cst_186 = arith.constant 1.000000e+00 : f32
    %460 = vector.broadcast %cst_186 : f32 to vector<32x128xf32>
    %461 = arith.addf %460, %459 : vector<32x128xf32>
    %462 = arith.mulf %423, %461 : vector<32x128xf32>
    %c1_187 = arith.constant 1 : index
    %c0_188 = arith.constant 0 : index
    %c0_189 = arith.constant 0 : index
    %463 = vector.load %arg20[%c1_187, %c0_188, %c0_189] : memref<2x128x32xf32, #tpu.memory_space<vmem>>, vector<1x128x32xf32>
    %464 = vector.shape_cast %463 : vector<1x128x32xf32> to vector<128x32xf32>
    %465 = arith.truncf %462 : vector<32x128xf32> to vector<32x128xbf16>
    %466 = arith.truncf %464 : vector<128x32xf32> to vector<128x32xbf16>
    %cst_190 = arith.constant dense<0.000000e+00> : vector<32x32xf32>
    %467 = tpu.matmul %465, %466, %cst_190 {dimension_numbers = #tpu.dot_dimension_numbers<[1], [0], [0], [1], [0, 0, 1, 1], [], []>} : vector<32x128xbf16>, vector<128x32xbf16>, vector<32x32xf32> -> vector<32x32xf32>
    %468 = arith.addf %386, %467 : vector<32x32xf32>
    %c1_191 = arith.constant 1 : index
    %c0_192 = arith.constant 0 : index
    %c0_193 = arith.constant 0 : index
    %469 = vector.load %arg21[%c1_191, %c0_192, %c0_193] : memref<2x1x32xf32, #tpu.memory_space<vmem>>, vector<1x1x32xf32>
    %470 = vector.shape_cast %469 : vector<1x1x32xf32> to vector<1x32xf32>
    %471 = vector.broadcast %470 : vector<1x32xf32> to vector<32x32xf32>
    %472 = arith.addf %468, %471 : vector<32x32xf32>
    %c0_194 = arith.constant 0 : index
    %c0_195 = arith.constant 0 : index
    %473 = vector.load %arg22[%c0_194, %c0_195] : memref<1x32xf32, #tpu.memory_space<vmem>>, vector<1x32xf32>
    %c0_196 = arith.constant 0 : index
    %c0_197 = arith.constant 0 : index
    %474 = vector.load %arg23[%c0_196, %c0_197] : memref<1x32xf32, #tpu.memory_space<vmem>>, vector<1x32xf32>
    %cst_198 = arith.constant dense<0.000000e+00> : vector<32xf32>
    %475 = vector.multi_reduction <add>, %472, %cst_198 [1] : vector<32x32xf32> to vector<32xf32>
    %476 = vector.shape_cast %475 : vector<32xf32> to vector<32x1xf32>
    %cst_199 = arith.constant 3.200000e+01 : f32
    %477 = vector.broadcast %cst_199 : f32 to vector<32x1xf32>
    %478 = arith.divf %476, %477 : vector<32x1xf32>
    %479 = vector.broadcast %478 : vector<32x1xf32> to vector<32x32xf32>
    %480 = arith.subf %472, %479 : vector<32x32xf32>
    %481 = arith.mulf %480, %480 : vector<32x32xf32>
    %cst_200 = arith.constant dense<0.000000e+00> : vector<32xf32>
    %482 = vector.multi_reduction <add>, %481, %cst_200 [1] : vector<32x32xf32> to vector<32xf32>
    %483 = vector.shape_cast %482 : vector<32xf32> to vector<32x1xf32>
    %cst_201 = arith.constant 3.200000e+01 : f32
    %484 = vector.broadcast %cst_201 : f32 to vector<32x1xf32>
    %485 = arith.divf %483, %484 : vector<32x1xf32>
    %486 = vector.broadcast %478 : vector<32x1xf32> to vector<32x32xf32>
    %487 = arith.subf %472, %486 : vector<32x32xf32>
    %cst_202 = arith.constant 9.99999974E-6 : f32
    %488 = vector.broadcast %cst_202 : f32 to vector<32x1xf32>
    %489 = arith.addf %485, %488 : vector<32x1xf32>
    %490 = math.rsqrt %489 : vector<32x1xf32>
    %491 = vector.broadcast %490 : vector<32x1xf32> to vector<32x32xf32>
    %492 = arith.mulf %487, %491 : vector<32x32xf32>
    %493 = vector.broadcast %473 : vector<1x32xf32> to vector<32x32xf32>
    %494 = arith.mulf %492, %493 : vector<32x32xf32>
    %495 = vector.broadcast %474 : vector<1x32xf32> to vector<32x32xf32>
    %496 = arith.addf %494, %495 : vector<32x32xf32>
    %c0_203 = arith.constant 0 : index
    %c0_204 = arith.constant 0 : index
    %497 = vector.load %arg24[%c0_203, %c0_204] : memref<32x256xf32, #tpu.memory_space<vmem>>, vector<32x256xf32>
    %498 = arith.truncf %496 : vector<32x32xf32> to vector<32x32xbf16>
    %499 = arith.truncf %497 : vector<32x256xf32> to vector<32x256xbf16>
    %cst_205 = arith.constant dense<0.000000e+00> : vector<32x256xf32>
    %500 = tpu.matmul %498, %499, %cst_205 {dimension_numbers = #tpu.dot_dimension_numbers<[1], [0], [0], [1], [0, 0, 1, 1], [], []>} : vector<32x32xbf16>, vector<32x256xbf16>, vector<32x256xf32> -> vector<32x256xf32>
    %c0_206 = arith.constant 0 : index
    %c0_207 = arith.constant 0 : index
    %501 = vector.load %arg25[%c0_206, %c0_207] : memref<1x256xf32, #tpu.memory_space<vmem>>, vector<1x256xf32>
    %502 = vector.broadcast %501 : vector<1x256xf32> to vector<32x256xf32>
    %503 = arith.addf %500, %502 : vector<32x256xf32>
    %cst_208 = arith.constant 0.000000e+00 : f32
    %504 = vector.broadcast %cst_208 : f32 to vector<32x256xf32>
    %505 = arith.maximumf %503, %504 : vector<32x256xf32>
    %c0_209 = arith.constant 0 : index
    %c0_210 = arith.constant 0 : index
    %506 = vector.load %arg26[%c0_209, %c0_210] : memref<256x256xf32, #tpu.memory_space<vmem>>, vector<256x256xf32>
    %507 = arith.truncf %505 : vector<32x256xf32> to vector<32x256xbf16>
    %508 = arith.truncf %506 : vector<256x256xf32> to vector<256x256xbf16>
    %cst_211 = arith.constant dense<0.000000e+00> : vector<32x256xf32>
    %509 = tpu.matmul %507, %508, %cst_211 {dimension_numbers = #tpu.dot_dimension_numbers<[1], [0], [0], [1], [0, 0, 1, 1], [], []>} : vector<32x256xbf16>, vector<256x256xbf16>, vector<32x256xf32> -> vector<32x256xf32>
    %c0_212 = arith.constant 0 : index
    %c0_213 = arith.constant 0 : index
    %510 = vector.load %arg27[%c0_212, %c0_213] : memref<1x256xf32, #tpu.memory_space<vmem>>, vector<1x256xf32>
    %511 = vector.broadcast %510 : vector<1x256xf32> to vector<32x256xf32>
    %512 = arith.addf %509, %511 : vector<32x256xf32>
    %cst_214 = arith.constant 0.000000e+00 : f32
    %513 = vector.broadcast %cst_214 : f32 to vector<32x256xf32>
    %514 = arith.maximumf %512, %513 : vector<32x256xf32>
    %c0_215 = arith.constant 0 : index
    %c0_216 = arith.constant 0 : index
    %515 = vector.load %arg28[%c0_215, %c0_216] : memref<256x128xf32, #tpu.memory_space<vmem>>, vector<256x128xf32>
    %516 = arith.truncf %514 : vector<32x256xf32> to vector<32x256xbf16>
    %517 = arith.truncf %515 : vector<256x128xf32> to vector<256x128xbf16>
    %cst_217 = arith.constant dense<0.000000e+00> : vector<32x128xf32>
    %518 = tpu.matmul %516, %517, %cst_217 {dimension_numbers = #tpu.dot_dimension_numbers<[1], [0], [0], [1], [0, 0, 1, 1], [], []>} : vector<32x256xbf16>, vector<256x128xbf16>, vector<32x128xf32> -> vector<32x128xf32>
    %c0_218 = arith.constant 0 : index
    %c0_219 = arith.constant 0 : index
    %519 = vector.load %arg29[%c0_218, %c0_219] : memref<1x128xf32, #tpu.memory_space<vmem>>, vector<1x128xf32>
    %520 = vector.broadcast %519 : vector<1x128xf32> to vector<32x128xf32>
    %521 = arith.addf %518, %520 : vector<32x128xf32>
    %c0_220 = arith.constant 0 : index
    %c0_221 = arith.constant 0 : index
    %522 = vector.load %arg34[%c0_220, %c0_221] : memref<32x128xf32, #tpu.memory_space<vmem>>, vector<32x128xf32>
    tpu.vector_store %arg34[%c0_220, %c0_221], %521 {strides = array<i32>} : memref<32x128xf32, #tpu.memory_space<vmem>>, vector<32x128xf32>,
    %523 = vector.extract_strided_slice %252 {offsets = [0, 0], sizes = [2, 32], strides = [1, 1]} : vector<32x32xf32> to vector<2x32xf32>
    %524 = vector.extract_strided_slice %252 {offsets = [16, 0], sizes = [2, 32], strides = [1, 1]} : vector<32x32xf32> to vector<2x32xf32>
    %cst_222 = arith.constant 0.000000e+00 : f32
    %525 = vector.broadcast %cst_222 : f32 to vector<4x32xf32>
    %526 = tpu.concatenate %523, %524, %525 in 0 : vector<2x32xf32>, vector<2x32xf32>, vector<4x32xf32> -> vector<8x32xf32>
    %c0_223 = arith.constant 0 : index
    %c0_224 = arith.constant 0 : index
    %c0_225 = arith.constant 0 : index
    %527 = vector.load %arg30[%c0_223, %c0_224, %c0_225] : memref<2x32x64xf32, #tpu.memory_space<vmem>>, vector<1x32x64xf32>
    %528 = vector.shape_cast %527 : vector<1x32x64xf32> to vector<32x64xf32>
    %529 = arith.truncf %526 : vector<8x32xf32> to vector<8x32xbf16>
    %530 = arith.truncf %528 : vector<32x64xf32> to vector<32x64xbf16>
    %cst_226 = arith.constant dense<0.000000e+00> : vector<8x64xf32>
    %531 = tpu.matmul %529, %530, %cst_226 {dimension_numbers = #tpu.dot_dimension_numbers<[1], [0], [0], [1], [0, 0, 1, 1], [], []>} : vector<8x32xbf16>, vector<32x64xbf16>, vector<8x64xf32> -> vector<8x64xf32>
    %c0_227 = arith.constant 0 : index
    %c0_228 = arith.constant 0 : index
    %c0_229 = arith.constant 0 : index
    %532 = vector.load %arg31[%c0_227, %c0_228, %c0_229] : memref<2x1x64xf32, #tpu.memory_space<vmem>>, vector<1x1x64xf32>
    %533 = vector.shape_cast %532 : vector<1x1x64xf32> to vector<1x64xf32>
    %534 = vector.broadcast %533 : vector<1x64xf32> to vector<8x64xf32>
    %535 = arith.addf %531, %534 : vector<8x64xf32>
    %cst_230 = arith.constant 0.000000e+00 : f32
    %536 = vector.broadcast %cst_230 : f32 to vector<8x64xf32>
    %537 = arith.maximumf %535, %536 : vector<8x64xf32>
    %c0_231 = arith.constant 0 : index
    %c0_232 = arith.constant 0 : index
    %c0_233 = arith.constant 0 : index
    %538 = vector.load %arg32[%c0_231, %c0_232, %c0_233] : memref<2x64x128xf32, #tpu.memory_space<vmem>>, vector<1x64x128xf32>
    %539 = vector.shape_cast %538 : vector<1x64x128xf32> to vector<64x128xf32>
    %540 = arith.truncf %537 : vector<8x64xf32> to vector<8x64xbf16>
    %541 = arith.truncf %539 : vector<64x128xf32> to vector<64x128xbf16>
    %cst_234 = arith.constant dense<0.000000e+00> : vector<8x128xf32>
    %542 = tpu.matmul %540, %541, %cst_234 {dimension_numbers = #tpu.dot_dimension_numbers<[1], [0], [0], [1], [0, 0, 1, 1], [], []>} : vector<8x64xbf16>, vector<64x128xbf16>, vector<8x128xf32> -> vector<8x128xf32>
    %c0_235 = arith.constant 0 : index
    %c0_236 = arith.constant 0 : index
    %c0_237 = arith.constant 0 : index
    %543 = vector.load %arg33[%c0_235, %c0_236, %c0_237] : memref<2x1x128xf32, #tpu.memory_space<vmem>>, vector<1x1x128xf32>
    %544 = vector.shape_cast %543 : vector<1x1x128xf32> to vector<1x128xf32>
    %545 = vector.broadcast %544 : vector<1x128xf32> to vector<8x128xf32>
    %546 = arith.addf %542, %545 : vector<8x128xf32>
    %c0_238 = arith.constant 0 : index
    %c0_239 = arith.constant 0 : index
    %547 = vector.load %arg35[%c0_238, %c0_239] : memref<16x128xf32, #tpu.memory_space<vmem>>, vector<8x128xf32>
    tpu.vector_store %arg35[%c0_238, %c0_239], %546 {strides = array<i32>} : memref<16x128xf32, #tpu.memory_space<vmem>>, vector<8x128xf32>,
    %548 = vector.extract_strided_slice %472 {offsets = [0, 0], sizes = [2, 32], strides = [1, 1]} : vector<32x32xf32> to vector<2x32xf32>
    %549 = vector.extract_strided_slice %472 {offsets = [16, 0], sizes = [2, 32], strides = [1, 1]} : vector<32x32xf32> to vector<2x32xf32>
    %cst_240 = arith.constant 0.000000e+00 : f32
    %550 = vector.broadcast %cst_240 : f32 to vector<4x32xf32>
    %551 = tpu.concatenate %548, %549, %550 in 0 : vector<2x32xf32>, vector<2x32xf32>, vector<4x32xf32> -> vector<8x32xf32>
    %c1_241 = arith.constant 1 : index
    %c0_242 = arith.constant 0 : index
    %c0_243 = arith.constant 0 : index
    %552 = vector.load %arg30[%c1_241, %c0_242, %c0_243] : memref<2x32x64xf32, #tpu.memory_space<vmem>>, vector<1x32x64xf32>
    %553 = vector.shape_cast %552 : vector<1x32x64xf32> to vector<32x64xf32>
    %554 = arith.truncf %551 : vector<8x32xf32> to vector<8x32xbf16>
    %555 = arith.truncf %553 : vector<32x64xf32> to vector<32x64xbf16>
    %cst_244 = arith.constant dense<0.000000e+00> : vector<8x64xf32>
    %556 = tpu.matmul %554, %555, %cst_244 {dimension_numbers = #tpu.dot_dimension_numbers<[1], [0], [0], [1], [0, 0, 1, 1], [], []>} : vector<8x32xbf16>, vector<32x64xbf16>, vector<8x64xf32> -> vector<8x64xf32>
    %c1_245 = arith.constant 1 : index
    %c0_246 = arith.constant 0 : index
    %c0_247 = arith.constant 0 : index
    %557 = vector.load %arg31[%c1_245, %c0_246, %c0_247] : memref<2x1x64xf32, #tpu.memory_space<vmem>>, vector<1x1x64xf32>
    %558 = vector.shape_cast %557 : vector<1x1x64xf32> to vector<1x64xf32>
    %559 = vector.broadcast %558 : vector<1x64xf32> to vector<8x64xf32>
    %560 = arith.addf %556, %559 : vector<8x64xf32>
    %cst_248 = arith.constant 0.000000e+00 : f32
    %561 = vector.broadcast %cst_248 : f32 to vector<8x64xf32>
    %562 = arith.maximumf %560, %561 : vector<8x64xf32>
    %c1_249 = arith.constant 1 : index
    %c0_250 = arith.constant 0 : index
    %c0_251 = arith.constant 0 : index
    %563 = vector.load %arg32[%c1_249, %c0_250, %c0_251] : memref<2x64x128xf32, #tpu.memory_space<vmem>>, vector<1x64x128xf32>
    %564 = vector.shape_cast %563 : vector<1x64x128xf32> to vector<64x128xf32>
    %565 = arith.truncf %562 : vector<8x64xf32> to vector<8x64xbf16>
    %566 = arith.truncf %564 : vector<64x128xf32> to vector<64x128xbf16>
    %cst_252 = arith.constant dense<0.000000e+00> : vector<8x128xf32>
    %567 = tpu.matmul %565, %566, %cst_252 {dimension_numbers = #tpu.dot_dimension_numbers<[1], [0], [0], [1], [0, 0, 1, 1], [], []>} : vector<8x64xbf16>, vector<64x128xbf16>, vector<8x128xf32> -> vector<8x128xf32>
    %c1_253 = arith.constant 1 : index
    %c0_254 = arith.constant 0 : index
    %c0_255 = arith.constant 0 : index
    %568 = vector.load %arg33[%c1_253, %c0_254, %c0_255] : memref<2x1x128xf32, #tpu.memory_space<vmem>>, vector<1x1x128xf32>
    %569 = vector.shape_cast %568 : vector<1x1x128xf32> to vector<1x128xf32>
    %570 = vector.broadcast %569 : vector<1x128xf32> to vector<8x128xf32>
    %571 = arith.addf %567, %570 : vector<8x128xf32>
    %c8 = arith.constant 8 : index
    %c0_256 = arith.constant 0 : index
    %572 = vector.load %arg35[%c8, %c0_256] : memref<16x128xf32, #tpu.memory_space<vmem>>, vector<8x128xf32>
    tpu.vector_store %arg35[%c8, %c0_256], %571 {strides = array<i32>} : memref<16x128xf32, #tpu.memory_space<vmem>>, vector<8x128xf32>,
    return
  }
  func.func @transform_0(%arg0: i32) -> (i32, i32) {
    %c0_i32 = arith.constant 0 : i32
    %c0_i32_0 = arith.constant 0 : i32
    %c0_i32_1 = arith.constant 0 : i32
    return %c0_i32, %c0_i32_0 : i32, i32
  }
  func.func @transform_1(%arg0: i32) -> (i32, i32) {
    %c0_i32 = arith.constant 0 : i32
    %c0_i32_0 = arith.constant 0 : i32
    %c0_i32_1 = arith.constant 0 : i32
    return %c0_i32, %c0_i32_0 : i32, i32
  }
  func.func @transform_2(%arg0: i32) -> (i32, i32) {
    %c0_i32 = arith.constant 0 : i32
    %c0_i32_0 = arith.constant 0 : i32
    %c0_i32_1 = arith.constant 0 : i32
    return %c0_i32, %c0_i32_0 : i32, i32
  }
  func.func @transform_3(%arg0: i32) -> (i32, i32) {
    %c0_i32 = arith.constant 0 : i32
    %c0_i32_0 = arith.constant 0 : i32
    %c0_i32_1 = arith.constant 0 : i32
    return %c0_i32, %c0_i32_0 : i32, i32
  }
  func.func @transform_4(%arg0: i32) -> (i32, i32) {
    %c0_i32 = arith.constant 0 : i32
    %c0_i32_0 = arith.constant 0 : i32
    %c0_i32_1 = arith.constant 0 : i32
    return %c0_i32, %c0_i32_0 : i32, i32
  }
  func.func @transform_5(%arg0: i32) -> (i32, i32) {
    %c0_i32 = arith.constant 0 : i32
    %c0_i32_0 = arith.constant 0 : i32
    %c0_i32_1 = arith.constant 0 : i32
    return %c0_i32, %c0_i32_0 : i32, i32
  }
  func.func @transform_6(%arg0: i32) -> (i32, i32) {
    %c0_i32 = arith.constant 0 : i32
    %c0_i32_0 = arith.constant 0 : i32
    %c0_i32_1 = arith.constant 0 : i32
    return %c0_i32, %c0_i32_0 : i32, i32
  }
  func.func @transform_7(%arg0: i32) -> (i32, i32) {
    %c0_i32 = arith.constant 0 : i32
    %c0_i32_0 = arith.constant 0 : i32
    %c0_i32_1 = arith.constant 0 : i32
    return %c0_i32, %c0_i32_0 : i32, i32
  }
  func.func @transform_8(%arg0: i32) -> (i32, i32) {
    %c0_i32 = arith.constant 0 : i32
    %c0_i32_0 = arith.constant 0 : i32
    %c0_i32_1 = arith.constant 0 : i32
    return %c0_i32, %c0_i32_0 : i32, i32
  }
  func.func @transform_9(%arg0: i32) -> (i32, i32, i32) {
    %c0_i32 = arith.constant 0 : i32
    %c0_i32_0 = arith.constant 0 : i32
    %c0_i32_1 = arith.constant 0 : i32
    %c0_i32_2 = arith.constant 0 : i32
    return %c0_i32, %c0_i32_0, %c0_i32_1 : i32, i32, i32
  }
  func.func @transform_10(%arg0: i32) -> (i32, i32, i32) {
    %c0_i32 = arith.constant 0 : i32
    %c0_i32_0 = arith.constant 0 : i32
    %c0_i32_1 = arith.constant 0 : i32
    %c0_i32_2 = arith.constant 0 : i32
    return %c0_i32, %c0_i32_0, %c0_i32_1 : i32, i32, i32
  }
  func.func @transform_11(%arg0: i32) -> (i32, i32, i32) {
    %c0_i32 = arith.constant 0 : i32
    %c0_i32_0 = arith.constant 0 : i32
    %c0_i32_1 = arith.constant 0 : i32
    %c0_i32_2 = arith.constant 0 : i32
    return %c0_i32, %c0_i32_0, %c0_i32_1 : i32, i32, i32
  }
  func.func @transform_12(%arg0: i32) -> (i32, i32, i32) {
    %c0_i32 = arith.constant 0 : i32
    %c0_i32_0 = arith.constant 0 : i32
    %c0_i32_1 = arith.constant 0 : i32
    %c0_i32_2 = arith.constant 0 : i32
    return %c0_i32, %c0_i32_0, %c0_i32_1 : i32, i32, i32
  }
  func.func @transform_13(%arg0: i32) -> (i32, i32, i32) {
    %c0_i32 = arith.constant 0 : i32
    %c0_i32_0 = arith.constant 0 : i32
    %c0_i32_1 = arith.constant 0 : i32
    %c0_i32_2 = arith.constant 0 : i32
    return %c0_i32, %c0_i32_0, %c0_i32_1 : i32, i32, i32
  }
  func.func @transform_14(%arg0: i32) -> (i32, i32, i32) {
    %c0_i32 = arith.constant 0 : i32
    %c0_i32_0 = arith.constant 0 : i32
    %c0_i32_1 = arith.constant 0 : i32
    %c0_i32_2 = arith.constant 0 : i32
    return %c0_i32, %c0_i32_0, %c0_i32_1 : i32, i32, i32
  }
  func.func @transform_15(%arg0: i32) -> (i32, i32, i32) {
    %c0_i32 = arith.constant 0 : i32
    %c0_i32_0 = arith.constant 0 : i32
    %c0_i32_1 = arith.constant 0 : i32
    %c0_i32_2 = arith.constant 0 : i32
    return %c0_i32, %c0_i32_0, %c0_i32_1 : i32, i32, i32
  }
  func.func @transform_16(%arg0: i32) -> (i32, i32, i32) {
    %c0_i32 = arith.constant 0 : i32
    %c0_i32_0 = arith.constant 0 : i32
    %c0_i32_1 = arith.constant 0 : i32
    %c0_i32_2 = arith.constant 0 : i32
    return %c0_i32, %c0_i32_0, %c0_i32_1 : i32, i32, i32
  }
  func.func @transform_17(%arg0: i32) -> (i32, i32, i32) {
    %c0_i32 = arith.constant 0 : i32
    %c0_i32_0 = arith.constant 0 : i32
    %c0_i32_1 = arith.constant 0 : i32
    %c0_i32_2 = arith.constant 0 : i32
    return %c0_i32, %c0_i32_0, %c0_i32_1 : i32, i32, i32
  }
  func.func @transform_18(%arg0: i32) -> (i32, i32, i32) {
    %c0_i32 = arith.constant 0 : i32
    %c0_i32_0 = arith.constant 0 : i32
    %c0_i32_1 = arith.constant 0 : i32
    %c0_i32_2 = arith.constant 0 : i32
    return %c0_i32, %c0_i32_0, %c0_i32_1 : i32, i32, i32
  }
  func.func @transform_19(%arg0: i32) -> (i32, i32, i32) {
    %c0_i32 = arith.constant 0 : i32
    %c0_i32_0 = arith.constant 0 : i32
    %c0_i32_1 = arith.constant 0 : i32
    %c0_i32_2 = arith.constant 0 : i32
    return %c0_i32, %c0_i32_0, %c0_i32_1 : i32, i32, i32
  }
  func.func @transform_20(%arg0: i32) -> (i32, i32, i32) {
    %c0_i32 = arith.constant 0 : i32
    %c0_i32_0 = arith.constant 0 : i32
    %c0_i32_1 = arith.constant 0 : i32
    %c0_i32_2 = arith.constant 0 : i32
    return %c0_i32, %c0_i32_0, %c0_i32_1 : i32, i32, i32
  }
  func.func @transform_21(%arg0: i32) -> (i32, i32) {
    %c0_i32 = arith.constant 0 : i32
    %c0_i32_0 = arith.constant 0 : i32
    %c0_i32_1 = arith.constant 0 : i32
    return %c0_i32, %c0_i32_0 : i32, i32
  }
  func.func @transform_22(%arg0: i32) -> (i32, i32) {
    %c0_i32 = arith.constant 0 : i32
    %c0_i32_0 = arith.constant 0 : i32
    %c0_i32_1 = arith.constant 0 : i32
    return %c0_i32, %c0_i32_0 : i32, i32
  }
  func.func @transform_23(%arg0: i32) -> (i32, i32) {
    %c0_i32 = arith.constant 0 : i32
    %c0_i32_0 = arith.constant 0 : i32
    %c0_i32_1 = arith.constant 0 : i32
    return %c0_i32, %c0_i32_0 : i32, i32
  }
  func.func @transform_24(%arg0: i32) -> (i32, i32) {
    %c0_i32 = arith.constant 0 : i32
    %c0_i32_0 = arith.constant 0 : i32
    %c0_i32_1 = arith.constant 0 : i32
    return %c0_i32, %c0_i32_0 : i32, i32
  }
  func.func @transform_25(%arg0: i32) -> (i32, i32) {
    %c0_i32 = arith.constant 0 : i32
    %c0_i32_0 = arith.constant 0 : i32
    %c0_i32_1 = arith.constant 0 : i32
    return %c0_i32, %c0_i32_0 : i32, i32
  }
  func.func @transform_26(%arg0: i32) -> (i32, i32) {
    %c0_i32 = arith.constant 0 : i32
    %c0_i32_0 = arith.constant 0 : i32
    %c0_i32_1 = arith.constant 0 : i32
    return %c0_i32, %c0_i32_0 : i32, i32
  }
  func.func @transform_27(%arg0: i32) -> (i32, i32) {
    %c0_i32 = arith.constant 0 : i32
    %c0_i32_0 = arith.constant 0 : i32
    %c0_i32_1 = arith.constant 0 : i32
    return %c0_i32, %c0_i32_0 : i32, i32
  }
  func.func @transform_28(%arg0: i32) -> (i32, i32) {
    %c0_i32 = arith.constant 0 : i32
    %c0_i32_0 = arith.constant 0 : i32
    %c0_i32_1 = arith.constant 0 : i32
    return %c0_i32, %c0_i32_0 : i32, i32
  }
  func.func @transform_29(%arg0: i32) -> (i32, i32, i32) {
    %c0_i32 = arith.constant 0 : i32
    %c0_i32_0 = arith.constant 0 : i32
    %c0_i32_1 = arith.constant 0 : i32
    %c0_i32_2 = arith.constant 0 : i32
    return %c0_i32, %c0_i32_0, %c0_i32_1 : i32, i32, i32
  }
  func.func @transform_30(%arg0: i32) -> (i32, i32, i32) {
    %c0_i32 = arith.constant 0 : i32
    %c0_i32_0 = arith.constant 0 : i32
    %c0_i32_1 = arith.constant 0 : i32
    %c0_i32_2 = arith.constant 0 : i32
    return %c0_i32, %c0_i32_0, %c0_i32_1 : i32, i32, i32
  }
  func.func @transform_31(%arg0: i32) -> (i32, i32, i32) {
    %c0_i32 = arith.constant 0 : i32
    %c0_i32_0 = arith.constant 0 : i32
    %c0_i32_1 = arith.constant 0 : i32
    %c0_i32_2 = arith.constant 0 : i32
    return %c0_i32, %c0_i32_0, %c0_i32_1 : i32, i32, i32
  }
  func.func @transform_32(%arg0: i32) -> (i32, i32, i32) {
    %c0_i32 = arith.constant 0 : i32
    %c0_i32_0 = arith.constant 0 : i32
    %c0_i32_1 = arith.constant 0 : i32
    %c0_i32_2 = arith.constant 0 : i32
    return %c0_i32, %c0_i32_0, %c0_i32_1 : i32, i32, i32
  }
  func.func @transform_33(%arg0: i32) -> (i32, i32) {
    %c0_i32 = arith.constant 0 : i32
    %c0_i32_0 = arith.constant 0 : i32
    %c0_i32_1 = arith.constant 0 : i32
    return %c0_i32, %c0_i32_0 : i32, i32
  }
  func.func @transform_34(%arg0: i32) -> (i32, i32) {
    %c0_i32 = arith.constant 0 : i32
    %c0_i32_0 = arith.constant 0 : i32
    %c0_i32_1 = arith.constant 0 : i32
    return %c0_i32, %c0_i32_0 : i32, i32
  }
}

</mosaic_0001>

<llo_original>
// kernel: _lambda_.1
$region0: #{_lambda_.1}
  #allocation0 [shape = 'u32[]', space=smem, size = 0x4, offset = 0x4, fixed_abs, tag = 'smem constant byte address 0x4 - core index']
  #allocation1 [shape = 'u32[72,128]{1,0:T(1,128)}', space=vmem, size = 0x9000, scoped, tag = 'internal scratch']
  %s0 = inlined_call_operand.smem [shape: u32[35], index: -1, kind: input, shape index: {}]
  %s1 = sld [smem:[%s0]]
  %s2 = scalar_lea.smem %s0, 1
  %s3 = sld [smem:[%s2]]
  %s4 = scalar_lea.smem %s0, 2
  %s5 = sld [smem:[%s4]]
  %s6 = scalar_lea.smem %s0, 3
  %s7 = sld [smem:[%s6]]
  %s8 = scalar_lea.smem %s0, 4
  %s9 = sld [smem:[%s8]]
  %s10 = scalar_lea.smem %s0, 5
  %s11 = sld [smem:[%s10]]
  %s12 = scalar_lea.smem %s0, 6
  %s13 = sld [smem:[%s12]]
  %s14 = scalar_lea.smem %s0, 7
  %s15 = sld [smem:[%s14]]
  %s16 = scalar_lea.smem %s0, 8
  %s17 = sld [smem:[%s16]]
  %s18 = scalar_lea.smem %s0, 9
  %s19 = sld [smem:[%s18]]
  %s20 = scalar_lea.smem %s0, 10
  %s21 = sld [smem:[%s20]]
  %s22 = scalar_lea.smem %s0, 11
  %s23 = sld [smem:[%s22]]
  %s24 = scalar_lea.smem %s0, 12
  %s25 = sld [smem:[%s24]]
  %s26 = scalar_lea.smem %s0, 13
  %s27 = sld [smem:[%s26]]
  %s28 = scalar_lea.smem %s0, 14
  %s29 = sld [smem:[%s28]]
  %s30 = scalar_lea.smem %s0, 15
  %s31 = sld [smem:[%s30]]
  %s32 = scalar_lea.smem %s0, 16
  %s33 = sld [smem:[%s32]]
  %s34 = scalar_lea.smem %s0, 17
  %s35 = sld [smem:[%s34]]
  %s36 = scalar_lea.smem %s0, 18
  %s37 = sld [smem:[%s36]]
  %s38 = scalar_lea.smem %s0, 19
  %s39 = sld [smem:[%s38]]
  %s40 = scalar_lea.smem %s0, 20
  %s41 = sld [smem:[%s40]]
  %s42 = scalar_lea.smem %s0, 21
  %s43 = sld [smem:[%s42]]
  %s44 = scalar_lea.smem %s0, 22
  %s45 = sld [smem:[%s44]]
  %s46 = scalar_lea.smem %s0, 23
  %s47 = sld [smem:[%s46]]
  %s48 = scalar_lea.smem %s0, 24
  %s49 = sld [smem:[%s48]]
  %s50 = scalar_lea.smem %s0, 25
  %s51 = sld [smem:[%s50]]
  %s52 = scalar_lea.smem %s0, 26
  %s53 = sld [smem:[%s52]]
  %s54 = scalar_lea.smem %s0, 27
  %s55 = sld [smem:[%s54]]
  %s56 = scalar_lea.smem %s0, 28
  %s57 = sld [smem:[%s56]]
  %s58 = scalar_lea.smem %s0, 29
  %s59 = sld [smem:[%s58]]
  %s60 = scalar_lea.smem %s0, 30
  %s61 = sld [smem:[%s60]]
  %s62 = scalar_lea.smem %s0, 31
  %s63 = sld [smem:[%s62]]
  %s64 = scalar_lea.smem %s0, 32
  %s65 = sld [smem:[%s64]]
  %s66 = scalar_lea.smem %s0, 33
  %s67 = sld [smem:[%s66]]
  %s68 = scalar_lea.smem %s0, 34
  %s69 = sld [smem:[%s68]]
  %70 = xla_tuple %s67, %s69
  %s71 = sld [smem:[#allocation0]]
  $region150: #{_lambda_.1} parent=0
    _
  %s73 = ssub.s32 1, %s71
  %s74 = scalar_select 0, %s73, %s71
  // Predicated region
  $region2: #{_lambda_.1} parent=0 // pred_check
    _
  $region3: #{_lambda_.1} parent=0 // pred_check_branch
    %76 = sbr.rel (0) target = $region5
  $region4: #{_lambda_.1} parent=0 // pred_region
    _
  $region5: #{_lambda_.1} parent=0 // pred_fallthru
    _
  // Predicated region
  $region6: #{_lambda_.1} parent=0 // pred_check
    _
  $region7: #{_lambda_.1} parent=0 // pred_check_branch
    %78 = sbr.rel (0) target = $region9
  $region8: #{_lambda_.1} parent=0 // pred_region
    _
  $region9: #{_lambda_.1} parent=0 // pred_fallthru
    _
  // Predicated region
  $region10: #{_lambda_.1} parent=0 // pred_check
    _
  $region11: #{_lambda_.1} parent=0 // pred_check_branch
    %80 = sbr.rel (0) target = $region13
  $region12: #{_lambda_.1} parent=0 // pred_region
    _
  $region13: #{_lambda_.1} parent=0 // pred_fallthru
    _
  // Predicated region
  $region14: #{_lambda_.1} parent=0 // pred_check
    _
  $region15: #{_lambda_.1} parent=0 // pred_check_branch
    %82 = sbr.rel (0) target = $region17
  $region16: #{_lambda_.1} parent=0 // pred_region
    _
  $region17: #{_lambda_.1} parent=0 // pred_fallthru
    _
  // Predicated region
  $region18: #{_lambda_.1} parent=0 // pred_check
    _
  $region19: #{_lambda_.1} parent=0 // pred_check_branch
    %84 = sbr.rel (0) target = $region21
  $region20: #{_lambda_.1} parent=0 // pred_region
    _
  $region21: #{_lambda_.1} parent=0 // pred_fallthru
    _
  // Predicated region
  $region22: #{_lambda_.1} parent=0 // pred_check
    _
  $region23: #{_lambda_.1} parent=0 // pred_check_branch
    %86 = sbr.rel (0) target = $region25
  $region24: #{_lambda_.1} parent=0 // pred_region
    _
  $region25: #{_lambda_.1} parent=0 // pred_fallthru
    _
  // Predicated region
  $region26: #{_lambda_.1} parent=0 // pred_check
    _
  $region27: #{_lambda_.1} parent=0 // pred_check_branch
    %88 = sbr.rel (0) target = $region29
  $region28: #{_lambda_.1} parent=0 // pred_region
    _
  $region29: #{_lambda_.1} parent=0 // pred_fallthru
    _
  // Predicated region
  $region30: #{_lambda_.1} parent=0 // pred_check
    _
  $region31: #{_lambda_.1} parent=0 // pred_check_branch
    %90 = sbr.rel (0) target = $region33
  $region32: #{_lambda_.1} parent=0 // pred_region
    _
  $region33: #{_lambda_.1} parent=0 // pred_fallthru
    _
  // Predicated region
  $region34: #{_lambda_.1} parent=0 // pred_check
    _
  $region35: #{_lambda_.1} parent=0 // pred_check_branch
    %92 = sbr.rel (0) target = $region37
  $region36: #{_lambda_.1} parent=0 // pred_region
    _
  $region37: #{_lambda_.1} parent=0 // pred_fallthru
    _
  // Predicated region
  $region38: #{_lambda_.1} parent=0 // pred_check
    _
  $region39: #{_lambda_.1} parent=0 // pred_check_branch
    %94 = sbr.rel (0) target = $region41
  $region40: #{_lambda_.1} parent=0 // pred_region
    _
  $region41: #{_lambda_.1} parent=0 // pred_fallthru
    _
  // Predicated region
  $region42: #{_lambda_.1} parent=0 // pred_check
    _
  $region43: #{_lambda_.1} parent=0 // pred_check_branch
    %96 = sbr.rel (0) target = $region45
  $region44: #{_lambda_.1} parent=0 // pred_region
    _
  $region45: #{_lambda_.1} parent=0 // pred_fallthru
    _
  // Predicated region
  $region46: #{_lambda_.1} parent=0 // pred_check
    _
  $region47: #{_lambda_.1} parent=0 // pred_check_branch
    %98 = sbr.rel (0) target = $region49
  $region48: #{_lambda_.1} parent=0 // pred_region
    _
  $region49: #{_lambda_.1} parent=0 // pred_fallthru
    _
  // Predicated region
  $region50: #{_lambda_.1} parent=0 // pred_check
    _
  $region51: #{_lambda_.1} parent=0 // pred_check_branch
    %100 = sbr.rel (0) target = $region53
  $region52: #{_lambda_.1} parent=0 // pred_region
    _
  $region53: #{_lambda_.1} parent=0 // pred_fallthru
    _
  // Predicated region
  $region54: #{_lambda_.1} parent=0 // pred_check
    _
  $region55: #{_lambda_.1} parent=0 // pred_check_branch
    %102 = sbr.rel (0) target = $region57
  $region56: #{_lambda_.1} parent=0 // pred_region
    _
  $region57: #{_lambda_.1} parent=0 // pred_fallthru
    _
  // Predicated region
  $region58: #{_lambda_.1} parent=0 // pred_check
    _
  $region59: #{_lambda_.1} parent=0 // pred_check_branch
    %104 = sbr.rel (0) target = $region61
  $region60: #{_lambda_.1} parent=0 // pred_region
    _
  $region61: #{_lambda_.1} parent=0 // pred_fallthru
    _
  // Predicated region
  $region62: #{_lambda_.1} parent=0 // pred_check
    _
  $region63: #{_lambda_.1} parent=0 // pred_check_branch
    %106 = sbr.rel (0) target = $region65
  $region64: #{_lambda_.1} parent=0 // pred_region
    _
  $region65: #{_lambda_.1} parent=0 // pred_fallthru
    _
  // Predicated region
  $region66: #{_lambda_.1} parent=0 // pred_check
    _
  $region67: #{_lambda_.1} parent=0 // pred_check_branch
    %108 = sbr.rel (0) target = $region69
  $region68: #{_lambda_.1} parent=0 // pred_region
    _
  $region69: #{_lambda_.1} parent=0 // pred_fallthru
    _
  // Predicated region
  $region70: #{_lambda_.1} parent=0 // pred_check
    _
  $region71: #{_lambda_.1} parent=0 // pred_check_branch
    %110 = sbr.rel (0) target = $region73
  $region72: #{_lambda_.1} parent=0 // pred_region
    _
  $region73: #{_lambda_.1} parent=0 // pred_fallthru
    _
  // Predicated region
  $region74: #{_lambda_.1} parent=0 // pred_check
    _
  $region75: #{_lambda_.1} parent=0 // pred_check_branch
    %112 = sbr.rel (0) target = $region77
  $region76: #{_lambda_.1} parent=0 // pred_region
    _
  $region77: #{_lambda_.1} parent=0 // pred_fallthru
    _
  // Predicated region
  $region78: #{_lambda_.1} parent=0 // pred_check
    _
  $region79: #{_lambda_.1} parent=0 // pred_check_branch
    %114 = sbr.rel (0) target = $region81
  $region80: #{_lambda_.1} parent=0 // pred_region
    _
  $region81: #{_lambda_.1} parent=0 // pred_fallthru
    _
  // Predicated region
  $region82: #{_lambda_.1} parent=0 // pred_check
    _
  $region83: #{_lambda_.1} parent=0 // pred_check_branch
    %116 = sbr.rel (0) target = $region85
  $region84: #{_lambda_.1} parent=0 // pred_region
    _
  $region85: #{_lambda_.1} parent=0 // pred_fallthru
    _
  // Predicated region
  $region86: #{_lambda_.1} parent=0 // pred_check
    _
  $region87: #{_lambda_.1} parent=0 // pred_check_branch
    %118 = sbr.rel (0) target = $region89
  $region88: #{_lambda_.1} parent=0 // pred_region
    _
  $region89: #{_lambda_.1} parent=0 // pred_fallthru
    _
  // Predicated region
  $region90: #{_lambda_.1} parent=0 // pred_check
    _
  $region91: #{_lambda_.1} parent=0 // pred_check_branch
    %120 = sbr.rel (0) target = $region93
  $region92: #{_lambda_.1} parent=0 // pred_region
    _
  $region93: #{_lambda_.1} parent=0 // pred_fallthru
    _
  // Predicated region
  $region94: #{_lambda_.1} parent=0 // pred_check
    _
  $region95: #{_lambda_.1} parent=0 // pred_check_branch
    %122 = sbr.rel (0) target = $region97
  $region96: #{_lambda_.1} parent=0 // pred_region
    _
  $region97: #{_lambda_.1} parent=0 // pred_fallthru
    _
  // Predicated region
  $region98: #{_lambda_.1} parent=0 // pred_check
    _
  $region99: #{_lambda_.1} parent=0 // pred_check_branch
    %124 = sbr.rel (0) target = $region101
  $region100: #{_lambda_.1} parent=0 // pred_region
    _
  $region101: #{_lambda_.1} parent=0 // pred_fallthru
    _
  // Predicated region
  $region102: #{_lambda_.1} parent=0 // pred_check
    _
  $region103: #{_lambda_.1} parent=0 // pred_check_branch
    %126 = sbr.rel (0) target = $region105
  $region104: #{_lambda_.1} parent=0 // pred_region
    _
  $region105: #{_lambda_.1} parent=0 // pred_fallthru
    _
  // Predicated region
  $region106: #{_lambda_.1} parent=0 // pred_check
    _
  $region107: #{_lambda_.1} parent=0 // pred_check_branch
    %128 = sbr.rel (0) target = $region109
  $region108: #{_lambda_.1} parent=0 // pred_region
    _
  $region109: #{_lambda_.1} parent=0 // pred_fallthru
    _
  // Predicated region
  $region110: #{_lambda_.1} parent=0 // pred_check
    _
  $region111: #{_lambda_.1} parent=0 // pred_check_branch
    %130 = sbr.rel (0) target = $region113
  $region112: #{_lambda_.1} parent=0 // pred_region
    _
  $region113: #{_lambda_.1} parent=0 // pred_fallthru
    _
  // Predicated region
  $region114: #{_lambda_.1} parent=0 // pred_check
    _
  $region115: #{_lambda_.1} parent=0 // pred_check_branch
    %132 = sbr.rel (0) target = $region117
  $region116: #{_lambda_.1} parent=0 // pred_region
    _
  $region117: #{_lambda_.1} parent=0 // pred_fallthru
    _
  // Predicated region
  $region118: #{_lambda_.1} parent=0 // pred_check
    _
  $region119: #{_lambda_.1} parent=0 // pred_check_branch
    %134 = sbr.rel (0) target = $region121
  $region120: #{_lambda_.1} parent=0 // pred_region
    _
  $region121: #{_lambda_.1} parent=0 // pred_fallthru
    _
  // Predicated region
  $region122: #{_lambda_.1} parent=0 // pred_check
    _
  $region123: #{_lambda_.1} parent=0 // pred_check_branch
    %136 = sbr.rel (0) target = $region125
  $region124: #{_lambda_.1} parent=0 // pred_region
    _
  $region125: #{_lambda_.1} parent=0 // pred_fallthru
    _
  // Predicated region
  $region126: #{_lambda_.1} parent=0 // pred_check
    _
  $region127: #{_lambda_.1} parent=0 // pred_check_branch
    %138 = sbr.rel (0) target = $region129
  $region128: #{_lambda_.1} parent=0 // pred_region
    _
  $region129: #{_lambda_.1} parent=0 // pred_fallthru
    _
  // Predicated region
  $region130: #{_lambda_.1} parent=0 // pred_check
    _
  $region131: #{_lambda_.1} parent=0 // pred_check_branch
    %140 = sbr.rel (0) target = $region133
  $region132: #{_lambda_.1} parent=0 // pred_region
    _
  $region133: #{_lambda_.1} parent=0 // pred_fallthru
    _
  %v142 = vld [vmem:[%s1] sm:$0xff]
  %v143 = vld [vmem:[%s1 + $0x8] sm:$0xff]
  %v144 = vld [vmem:[%s11] sm:$0xff]
  %v145 = vld [vmem:[%s11 + $0x8] sm:$0xff]
  %v146 = vld [vmem:[%s11 + $0x10] sm:$0xff]
  %v147 = vld [vmem:[%s11 + $0x18] sm:$0xff]
  %v148 = vpack.c.bf16 %v143, %v142
  %v149 = vpack.c.bf16 %v146, %v144
  %v150 = vpack.c.bf16 %v147, %v145
  %v151 = vld [vmem:[%s13] sm:$0x3]
  %v153 = vperm.slane %v151, 0
  %v154 = vperm.slane %v151, 1
  %vm157 = vcmask 130048
  %v159 = vsel %vm157, %v148, 0
  %161 = vmatpush.bf16.msra.mxu0 0
  %162 = vmatpush.bf16.msra.mxu0 0
  %163 = vmatpush.bf16.msra.mxu0 0
  %164 = vmatpush.bf16.msra.mxu0 0
  %165 = vmatpush.bf16.msra.mxu0 0
  %166 = vmatpush.bf16.msra.mxu0 0
  %167 = vmatpush.bf16.msra.mxu0 0
  %168 = vmatpush.bf16.msra.mxu0 %v149
  %169 = vmatmul.bf16.gmra.mxu0 %v159
  %v170 = vpop.f32.mrf.mxu0
  %v171 = vadd.f32 %v153, %v170
  %v172 = vpop.f32.mrf.mxu0
  %v173 = vadd.f32 %v153, %v172
  %174 = vdwg.mxu0
  %175 = vmatpush.bf16.msra.mxu0 0
  %176 = vmatpush.bf16.msra.mxu0 0
  %177 = vmatpush.bf16.msra.mxu0 0
  %178 = vmatpush.bf16.msra.mxu0 0
  %179 = vmatpush.bf16.msra.mxu0 0
  %180 = vmatpush.bf16.msra.mxu0 0
  %181 = vmatpush.bf16.msra.mxu0 0
  %182 = vmatpush.bf16.msra.mxu0 %v150
  %183 = vmatmul.bf16.gmra.mxu0 %v159
  %v184 = vpop.f32.mrf.mxu0
  %v185 = vadd.f32 %v154, %v184
  %v186 = vpop.f32.mrf.mxu0
  %v187 = vadd.f32 %v154, %v186
  %188 = vdwg.mxu0
  %v189 = vmax.f32 %v171, 0.0
  %v190 = vmax.f32 %v185, 0.0
  %v191 = vmax.f32 %v173, 0.0
  %v192 = vmax.f32 %v187, 0.0
  %v193 = vld [vmem:[%s15] sm:$0xff]
  %v194 = vld [vmem:[%s15 + $0x8] sm:$0xff]
  %v195 = vld [vmem:[%s15 + $0x10] sm:$0xff]
  %v196 = vld [vmem:[%s15 + $0x18] sm:$0xff]
  %v197 = vld [vmem:[%s15 + $0x20] sm:$0xff]
  %v198 = vld [vmem:[%s15 + $0x28] sm:$0xff]
  %v199 = vld [vmem:[%s15 + $0x30] sm:$0xff]
  %v200 = vld [vmem:[%s15 + $0x38] sm:$0xff]
  %v201 = vld [vmem:[%s15 + $0x40] sm:$0xff]
  %v202 = vld [vmem:[%s15 + $0x48] sm:$0xff]
  %v203 = vld [vmem:[%s15 + $0x50] sm:$0xff]
  %v204 = vld [vmem:[%s15 + $0x58] sm:$0xff]
  %v205 = vld [vmem:[%s15 + $0x60] sm:$0xff]
  %v206 = vld [vmem:[%s15 + $0x68] sm:$0xff]
  %v207 = vld [vmem:[%s15 + $0x70] sm:$0xff]
  %v208 = vld [vmem:[%s15 + $0x78] sm:$0xff]
  %v209 = vld [vmem:[%s15 + $0x80] sm:$0xff]
  %v210 = vld [vmem:[%s15 + $0x88] sm:$0xff]
  %v211 = vld [vmem:[%s15 + $0x90] sm:$0xff]
  %v212 = vld [vmem:[%s15 + $0x98] sm:$0xff]
  %v213 = vld [vmem:[%s15 + $0xa0] sm:$0xff]
  %v214 = vld [vmem:[%s15 + $0xa8] sm:$0xff]
  %v215 = vld [vmem:[%s15 + $0xb0] sm:$0xff]
  %v216 = vld [vmem:[%s15 + $0xb8] sm:$0xff]
  %v217 = vld [vmem:[%s15 + $0xc0] sm:$0xff]
  %v218 = vld [vmem:[%s15 + $0xc8] sm:$0xff]
  %v219 = vld [vmem:[%s15 + $0xd0] sm:$0xff]
  %v220 = vld [vmem:[%s15 + $0xd8] sm:$0xff]
  %v221 = vld [vmem:[%s15 + $0xe0] sm:$0xff]
  %v222 = vld [vmem:[%s15 + $0xe8] sm:$0xff]
  %v223 = vld [vmem:[%s15 + $0xf0] sm:$0xff]
  %v224 = vld [vmem:[%s15 + $0xf8] sm:$0xff]
  %v225 = vpack.c.bf16 %v191, %v189
  %v226 = vpack.c.bf16 %v192, %v190
  %v227 = vpack.c.bf16 %v194, %v193
  %v228 = vpack.c.bf16 %v196, %v195
  %v229 = vpack.c.bf16 %v198, %v197
  %v230 = vpack.c.bf16 %v200, %v199
  %v231 = vpack.c.bf16 %v202, %v201
  %v232 = vpack.c.bf16 %v204, %v203
  %v233 = vpack.c.bf16 %v206, %v205
  %v234 = vpack.c.bf16 %v208, %v207
  %v235 = vpack.c.bf16 %v210, %v209
  %v236 = vpack.c.bf16 %v212, %v211
  %v237 = vpack.c.bf16 %v214, %v213
  %v238 = vpack.c.bf16 %v216, %v215
  %v239 = vpack.c.bf16 %v218, %v217
  %v240 = vpack.c.bf16 %v220, %v219
  %v241 = vpack.c.bf16 %v222, %v221
  %v242 = vpack.c.bf16 %v224, %v223
  %v243 = vld [vmem:[%s17] sm:$0x1]
  %v245 = vperm.slane %v243, 0
  %247 = vmatpush.bf16.msra.mxu0 %v234
  %248 = vmatpush.bf16.msra.mxu0 %v233
  %249 = vmatpush.bf16.msra.mxu0 %v232
  %250 = vmatpush.bf16.msra.mxu0 %v231
  %251 = vmatpush.bf16.msra.mxu0 %v230
  %252 = vmatpush.bf16.msra.mxu0 %v229
  %253 = vmatpush.bf16.msra.mxu0 %v228
  %254 = vmatpush.bf16.msra.mxu0 %v227
  %255 = vmatmul.bf16.gmra.mxu0 %v225
  %v256 = vpop.f32.mrf.mxu0
  %v257 = vadd.f32 %v245, %v256
  %v258 = vpop.f32.mrf.mxu0
  %v259 = vadd.f32 %v245, %v258
  %260 = vdwg.mxu0
  %261 = vmatpush.bf16.msra.mxu0 %v242
  %262 = vmatpush.bf16.msra.mxu0 %v241
  %263 = vmatpush.bf16.msra.mxu0 %v240
  %264 = vmatpush.bf16.msra.mxu0 %v239
  %265 = vmatpush.bf16.msra.mxu0 %v238
  %266 = vmatpush.bf16.msra.mxu0 %v237
  %267 = vmatpush.bf16.msra.mxu0 %v236
  %268 = vmatpush.bf16.msra.mxu0 %v235
  %269 = vmatmul.bf16.gmra.mxu0 %v226
  %v270 = vpop.f32.mrf.mxu0
  %v271 = vadd.f32 %v257, %v270
  %v272 = vpop.f32.mrf.mxu0
  %v273 = vadd.f32 %v259, %v272
  %274 = vdwg.mxu0
  %v275 = vld [vmem:[%s5] sm:$0xff]
  %v276 = vld [vmem:[%s7] sm:$0x3]
  %v277 = vld [vmem:[%s3] sm:$0x1]
  %v278 = vperm.slane %v277, 0
  %v279 = vadd.f32 %v271, %v278
  %v280 = vadd.f32 %v279, %v275
  %v281 = vld [vmem:[%s3 + $0x1] sm:$0x1]
  %v282 = vperm.slane %v281, 0
  %v283 = vadd.f32 %v273, %v282
  %v284 = vadd.f32 %v283, %v275
  %v286 = vrot.slane %v280, 6
  %v289 = vrot.slane %v284, 6
  %vm291 = vcmask 1041408
  %v292 = vsel %vm291, %v276, %v286
  %v293 = vsel %vm291, %v286, 0.0
  %v294 = vsel %vm291, %v276, %v289
  %v295 = vsel %vm291, %v289, 0.0
  %v296 = vld [vmem:[%s9] sm:$0xff]
  %v297 = vld [vmem:[%s9 + $0x8] sm:$0xff]
  %v298 = vld [vmem:[%s9 + $0x10] sm:$0xff]
  %v299 = vld [vmem:[%s9 + $0x18] sm:$0xff]
  %v300 = vld [vmem:[%s19] sm:$0x1]
  %v301 = vld [vmem:[%s21] sm:$0x1]
  %vm302 = vcmask 261120
  %v303 = vsel %vm302, %v292, 0.0
  %304 = vadd.xlane.f32.xlu0 %v303
  %v305 = vpop.xlane.xlu0 %304
  %v306 = vsel %vm302, %v293, 0.0
  %307 = vadd.xlane.f32.xlu0 %v306
  %v308 = vpop.xlane.xlu0 %307
  %v309 = vsel %vm302, %v294, 0.0
  %310 = vadd.xlane.f32.xlu0 %v309
  %v311 = vpop.xlane.xlu0 %310
  %v312 = vsel %vm302, %v295, 0.0
  %313 = vadd.xlane.f32.xlu0 %v312
  %v314 = vpop.xlane.xlu0 %313
  %v315 = vrcp.pop 32.0
  %v316 = vmul.f32 32.0, %v315
  %v317 = vsub.f32 1.0, %v316
  %v318 = vmul.f32 %v315, %v317
  %v319 = vadd.f32 %v315, %v318
  %vm320 = vweird.f32 %v315
  %v321 = vsel %vm320, %v315, %v319
  %v322 = vmul.f32 %v305, %v321
  %v323 = vmul.f32 %v308, %v321
  %v324 = vmul.f32 %v311, %v321
  %v325 = vmul.f32 %v314, %v321
  %v326 = vsub.f32 %v292, %v322
  %v327 = vsub.f32 %v293, %v323
  %v328 = vsub.f32 %v294, %v324
  %v329 = vsub.f32 %v295, %v325
  %v330 = vmul.f32 %v326, %v326
  %v331 = vmul.f32 %v327, %v327
  %v332 = vmul.f32 %v328, %v328
  %v333 = vmul.f32 %v329, %v329
  %v334 = vsel %vm302, %v330, 0.0
  %335 = vadd.xlane.f32.xlu0 %v334
  %v336 = vpop.xlane.xlu0 %335
  %v337 = vsel %vm302, %v331, 0.0
  %338 = vadd.xlane.f32.xlu0 %v337
  %v339 = vpop.xlane.xlu0 %338
  %v340 = vsel %vm302, %v332, 0.0
  %341 = vadd.xlane.f32.xlu0 %v340
  %v342 = vpop.xlane.xlu0 %341
  %v343 = vsel %vm302, %v333, 0.0
  %344 = vadd.xlane.f32.xlu0 %v343
  %v345 = vpop.xlane.xlu0 %344
  %v346 = vmul.f32 %v336, %v321
  %v347 = vmul.f32 %v339, %v321
  %v348 = vmul.f32 %v342, %v321
  %v349 = vmul.f32 %v345, %v321
  %v350 = vadd.f32 %v346, 1e-05
  %v351 = vadd.f32 %v347, 1e-05
  %v352 = vadd.f32 %v348, 1e-05
  %v353 = vadd.f32 %v349, 1e-05
  %v354 = vrsqrt.pop %v350
  %v355 = vmul.f32 %v354, %v350
  %v356 = vmul.f32 %v355, %v354
  %v357 = vmul.f32 0.5, %v356
  %v358 = vsub.f32 1.5, %v357
  %v359 = vmul.f32 %v354, %v358
  %vm360 = vweird.f32 %v350
  %vm361 = vweird.f32 %v354
  %vm362 = vmor %vm360, %vm361
  %v363 = vsel %vm362, %v354, %v359
  %v364 = vrsqrt.pop %v351
  %v365 = vmul.f32 %v364, %v351
  %v366 = vmul.f32 %v365, %v364
  %v367 = vmul.f32 0.5, %v366
  %v368 = vsub.f32 1.5, %v367
  %v369 = vmul.f32 %v364, %v368
  %vm370 = vweird.f32 %v351
  %vm371 = vweird.f32 %v364
  %vm372 = vmor %vm370, %vm371
  %v373 = vsel %vm372, %v364, %v369
  %v374 = vrsqrt.pop %v352
  %v375 = vmul.f32 %v374, %v352
  %v376 = vmul.f32 %v375, %v374
  %v377 = vmul.f32 0.5, %v376
  %v378 = vsub.f32 1.5, %v377
  %v379 = vmul.f32 %v374, %v378
  %vm380 = vweird.f32 %v352
  %vm381 = vweird.f32 %v374
  %vm382 = vmor %vm380, %vm381
  %v383 = vsel %vm382, %v374, %v379
  %v384 = vrsqrt.pop %v353
  %v385 = vmul.f32 %v384, %v353
  %v386 = vmul.f32 %v385, %v384
  %v387 = vmul.f32 0.5, %v386
  %v388 = vsub.f32 1.5, %v387
  %v389 = vmul.f32 %v384, %v388
  %vm390 = vweird.f32 %v353
  %vm391 = vweird.f32 %v384
  %vm392 = vmor %vm390, %vm391
  %v393 = vsel %vm392, %v384, %v389
  %v394 = vmul.f32 %v326, %v363
  %v395 = vmul.f32 %v327, %v373
  %v396 = vmul.f32 %v328, %v383
  %v397 = vmul.f32 %v329, %v393
  %v399 = vperm.slane %v300, 0
  %v401 = vmul.f32 %v394, %v399
  %v402 = vmul.f32 %v395, %v399
  %v403 = vmul.f32 %v396, %v399
  %v404 = vmul.f32 %v397, %v399
  %v406 = vperm.slane %v301, 0
  %v408 = vadd.f32 %v401, %v406
  %v409 = vadd.f32 %v402, %v406
  %v410 = vadd.f32 %v403, %v406
  %v411 = vadd.f32 %v404, %v406
  %v412 = vld [vmem:[%s27] sm:$0xff]
  %v413 = vld [vmem:[%s27 + $0x8] sm:$0xff]
  %v414 = vld [vmem:[%s27 + $0x10] sm:$0xff]
  %v415 = vld [vmem:[%s27 + $0x18] sm:$0xff]
  %v416 = vpack.c.bf16 %v409, %v408
  %v417 = vpack.c.bf16 %v411, %v410
  %v418 = vpack.c.bf16 %v413, %v412
  %v419 = vpack.c.bf16 %v415, %v414
  %v420 = vld [vmem:[%s29] sm:$0x1]
  %v422 = vperm.slane %v420, 0
  %v425 = vsel %vm302, %v416, 0
  %v428 = vsel %vm302, %v417, 0
  %430 = vmatpush.bf16.msra.mxu0 0
  %431 = vmatpush.bf16.msra.mxu0 0
  %432 = vmatpush.bf16.msra.mxu0 0
  %433 = vmatpush.bf16.msra.mxu0 0
  %434 = vmatpush.bf16.msra.mxu0 0
  %435 = vmatpush.bf16.msra.mxu0 0
  %436 = vmatpush.bf16.msra.mxu0 %v419
  %437 = vmatpush.bf16.msra.mxu0 %v418
  %438 = vmatmul.bf16.gmra.mxu0 %v425
  %v439 = vpop.f32.mrf.mxu0
  %v440 = vadd.f32 %v422, %v439
  %v441 = vpop.f32.mrf.mxu0
  %v442 = vadd.f32 %v422, %v441
  %443 = vmatmul.bf16.gmra.mxu0 %v428
  %v444 = vpop.f32.mrf.mxu0
  %v445 = vadd.f32 %v422, %v444
  %v446 = vpop.f32.mrf.mxu0
  %v447 = vadd.f32 %v422, %v446
  %448 = vdwg.mxu0
  %v449 = vpack.c.bf16 %v442, %v440
  %v450 = vpack.c.bf16 %v447, %v445
  %453 = vrot.lane.b32.xlu0 %v449, 96
  %v454 = vpop.permute.xlu0 %453
  %455 = vrot.lane.b32.xlu0 %v450, 96
  %v456 = vpop.permute.xlu0 %455
  %vm457 = vcmask 64512
  %v459 = vsel %vm457, %v449, 0
  %v462 = vsel %vm457, %v450, 0
  %v465 = vsel %vm457, %v454, 0
  %v468 = vsel %vm457, %v456, 0
  %470 = vmatpush.bf16.xpose.msra.mxu0 0
  %471 = vmatpush.bf16.xpose.msra.mxu0 0
  %472 = vmatpush.bf16.xpose.msra.mxu0 0
  %473 = vmatpush.bf16.xpose.msra.mxu0 0
  %474 = vmatpush.bf16.xpose.msra.mxu0 0
  %475 = vmatpush.bf16.xpose.msra.mxu0 0
  %476 = vmatpush.bf16.xpose.msra.mxu0 %v468
  %477 = vmatpush.bf16.xpose.msra.mxu0 %v465
  %478 = vmatmul.bf16.gmra.mxu0 %v459
  %v479 = vpop.f32.mrf.mxu0
  %v480 = vadd.f32 0.0, %v479
  %v481 = vpop.f32.mrf.mxu0
  %v482 = vadd.f32 0.0, %v481
  %483 = vmatmul.bf16.gmra.mxu0 %v462
  %v484 = vpop.f32.mrf.mxu0
  %v485 = vadd.f32 0.0, %v484
  %v486 = vpop.f32.mrf.mxu0
  %v487 = vadd.f32 0.0, %v486
  %488 = vdwg.mxu0
  %v489 = vmul.f32 %v480, 0.35355338
  %v490 = vmul.f32 %v482, 0.35355338
  %v491 = vmul.f32 %v485, 0.35355338
  %v492 = vmul.f32 %v487, 0.35355338
  %v493 = vadd.f32 %v489, %v296
  %v494 = vadd.f32 %v490, %v297
  %v495 = vadd.f32 %v491, %v298
  %v496 = vadd.f32 %v492, %v299
  %v497 = vsel %vm302, %v493, -inf
  %498 = vmax.xlane.f32.xlu0 %v497
  %v499 = vpop.xlane.xlu0 %498
  %v500 = vsel %vm302, %v494, -inf
  %501 = vmax.xlane.f32.xlu0 %v500
  %v502 = vpop.xlane.xlu0 %501
  %v503 = vsel %vm302, %v495, -inf
  %504 = vmax.xlane.f32.xlu0 %v503
  %v505 = vpop.xlane.xlu0 %504
  %v506 = vsel %vm302, %v496, -inf
  %507 = vmax.xlane.f32.xlu0 %v506
  %v508 = vpop.xlane.xlu0 %507
  %v509 = vsub.f32 %v493, %v499
  %v510 = vsub.f32 %v494, %v502
  %v511 = vsub.f32 %v495, %v505
  %v512 = vsub.f32 %v496, %v508
  %v513 = vmul.f32 %v509, 1.442695
  %v514 = vpow.pop %v513
  %v515 = vmul.f32 %v510, 1.442695
  %v516 = vpow.pop %v515
  %v517 = vmul.f32 %v511, 1.442695
  %v518 = vpow.pop %v517
  %v519 = vmul.f32 %v512, 1.442695
  %v520 = vpow.pop %v519
  %v521 = vsel %vm302, %v514, 0.0
  %522 = vadd.xlane.f32.xlu0 %v521
  %v523 = vpop.xlane.xlu0 %522
  %v524 = vsel %vm302, %v516, 0.0
  %525 = vadd.xlane.f32.xlu0 %v524
  %v526 = vpop.xlane.xlu0 %525
  %v527 = vsel %vm302, %v518, 0.0
  %528 = vadd.xlane.f32.xlu0 %v527
  %v529 = vpop.xlane.xlu0 %528
  %v530 = vsel %vm302, %v520, 0.0
  %531 = vadd.xlane.f32.xlu0 %v530
  %v532 = vpop.xlane.xlu0 %531
  %v533 = vrcp.pop %v523
  %v534 = vrcp.pop %v526
  %v535 = vrcp.pop %v529
  %v536 = vrcp.pop %v532
  %v537 = vmul.f32 %v514, %v533
  %v538 = vmul.f32 %v516, %v534
  %v539 = vmul.f32 %v518, %v535
  %v540 = vmul.f32 %v520, %v536
  %v541 = vpack.c.bf16 %v538, %v537
  %v542 = vpack.c.bf16 %v540, %v539
  %543 = vrot.lane.b32.xlu0 %v449, 64
  %v544 = vpop.permute.xlu0 %543
  %545 = vrot.lane.b32.xlu0 %v450, 64
  %v546 = vpop.permute.xlu0 %545
  %v550 = vsel %vm302, %v541, 0
  %v553 = vsel %vm302, %v542, 0
  %555 = vmatpush.bf16.msra.mxu0 0
  %556 = vmatpush.bf16.msra.mxu0 0
  %557 = vmatpush.bf16.msra.mxu0 0
  %558 = vmatpush.bf16.msra.mxu0 0
  %559 = vmatpush.bf16.msra.mxu0 0
  %560 = vmatpush.bf16.msra.mxu0 0
  %561 = vmatpush.bf16.msra.mxu0 %v546
  %562 = vmatpush.bf16.msra.mxu0 %v544
  %563 = vmatmul.bf16.gmra.mxu0 %v550
  %v564 = vpop.f32.mrf.mxu0
  %v565 = vadd.f32 0.0, %v564
  %v566 = vpop.f32.mrf.mxu0
  %v567 = vadd.f32 0.0, %v566
  %568 = vmatmul.bf16.gmra.mxu0 %v553
  %v569 = vpop.f32.mrf.mxu0
  %v570 = vadd.f32 0.0, %v569
  %v571 = vpop.f32.mrf.mxu0
  %v572 = vadd.f32 0.0, %v571
  %573 = vdwg.mxu0
  %574 = vrot.lane.b32.xlu0 %v449, 120
  %v575 = vpop.permute.xlu0 %574
  %576 = vrot.lane.b32.xlu0 %v450, 120
  %v577 = vpop.permute.xlu0 %576
  %578 = vrot.lane.b32.xlu0 %v449, 88
  %v579 = vpop.permute.xlu0 %578
  %580 = vrot.lane.b32.xlu0 %v450, 88
  %v581 = vpop.permute.xlu0 %580
  %v583 = vsel %vm457, %v575, 0
  %v586 = vsel %vm457, %v577, 0
  %v589 = vsel %vm457, %v579, 0
  %v592 = vsel %vm457, %v581, 0
  %594 = vmatpush.bf16.xpose.msra.mxu0 0
  %595 = vmatpush.bf16.xpose.msra.mxu0 0
  %596 = vmatpush.bf16.xpose.msra.mxu0 0
  %597 = vmatpush.bf16.xpose.msra.mxu0 0
  %598 = vmatpush.bf16.xpose.msra.mxu0 0
  %599 = vmatpush.bf16.xpose.msra.mxu0 0
  %600 = vmatpush.bf16.xpose.msra.mxu0 %v592
  %601 = vmatpush.bf16.xpose.msra.mxu0 %v589
  %602 = vmatmul.bf16.gmra.mxu0 %v583
  %v603 = vpop.f32.mrf.mxu0
  %v604 = vadd.f32 0.0, %v603
  %v605 = vpop.f32.mrf.mxu0
  %v606 = vadd.f32 0.0, %v605
  %607 = vmatmul.bf16.gmra.mxu0 %v586
  %v608 = vpop.f32.mrf.mxu0
  %v609 = vadd.f32 0.0, %v608
  %v610 = vpop.f32.mrf.mxu0
  %v611 = vadd.f32 0.0, %v610
  %612 = vdwg.mxu0
  %v613 = vmul.f32 %v604, 0.35355338
  %v614 = vmul.f32 %v606, 0.35355338
  %v615 = vmul.f32 %v609, 0.35355338
  %v616 = vmul.f32 %v611, 0.35355338
  %v617 = vadd.f32 %v613, %v296
  %v618 = vadd.f32 %v614, %v297
  %v619 = vadd.f32 %v615, %v298
  %v620 = vadd.f32 %v616, %v299
  %v621 = vsel %vm302, %v617, -inf
  %622 = vmax.xlane.f32.xlu0 %v621
  %v623 = vpop.xlane.xlu0 %622
  %v624 = vsel %vm302, %v618, -inf
  %625 = vmax.xlane.f32.xlu0 %v624
  %v626 = vpop.xlane.xlu0 %625
  %v627 = vsel %vm302, %v619, -inf
  %628 = vmax.xlane.f32.xlu0 %v627
  %v629 = vpop.xlane.xlu0 %628
  %v630 = vsel %vm302, %v620, -inf
  %631 = vmax.xlane.f32.xlu0 %v630
  %v632 = vpop.xlane.xlu0 %631
  %v633 = vsub.f32 %v617, %v623
  %v634 = vsub.f32 %v618, %v626
  %v635 = vsub.f32 %v619, %v629
  %v636 = vsub.f32 %v620, %v632
  %v637 = vmul.f32 %v633, 1.442695
  %v638 = vpow.pop %v637
  %v639 = vmul.f32 %v634, 1.442695
  %v640 = vpow.pop %v639
  %v641 = vmul.f32 %v635, 1.442695
  %v642 = vpow.pop %v641
  %v643 = vmul.f32 %v636, 1.442695
  %v644 = vpow.pop %v643
  %v645 = vsel %vm302, %v638, 0.0
  %646 = vadd.xlane.f32.xlu0 %v645
  %v647 = vpop.xlane.xlu0 %646
  %v648 = vsel %vm302, %v640, 0.0
  %649 = vadd.xlane.f32.xlu0 %v648
  %v650 = vpop.xlane.xlu0 %649
  %v651 = vsel %vm302, %v642, 0.0
  %652 = vadd.xlane.f32.xlu0 %v651
  %v653 = vpop.xlane.xlu0 %652
  %v654 = vsel %vm302, %v644, 0.0
  %655 = vadd.xlane.f32.xlu0 %v654
  %v656 = vpop.xlane.xlu0 %655
  %v657 = vrcp.pop %v647
  %v658 = vrcp.pop %v650
  %v659 = vrcp.pop %v653
  %v660 = vrcp.pop %v656
  %v661 = vmul.f32 %v638, %v657
  %v662 = vmul.f32 %v640, %v658
  %v663 = vmul.f32 %v642, %v659
  %v664 = vmul.f32 %v644, %v660
  %v665 = vpack.c.bf16 %v662, %v661
  %v666 = vpack.c.bf16 %v664, %v663
  %667 = vrot.lane.b32.xlu0 %v449, 56
  %v668 = vpop.permute.xlu0 %667
  %669 = vrot.lane.b32.xlu0 %v450, 56
  %v670 = vpop.permute.xlu0 %669
  %v674 = vsel %vm302, %v665, 0
  %v677 = vsel %vm302, %v666, 0
  %679 = vmatpush.bf16.msra.mxu0 0
  %680 = vmatpush.bf16.msra.mxu0 0
  %681 = vmatpush.bf16.msra.mxu0 0
  %682 = vmatpush.bf16.msra.mxu0 0
  %683 = vmatpush.bf16.msra.mxu0 0
  %684 = vmatpush.bf16.msra.mxu0 0
  %685 = vmatpush.bf16.msra.mxu0 %v670
  %686 = vmatpush.bf16.msra.mxu0 %v668
  %687 = vmatmul.bf16.gmra.mxu0 %v674
  %v688 = vpop.f32.mrf.mxu0
  %v689 = vadd.f32 0.0, %v688
  %v690 = vpop.f32.mrf.mxu0
  %v691 = vadd.f32 0.0, %v690
  %692 = vmatmul.bf16.gmra.mxu0 %v677
  %v693 = vpop.f32.mrf.mxu0
  %v694 = vadd.f32 0.0, %v693
  %v695 = vpop.f32.mrf.mxu0
  %v696 = vadd.f32 0.0, %v695
  %697 = vdwg.mxu0
  %698 = vrot.lane.b32.xlu0 %v449, 112
  %v699 = vpop.permute.xlu0 %698
  %700 = vrot.lane.b32.xlu0 %v450, 112
  %v701 = vpop.permute.xlu0 %700
  %702 = vrot.lane.b32.xlu0 %v449, 80
  %v703 = vpop.permute.xlu0 %702
  %704 = vrot.lane.b32.xlu0 %v450, 80
  %v705 = vpop.permute.xlu0 %704
  %v707 = vsel %vm457, %v699, 0
  %v710 = vsel %vm457, %v701, 0
  %v713 = vsel %vm457, %v703, 0
  %v716 = vsel %vm457, %v705, 0
  %718 = vmatpush.bf16.xpose.msra.mxu0 0
  %719 = vmatpush.bf16.xpose.msra.mxu0 0
  %720 = vmatpush.bf16.xpose.msra.mxu0 0
  %721 = vmatpush.bf16.xpose.msra.mxu0 0
  %722 = vmatpush.bf16.xpose.msra.mxu0 0
  %723 = vmatpush.bf16.xpose.msra.mxu0 0
  %724 = vmatpush.bf16.xpose.msra.mxu0 %v716
  %725 = vmatpush.bf16.xpose.msra.mxu0 %v713
  %726 = vmatmul.bf16.gmra.mxu0 %v707
  %v727 = vpop.f32.mrf.mxu0
  %v728 = vadd.f32 0.0, %v727
  %v729 = vpop.f32.mrf.mxu0
  %v730 = vadd.f32 0.0, %v729
  %731 = vmatmul.bf16.gmra.mxu0 %v710
  %v732 = vpop.f32.mrf.mxu0
  %v733 = vadd.f32 0.0, %v732
  %v734 = vpop.f32.mrf.mxu0
  %v735 = vadd.f32 0.0, %v734
  %736 = vdwg.mxu0
  %v737 = vmul.f32 %v728, 0.35355338
  %v738 = vmul.f32 %v730, 0.35355338
  %v739 = vmul.f32 %v733, 0.35355338
  %v740 = vmul.f32 %v735, 0.35355338
  %v741 = vadd.f32 %v737, %v296
  %v742 = vadd.f32 %v738, %v297
  %v743 = vadd.f32 %v739, %v298
  %v744 = vadd.f32 %v740, %v299
  %v745 = vsel %vm302, %v741, -inf
  %746 = vmax.xlane.f32.xlu0 %v745
  %v747 = vpop.xlane.xlu0 %746
  %v748 = vsel %vm302, %v742, -inf
  %749 = vmax.xlane.f32.xlu0 %v748
  %v750 = vpop.xlane.xlu0 %749
  %v751 = vsel %vm302, %v743, -inf
  %752 = vmax.xlane.f32.xlu0 %v751
  %v753 = vpop.xlane.xlu0 %752
  %v754 = vsel %vm302, %v744, -inf
  %755 = vmax.xlane.f32.xlu0 %v754
  %v756 = vpop.xlane.xlu0 %755
  %v757 = vsub.f32 %v741, %v747
  %v758 = vsub.f32 %v742, %v750
  %v759 = vsub.f32 %v743, %v753
  %v760 = vsub.f32 %v744, %v756
  %v761 = vmul.f32 %v757, 1.442695
  %v762 = vpow.pop %v761
  %v763 = vmul.f32 %v758, 1.442695
  %v764 = vpow.pop %v763
  %v765 = vmul.f32 %v759, 1.442695
  %v766 = vpow.pop %v765
  %v767 = vmul.f32 %v760, 1.442695
  %v768 = vpow.pop %v767
  %v769 = vsel %vm302, %v762, 0.0
  %770 = vadd.xlane.f32.xlu0 %v769
  %v771 = vpop.xlane.xlu0 %770
  %v772 = vsel %vm302, %v764, 0.0
  %773 = vadd.xlane.f32.xlu0 %v772
  %v774 = vpop.xlane.xlu0 %773
  %v775 = vsel %vm302, %v766, 0.0
  %776 = vadd.xlane.f32.xlu0 %v775
  %v777 = vpop.xlane.xlu0 %776
  %v778 = vsel %vm302, %v768, 0.0
  %779 = vadd.xlane.f32.xlu0 %v778
  %v780 = vpop.xlane.xlu0 %779
  %v781 = vrcp.pop %v771
  %v782 = vrcp.pop %v774
  %v783 = vrcp.pop %v777
  %v784 = vrcp.pop %v780
  %v785 = vmul.f32 %v762, %v781
  %v786 = vmul.f32 %v764, %v782
  %v787 = vmul.f32 %v766, %v783
  %v788 = vmul.f32 %v768, %v784
  %v789 = vpack.c.bf16 %v786, %v785
  %v790 = vpack.c.bf16 %v788, %v787
  %791 = vrot.lane.b32.xlu0 %v449, 48
  %v792 = vpop.permute.xlu0 %791
  %793 = vrot.lane.b32.xlu0 %v450, 48
  %v794 = vpop.permute.xlu0 %793
  %v798 = vsel %vm302, %v789, 0
  %v801 = vsel %vm302, %v790, 0
  %803 = vmatpush.bf16.msra.mxu0 0
  %804 = vmatpush.bf16.msra.mxu0 0
  %805 = vmatpush.bf16.msra.mxu0 0
  %806 = vmatpush.bf16.msra.mxu0 0
  %807 = vmatpush.bf16.msra.mxu0 0
  %808 = vmatpush.bf16.msra.mxu0 0
  %809 = vmatpush.bf16.msra.mxu0 %v794
  %810 = vmatpush.bf16.msra.mxu0 %v792
  %811 = vmatmul.bf16.gmra.mxu0 %v798
  %v812 = vpop.f32.mrf.mxu0
  %v813 = vadd.f32 0.0, %v812
  %v814 = vpop.f32.mrf.mxu0
  %v815 = vadd.f32 0.0, %v814
  %816 = vmatmul.bf16.gmra.mxu0 %v801
  %v817 = vpop.f32.mrf.mxu0
  %v818 = vadd.f32 0.0, %v817
  %v819 = vpop.f32.mrf.mxu0
  %v820 = vadd.f32 0.0, %v819
  %821 = vdwg.mxu0
  %822 = vrot.lane.b32.xlu0 %v449, 104
  %v823 = vpop.permute.xlu0 %822
  %824 = vrot.lane.b32.xlu0 %v450, 104
  %v825 = vpop.permute.xlu0 %824
  %826 = vrot.lane.b32.xlu0 %v449, 72
  %v827 = vpop.permute.xlu0 %826
  %828 = vrot.lane.b32.xlu0 %v450, 72
  %v829 = vpop.permute.xlu0 %828
  %v831 = vsel %vm457, %v823, 0
  %v834 = vsel %vm457, %v825, 0
  %v837 = vsel %vm457, %v827, 0
  %v840 = vsel %vm457, %v829, 0
  %842 = vmatpush.bf16.xpose.msra.mxu0 0
  %843 = vmatpush.bf16.xpose.msra.mxu0 0
  %844 = vmatpush.bf16.xpose.msra.mxu0 0
  %845 = vmatpush.bf16.xpose.msra.mxu0 0
  %846 = vmatpush.bf16.xpose.msra.mxu0 0
  %847 = vmatpush.bf16.xpose.msra.mxu0 0
  %848 = vmatpush.bf16.xpose.msra.mxu0 %v840
  %849 = vmatpush.bf16.xpose.msra.mxu0 %v837
  %850 = vmatmul.bf16.gmra.mxu0 %v831
  %v851 = vpop.f32.mrf.mxu0
  %v852 = vadd.f32 0.0, %v851
  %v853 = vpop.f32.mrf.mxu0
  %v854 = vadd.f32 0.0, %v853
  %855 = vmatmul.bf16.gmra.mxu0 %v834
  %v856 = vpop.f32.mrf.mxu0
  %v857 = vadd.f32 0.0, %v856
  %v858 = vpop.f32.mrf.mxu0
  %v859 = vadd.f32 0.0, %v858
  %860 = vdwg.mxu0
  %v861 = vmul.f32 %v852, 0.35355338
  %v862 = vmul.f32 %v854, 0.35355338
  %v863 = vmul.f32 %v857, 0.35355338
  %v864 = vmul.f32 %v859, 0.35355338
  %v865 = vadd.f32 %v861, %v296
  %v866 = vadd.f32 %v862, %v297
  %v867 = vadd.f32 %v863, %v298
  %v868 = vadd.f32 %v864, %v299
  %v869 = vsel %vm302, %v865, -inf
  %870 = vmax.xlane.f32.xlu0 %v869
  %v871 = vpop.xlane.xlu0 %870
  %v872 = vsel %vm302, %v866, -inf
  %873 = vmax.xlane.f32.xlu0 %v872
  %v874 = vpop.xlane.xlu0 %873
  %v875 = vsel %vm302, %v867, -inf
  %876 = vmax.xlane.f32.xlu0 %v875
  %v877 = vpop.xlane.xlu0 %876
  %v878 = vsel %vm302, %v868, -inf
  %879 = vmax.xlane.f32.xlu0 %v878
  %v880 = vpop.xlane.xlu0 %879
  %v881 = vsub.f32 %v865, %v871
  %v882 = vsub.f32 %v866, %v874
  %v883 = vsub.f32 %v867, %v877
  %v884 = vsub.f32 %v868, %v880
  %v885 = vmul.f32 %v881, 1.442695
  %v886 = vpow.pop %v885
  %v887 = vmul.f32 %v882, 1.442695
  %v888 = vpow.pop %v887
  %v889 = vmul.f32 %v883, 1.442695
  %v890 = vpow.pop %v889
  %v891 = vmul.f32 %v884, 1.442695
  %v892 = vpow.pop %v891
  %v893 = vsel %vm302, %v886, 0.0
  %894 = vadd.xlane.f32.xlu0 %v893
  %v895 = vpop.xlane.xlu0 %894
  %v896 = vsel %vm302, %v888, 0.0
  %897 = vadd.xlane.f32.xlu0 %v896
  %v898 = vpop.xlane.xlu0 %897
  %v899 = vsel %vm302, %v890, 0.0
  %900 = vadd.xlane.f32.xlu0 %v899
  %v901 = vpop.xlane.xlu0 %900
  %v902 = vsel %vm302, %v892, 0.0
  %903 = vadd.xlane.f32.xlu0 %v902
  %v904 = vpop.xlane.xlu0 %903
  %v905 = vrcp.pop %v895
  %v906 = vrcp.pop %v898
  %v907 = vrcp.pop %v901
  %v908 = vrcp.pop %v904
  %v909 = vmul.f32 %v886, %v905
  %v910 = vmul.f32 %v888, %v906
  %v911 = vmul.f32 %v890, %v907
  %v912 = vmul.f32 %v892, %v908
  %v913 = vpack.c.bf16 %v910, %v909
  %v914 = vpack.c.bf16 %v912, %v911
  %915 = vrot.lane.b32.xlu0 %v449, 40
  %v916 = vpop.permute.xlu0 %915
  %917 = vrot.lane.b32.xlu0 %v450, 40
  %v918 = vpop.permute.xlu0 %917
  %v922 = vsel %vm302, %v913, 0
  %v925 = vsel %vm302, %v914, 0
  %927 = vmatpush.bf16.msra.mxu0 0
  %928 = vmatpush.bf16.msra.mxu0 0
  %929 = vmatpush.bf16.msra.mxu0 0
  %930 = vmatpush.bf16.msra.mxu0 0
  %931 = vmatpush.bf16.msra.mxu0 0
  %932 = vmatpush.bf16.msra.mxu0 0
  %933 = vmatpush.bf16.msra.mxu0 %v918
  %934 = vmatpush.bf16.msra.mxu0 %v916
  %935 = vmatmul.bf16.gmra.mxu0 %v922
  %v936 = vpop.f32.mrf.mxu0
  %v937 = vadd.f32 0.0, %v936
  %v938 = vpop.f32.mrf.mxu0
  %v939 = vadd.f32 0.0, %v938
  %940 = vmatmul.bf16.gmra.mxu0 %v925
  %v941 = vpop.f32.mrf.mxu0
  %v942 = vadd.f32 0.0, %v941
  %v943 = vpop.f32.mrf.mxu0
  %v944 = vadd.f32 0.0, %v943
  %945 = vdwg.mxu0
  %950 = vrot.lane.b32.xlu0 %v689, 8
  %v951 = vpop.permute.xlu0 %950
  %952 = vrot.lane.b32.xlu0 %v691, 8
  %v953 = vpop.permute.xlu0 %952
  %954 = vrot.lane.b32.xlu0 %v694, 8
  %v955 = vpop.permute.xlu0 %954
  %956 = vrot.lane.b32.xlu0 %v696, 8
  %v957 = vpop.permute.xlu0 %956
  %966 = vrot.lane.b32.xlu0 %v813, 16
  %v967 = vpop.permute.xlu0 %966
  %968 = vrot.lane.b32.xlu0 %v815, 16
  %v969 = vpop.permute.xlu0 %968
  %970 = vrot.lane.b32.xlu0 %v818, 16
  %v971 = vpop.permute.xlu0 %970
  %972 = vrot.lane.b32.xlu0 %v820, 16
  %v973 = vpop.permute.xlu0 %972
  %982 = vrot.lane.b32.xlu0 %v937, 24
  %v983 = vpop.permute.xlu0 %982
  %984 = vrot.lane.b32.xlu0 %v939, 24
  %v985 = vpop.permute.xlu0 %984
  %986 = vrot.lane.b32.xlu0 %v942, 24
  %v987 = vpop.permute.xlu0 %986
  %988 = vrot.lane.b32.xlu0 %v944, 24
  %v989 = vpop.permute.xlu0 %988
  %v994 = vsel %vm457, %v565, %v951
  %v995 = vsel %vm457, %v567, %v953
  %v996 = vsel %vm457, %v570, %v955
  %v997 = vsel %vm457, %v572, %v957
  %v998 = vsel %vm157, %v994, %v967
  %v999 = vsel %vm157, %v995, %v969
  %v1000 = vsel %vm157, %v996, %v971
  %v1001 = vsel %vm157, %v997, %v973
  %vm1002 = vcmask 195584
  %v1003 = vsel %vm1002, %v998, %v983
  %v1004 = vsel %vm1002, %v999, %v985
  %v1005 = vsel %vm1002, %v1000, %v987
  %v1006 = vsel %vm1002, %v1001, %v989
  %v1007 = vld [vmem:[%s31] sm:$0xff]
  %v1008 = vld [vmem:[%s31 + $0x8] sm:$0xff]
  %v1009 = vld [vmem:[%s31 + $0x10] sm:$0xff]
  %v1010 = vld [vmem:[%s31 + $0x18] sm:$0xff]
  %v1011 = vpack.c.bf16 %v1004, %v1003
  %v1012 = vpack.c.bf16 %v1006, %v1005
  %v1013 = vpack.c.bf16 %v1008, %v1007
  %v1014 = vpack.c.bf16 %v1010, %v1009
  %v1016 = vsel %vm302, %v1011, 0
  %v1019 = vsel %vm302, %v1012, 0
  %1021 = vmatpush.bf16.msra.mxu0 0
  %1022 = vmatpush.bf16.msra.mxu0 0
  %1023 = vmatpush.bf16.msra.mxu0 0
  %1024 = vmatpush.bf16.msra.mxu0 0
  %1025 = vmatpush.bf16.msra.mxu0 0
  %1026 = vmatpush.bf16.msra.mxu0 0
  %1027 = vmatpush.bf16.msra.mxu0 %v1014
  %1028 = vmatpush.bf16.msra.mxu0 %v1013
  %1029 = vmatmul.bf16.gmra.mxu0 %v1016
  %v1030 = vpop.f32.mrf.mxu0
  %v1031 = vadd.f32 0.0, %v1030
  %v1032 = vpop.f32.mrf.mxu0
  %v1033 = vadd.f32 0.0, %v1032
  %1034 = vmatmul.bf16.gmra.mxu0 %v1019
  %v1035 = vpop.f32.mrf.mxu0
  %v1036 = vadd.f32 0.0, %v1035
  %v1037 = vpop.f32.mrf.mxu0
  %v1038 = vadd.f32 0.0, %v1037
  %1039 = vdwg.mxu0
  %v1040 = vadd.f32 %v292, %v1031
  %v1041 = vadd.f32 %v293, %v1033
  %v1042 = vadd.f32 %v294, %v1036
  %v1043 = vadd.f32 %v295, %v1038
  %v1044 = vld [vmem:[%s33] sm:$0x1]
  %v1046 = vperm.slane %v1044, 0
  %v1048 = vadd.f32 %v1040, %v1046
  %v1049 = vadd.f32 %v1041, %v1046
  %v1050 = vadd.f32 %v1042, %v1046
  %v1051 = vadd.f32 %v1043, %v1046
  %v1052 = vld [vmem:[%s23] sm:$0x1]
  %v1053 = vld [vmem:[%s25] sm:$0x1]
  %v1054 = vsel %vm302, %v1048, 0.0
  %1055 = vadd.xlane.f32.xlu0 %v1054
  %v1056 = vpop.xlane.xlu0 %1055
  %v1057 = vsel %vm302, %v1049, 0.0
  %1058 = vadd.xlane.f32.xlu0 %v1057
  %v1059 = vpop.xlane.xlu0 %1058
  %v1060 = vsel %vm302, %v1050, 0.0
  %1061 = vadd.xlane.f32.xlu0 %v1060
  %v1062 = vpop.xlane.xlu0 %1061
  %v1063 = vsel %vm302, %v1051, 0.0
  %1064 = vadd.xlane.f32.xlu0 %v1063
  %v1065 = vpop.xlane.xlu0 %1064
  %v1066 = vmul.f32 %v1056, %v321
  %v1067 = vmul.f32 %v1059, %v321
  %v1068 = vmul.f32 %v1062, %v321
  %v1069 = vmul.f32 %v1065, %v321
  %v1070 = vsub.f32 %v1048, %v1066
  %v1071 = vsub.f32 %v1049, %v1067
  %v1072 = vsub.f32 %v1050, %v1068
  %v1073 = vsub.f32 %v1051, %v1069
  %v1074 = vmul.f32 %v1070, %v1070
  %v1075 = vmul.f32 %v1071, %v1071
  %v1076 = vmul.f32 %v1072, %v1072
  %v1077 = vmul.f32 %v1073, %v1073
  %v1078 = vsel %vm302, %v1074, 0.0
  %1079 = vadd.xlane.f32.xlu0 %v1078
  %v1080 = vpop.xlane.xlu0 %1079
  %v1081 = vsel %vm302, %v1075, 0.0
  %1082 = vadd.xlane.f32.xlu0 %v1081
  %v1083 = vpop.xlane.xlu0 %1082
  %v1084 = vsel %vm302, %v1076, 0.0
  %1085 = vadd.xlane.f32.xlu0 %v1084
  %v1086 = vpop.xlane.xlu0 %1085
  %v1087 = vsel %vm302, %v1077, 0.0
  %1088 = vadd.xlane.f32.xlu0 %v1087
  %v1089 = vpop.xlane.xlu0 %1088
  %v1090 = vmul.f32 %v1080, %v321
  %v1091 = vmul.f32 %v1083, %v321
  %v1092 = vmul.f32 %v1086, %v321
  %v1093 = vmul.f32 %v1089, %v321
  %v1094 = vadd.f32 %v1090, 1e-05
  %v1095 = vadd.f32 %v1091, 1e-05
  %v1096 = vadd.f32 %v1092, 1e-05
  %v1097 = vadd.f32 %v1093, 1e-05
  %v1098 = vrsqrt.pop %v1094
  %v1099 = vmul.f32 %v1098, %v1094
  %v1100 = vmul.f32 %v1099, %v1098
  %v1101 = vmul.f32 0.5, %v1100
  %v1102 = vsub.f32 1.5, %v1101
  %v1103 = vmul.f32 %v1098, %v1102
  %vm1104 = vweird.f32 %v1094
  %vm1105 = vweird.f32 %v1098
  %vm1106 = vmor %vm1104, %vm1105
  %v1107 = vsel %vm1106, %v1098, %v1103
  %v1108 = vrsqrt.pop %v1095
  %v1109 = vmul.f32 %v1108, %v1095
  %v1110 = vmul.f32 %v1109, %v1108
  %v1111 = vmul.f32 0.5, %v1110
  %v1112 = vsub.f32 1.5, %v1111
  %v1113 = vmul.f32 %v1108, %v1112
  %vm1114 = vweird.f32 %v1095
  %vm1115 = vweird.f32 %v1108
  %vm1116 = vmor %vm1114, %vm1115
  %v1117 = vsel %vm1116, %v1108, %v1113
  %v1118 = vrsqrt.pop %v1096
  %v1119 = vmul.f32 %v1118, %v1096
  %v1120 = vmul.f32 %v1119, %v1118
  %v1121 = vmul.f32 0.5, %v1120
  %v1122 = vsub.f32 1.5, %v1121
  %v1123 = vmul.f32 %v1118, %v1122
  %vm1124 = vweird.f32 %v1096
  %vm1125 = vweird.f32 %v1118
  %vm1126 = vmor %vm1124, %vm1125
  %v1127 = vsel %vm1126, %v1118, %v1123
  %v1128 = vrsqrt.pop %v1097
  %v1129 = vmul.f32 %v1128, %v1097
  %v1130 = vmul.f32 %v1129, %v1128
  %v1131 = vmul.f32 0.5, %v1130
  %v1132 = vsub.f32 1.5, %v1131
  %v1133 = vmul.f32 %v1128, %v1132
  %vm1134 = vweird.f32 %v1097
  %vm1135 = vweird.f32 %v1128
  %vm1136 = vmor %vm1134, %vm1135
  %v1137 = vsel %vm1136, %v1128, %v1133
  %v1138 = vmul.f32 %v1070, %v1107
  %v1139 = vmul.f32 %v1071, %v1117
  %v1140 = vmul.f32 %v1072, %v1127
  %v1141 = vmul.f32 %v1073, %v1137
  %v1143 = vperm.slane %v1052, 0
  %v1145 = vmul.f32 %v1138, %v1143
  %v1146 = vmul.f32 %v1139, %v1143
  %v1147 = vmul.f32 %v1140, %v1143
  %v1148 = vmul.f32 %v1141, %v1143
  %v1150 = vperm.slane %v1053, 0
  %v1152 = vadd.f32 %v1145, %v1150
  %v1153 = vadd.f32 %v1146, %v1150
  %v1154 = vadd.f32 %v1147, %v1150
  %v1155 = vadd.f32 %v1148, %v1150
  %v1156 = vld [vmem:[%s35] sm:$0xff]
  %v1157 = vld [vmem:[%s35 + $0x8] sm:$0xff]
  %v1158 = vld [vmem:[%s35 + $0x10] sm:$0xff]
  %v1159 = vld [vmem:[%s35 + $0x18] sm:$0xff]
  %v1160 = vpack.c.bf16 %v1153, %v1152
  %v1161 = vpack.c.bf16 %v1155, %v1154
  %v1162 = vpack.c.bf16 %v1157, %v1156
  %v1163 = vpack.c.bf16 %v1159, %v1158
  %v1164 = vld [vmem:[%s37] sm:$0x1]
  %v1166 = vperm.slane %v1164, 0
  %v1169 = vsel %vm302, %v1160, 0
  %v1172 = vsel %vm302, %v1161, 0
  %1174 = vmatpush.bf16.msra.mxu0 0
  %1175 = vmatpush.bf16.msra.mxu0 0
  %1176 = vmatpush.bf16.msra.mxu0 0
  %1177 = vmatpush.bf16.msra.mxu0 0
  %1178 = vmatpush.bf16.msra.mxu0 0
  %1179 = vmatpush.bf16.msra.mxu0 0
  %1180 = vmatpush.bf16.msra.mxu0 %v1163
  %1181 = vmatpush.bf16.msra.mxu0 %v1162
  %1182 = vmatmul.bf16.gmra.mxu0 %v1169
  %v1183 = vpop.f32.mrf.mxu0
  %v1184 = vadd.f32 %v1166, %v1183
  %v1185 = vpop.f32.mrf.mxu0
  %v1186 = vadd.f32 %v1166, %v1185
  %1187 = vmatmul.bf16.gmra.mxu0 %v1172
  %v1188 = vpop.f32.mrf.mxu0
  %v1189 = vadd.f32 %v1166, %v1188
  %v1190 = vpop.f32.mrf.mxu0
  %v1191 = vadd.f32 %v1166, %v1190
  %1192 = vdwg.mxu0
  %v1193 = vmul.f32 %v1184, 0.5
  %v1194 = vmul.f32 %v1186, 0.5
  %v1195 = vmul.f32 %v1189, 0.5
  %v1196 = vmul.f32 %v1191, 0.5
  %v1197 = vmul.f32 %v1184, 0.70710677
  %v1198 = vmul.f32 %v1186, 0.70710677
  %v1199 = vmul.f32 %v1189, 0.70710677
  %v1200 = vmul.f32 %v1191, 0.70710677
  %vm1201 = vcmp.ge.f32.partialorder %v1197, 0.0
  %vm1202 = vcmp.ge.f32.partialorder %v1198, 0.0
  %vm1203 = vcmp.ge.f32.partialorder %v1199, 0.0
  %vm1204 = vcmp.ge.f32.partialorder %v1200, 0.0
  %v1205 = vsel %vm1201, 1.0, -1.0
  %v1206 = vsel %vm1202, 1.0, -1.0
  %v1207 = vsel %vm1203, 1.0, -1.0
  %v1208 = vsel %vm1204, 1.0, -1.0
  %v1209 = vand.u32 2147483647, %v1197
  %v1210 = vand.u32 2147483647, %v1198
  %v1211 = vand.u32 2147483647, %v1199
  %v1212 = vand.u32 2147483647, %v1200
  %v1213 = vmul.f32 %v1209, 0.3275911
  %v1214 = vmul.f32 %v1210, 0.3275911
  %v1215 = vmul.f32 %v1211, 0.3275911
  %v1216 = vmul.f32 %v1212, 0.3275911
  %v1217 = vadd.f32 %v1213, 1.0
  %v1218 = vadd.f32 %v1214, 1.0
  %v1219 = vadd.f32 %v1215, 1.0
  %v1220 = vadd.f32 %v1216, 1.0
  %v1221 = vrcp.pop %v1217
  %v1222 = vmul.f32 %v1217, %v1221
  %v1223 = vsub.f32 1.0, %v1222
  %v1224 = vmul.f32 %v1221, %v1223
  %v1225 = vadd.f32 %v1221, %v1224
  %vm1226 = vweird.f32 %v1217
  %vm1227 = vweird.f32 %v1221
  %vm1228 = vmor %vm1226, %vm1227
  %v1229 = vsel %vm1228, %v1221, %v1225
  %v1230 = vand.u32 2147483647, %v1217
  %vm1231 = vcmp.eq.f32.partialorder %v1230, 8.507059e+37
  %v1232 = vand.u32 %v1217, 2147483648
  %v1233 = vor.u32 1.1754944e-38, %v1232
  %v1234 = vsel %vm1231, %v1233, %v1229
  %v1235 = vmul.f32 1.0, %v1234
  %v1236 = vrcp.pop %v1218
  %v1237 = vmul.f32 %v1218, %v1236
  %v1238 = vsub.f32 1.0, %v1237
  %v1239 = vmul.f32 %v1236, %v1238
  %v1240 = vadd.f32 %v1236, %v1239
  %vm1241 = vweird.f32 %v1218
  %vm1242 = vweird.f32 %v1236
  %vm1243 = vmor %vm1241, %vm1242
  %v1244 = vsel %vm1243, %v1236, %v1240
  %v1245 = vand.u32 2147483647, %v1218
  %vm1246 = vcmp.eq.f32.partialorder %v1245, 8.507059e+37
  %v1247 = vand.u32 %v1218, 2147483648
  %v1248 = vor.u32 1.1754944e-38, %v1247
  %v1249 = vsel %vm1246, %v1248, %v1244
  %v1250 = vmul.f32 1.0, %v1249
  %v1251 = vrcp.pop %v1219
  %v1252 = vmul.f32 %v1219, %v1251
  %v1253 = vsub.f32 1.0, %v1252
  %v1254 = vmul.f32 %v1251, %v1253
  %v1255 = vadd.f32 %v1251, %v1254
  %vm1256 = vweird.f32 %v1219
  %vm1257 = vweird.f32 %v1251
  %vm1258 = vmor %vm1256, %vm1257
  %v1259 = vsel %vm1258, %v1251, %v1255
  %v1260 = vand.u32 2147483647, %v1219
  %vm1261 = vcmp.eq.f32.partialorder %v1260, 8.507059e+37
  %v1262 = vand.u32 %v1219, 2147483648
  %v1263 = vor.u32 1.1754944e-38, %v1262
  %v1264 = vsel %vm1261, %v1263, %v1259
  %v1265 = vmul.f32 1.0, %v1264
  %v1266 = vrcp.pop %v1220
  %v1267 = vmul.f32 %v1220, %v1266
  %v1268 = vsub.f32 1.0, %v1267
  %v1269 = vmul.f32 %v1266, %v1268
  %v1270 = vadd.f32 %v1266, %v1269
  %vm1271 = vweird.f32 %v1220
  %vm1272 = vweird.f32 %v1266
  %vm1273 = vmor %vm1271, %vm1272
  %v1274 = vsel %vm1273, %v1266, %v1270
  %v1275 = vand.u32 2147483647, %v1220
  %vm1276 = vcmp.eq.f32.partialorder %v1275, 8.507059e+37
  %v1277 = vand.u32 %v1220, 2147483648
  %v1278 = vor.u32 1.1754944e-38, %v1277
  %v1279 = vsel %vm1276, %v1278, %v1274
  %v1280 = vmul.f32 1.0, %v1279
  %v1281 = vmul.f32 %v1235, 1.0614054
  %v1282 = vmul.f32 %v1250, 1.0614054
  %v1283 = vmul.f32 %v1265, 1.0614054
  %v1284 = vmul.f32 %v1280, 1.0614054
  %v1285 = vadd.f32 %v1281, -1.4531521
  %v1286 = vadd.f32 %v1282, -1.4531521
  %v1287 = vadd.f32 %v1283, -1.4531521
  %v1288 = vadd.f32 %v1284, -1.4531521
  %v1289 = vmul.f32 %v1285, %v1235
  %v1290 = vmul.f32 %v1286, %v1250
  %v1291 = vmul.f32 %v1287, %v1265
  %v1292 = vmul.f32 %v1288, %v1280
  %v1293 = vadd.f32 %v1289, 1.4214138
  %v1294 = vadd.f32 %v1290, 1.4214138
  %v1295 = vadd.f32 %v1291, 1.4214138
  %v1296 = vadd.f32 %v1292, 1.4214138
  %v1297 = vmul.f32 %v1293, %v1235
  %v1298 = vmul.f32 %v1294, %v1250
  %v1299 = vmul.f32 %v1295, %v1265
  %v1300 = vmul.f32 %v1296, %v1280
  %v1301 = vadd.f32 %v1297, -0.28449672
  %v1302 = vadd.f32 %v1298, -0.28449672
  %v1303 = vadd.f32 %v1299, -0.28449672
  %v1304 = vadd.f32 %v1300, -0.28449672
  %v1305 = vmul.f32 %v1301, %v1235
  %v1306 = vmul.f32 %v1302, %v1250
  %v1307 = vmul.f32 %v1303, %v1265
  %v1308 = vmul.f32 %v1304, %v1280
  %v1309 = vadd.f32 %v1305, 0.2548296
  %v1310 = vadd.f32 %v1306, 0.2548296
  %v1311 = vadd.f32 %v1307, 0.2548296
  %v1312 = vadd.f32 %v1308, 0.2548296
  %v1313 = vmul.f32 %v1309, %v1235
  %v1314 = vmul.f32 %v1310, %v1250
  %v1315 = vmul.f32 %v1311, %v1265
  %v1316 = vmul.f32 %v1312, %v1280
  %v1317 = vsub.f32 0.0, %v1209
  %v1318 = vsub.f32 0.0, %v1210
  %v1319 = vsub.f32 0.0, %v1211
  %v1320 = vsub.f32 0.0, %v1212
  %v1321 = vmul.f32 %v1317, %v1209
  %v1322 = vmul.f32 %v1318, %v1210
  %v1323 = vmul.f32 %v1319, %v1211
  %v1324 = vmul.f32 %v1320, %v1212
  %v1325 = vmul.f32 %v1321, 1.442695
  %v1326 = vpow.pop %v1325
  %v1327 = vmul.f32 %v1322, 1.442695
  %v1328 = vpow.pop %v1327
  %v1329 = vmul.f32 %v1323, 1.442695
  %v1330 = vpow.pop %v1329
  %v1331 = vmul.f32 %v1324, 1.442695
  %v1332 = vpow.pop %v1331
  %v1333 = vmul.f32 %v1313, %v1326
  %v1334 = vmul.f32 %v1314, %v1328
  %v1335 = vmul.f32 %v1315, %v1330
  %v1336 = vmul.f32 %v1316, %v1332
  %v1337 = vsub.f32 1.0, %v1333
  %v1338 = vsub.f32 1.0, %v1334
  %v1339 = vsub.f32 1.0, %v1335
  %v1340 = vsub.f32 1.0, %v1336
  %v1341 = vmul.f32 %v1205, %v1337
  %v1342 = vmul.f32 %v1206, %v1338
  %v1343 = vmul.f32 %v1207, %v1339
  %v1344 = vmul.f32 %v1208, %v1340
  %v1345 = vadd.f32 %v1341, 1.0
  %v1346 = vadd.f32 %v1342, 1.0
  %v1347 = vadd.f32 %v1343, 1.0
  %v1348 = vadd.f32 %v1344, 1.0
  %v1349 = vmul.f32 %v1193, %v1345
  %v1350 = vmul.f32 %v1194, %v1346
  %v1351 = vmul.f32 %v1195, %v1347
  %v1352 = vmul.f32 %v1196, %v1348
  %v1353 = vld [vmem:[%s39] sm:$0xff]
  %v1354 = vld [vmem:[%s39 + $0x8] sm:$0xff]
  %v1355 = vld [vmem:[%s39 + $0x10] sm:$0xff]
  %v1356 = vld [vmem:[%s39 + $0x18] sm:$0xff]
  %v1357 = vld [vmem:[%s39 + $0x20] sm:$0xff]
  %v1358 = vld [vmem:[%s39 + $0x28] sm:$0xff]
  %v1359 = vld [vmem:[%s39 + $0x30] sm:$0xff]
  %v1360 = vld [vmem:[%s39 + $0x38] sm:$0xff]
  %v1361 = vld [vmem:[%s39 + $0x40] sm:$0xff]
  %v1362 = vld [vmem:[%s39 + $0x48] sm:$0xff]
  %v1363 = vld [vmem:[%s39 + $0x50] sm:$0xff]
  %v1364 = vld [vmem:[%s39 + $0x58] sm:$0xff]
  %v1365 = vld [vmem:[%s39 + $0x60] sm:$0xff]
  %v1366 = vld [vmem:[%s39 + $0x68] sm:$0xff]
  %v1367 = vld [vmem:[%s39 + $0x70] sm:$0xff]
  %v1368 = vld [vmem:[%s39 + $0x78] sm:$0xff]
  %v1369 = vpack.c.bf16 %v1350, %v1349
  %v1370 = vpack.c.bf16 %v1352, %v1351
  %v1371 = vpack.c.bf16 %v1354, %v1353
  %v1372 = vpack.c.bf16 %v1356, %v1355
  %v1373 = vpack.c.bf16 %v1358, %v1357
  %v1374 = vpack.c.bf16 %v1360, %v1359
  %v1375 = vpack.c.bf16 %v1362, %v1361
  %v1376 = vpack.c.bf16 %v1364, %v1363
  %v1377 = vpack.c.bf16 %v1366, %v1365
  %v1378 = vpack.c.bf16 %v1368, %v1367
  %1379 = vmatpush.bf16.msra.mxu0 %v1378
  %1380 = vmatpush.bf16.msra.mxu0 %v1377
  %1381 = vmatpush.bf16.msra.mxu0 %v1376
  %1382 = vmatpush.bf16.msra.mxu0 %v1375
  %1383 = vmatpush.bf16.msra.mxu0 %v1374
  %1384 = vmatpush.bf16.msra.mxu0 %v1373
  %1385 = vmatpush.bf16.msra.mxu0 %v1372
  %1386 = vmatpush.bf16.msra.mxu0 %v1371
  %1387 = vmatmul.bf16.gmra.mxu0 %v1369
  %v1388 = vpop.f32.mrf.mxu0
  %v1389 = vadd.f32 0.0, %v1388
  %v1390 = vpop.f32.mrf.mxu0
  %v1391 = vadd.f32 0.0, %v1390
  %1392 = vmatmul.bf16.gmra.mxu0 %v1370
  %v1393 = vpop.f32.mrf.mxu0
  %v1394 = vadd.f32 0.0, %v1393
  %v1395 = vpop.f32.mrf.mxu0
  %v1396 = vadd.f32 0.0, %v1395
  %1397 = vdwg.mxu0
  %v1398 = vadd.f32 %v1048, %v1389
  %v1399 = vadd.f32 %v1049, %v1391
  %v1400 = vadd.f32 %v1050, %v1394
  %v1401 = vadd.f32 %v1051, %v1396
  %v1402 = vld [vmem:[%s41] sm:$0x1]
  %v1404 = vperm.slane %v1402, 0
  %v1406 = vadd.f32 %v1398, %v1404
  %v1407 = vadd.f32 %v1399, %v1404
  %v1408 = vadd.f32 %v1400, %v1404
  %v1409 = vadd.f32 %v1401, %v1404
  %s1410 = scalar_lea.vmem %s19, 1
  %v1411 = vld [vmem:[%s1410] sm:$0x1]
  %s1412 = scalar_lea.vmem %s21, 1
  %v1413 = vld [vmem:[%s1412] sm:$0x1]
  %v1414 = vsel %vm302, %v1406, 0.0
  %1415 = vadd.xlane.f32.xlu0 %v1414
  %v1416 = vpop.xlane.xlu0 %1415
  %v1417 = vsel %vm302, %v1407, 0.0
  %1418 = vadd.xlane.f32.xlu0 %v1417
  %v1419 = vpop.xlane.xlu0 %1418
  %v1420 = vsel %vm302, %v1408, 0.0
  %1421 = vadd.xlane.f32.xlu0 %v1420
  %v1422 = vpop.xlane.xlu0 %1421
  %v1423 = vsel %vm302, %v1409, 0.0
  %1424 = vadd.xlane.f32.xlu0 %v1423
  %v1425 = vpop.xlane.xlu0 %1424
  %v1426 = vmul.f32 %v1416, %v321
  %v1427 = vmul.f32 %v1419, %v321
  %v1428 = vmul.f32 %v1422, %v321
  %v1429 = vmul.f32 %v1425, %v321
  %v1430 = vsub.f32 %v1406, %v1426
  %v1431 = vsub.f32 %v1407, %v1427
  %v1432 = vsub.f32 %v1408, %v1428
  %v1433 = vsub.f32 %v1409, %v1429
  %v1434 = vmul.f32 %v1430, %v1430
  %v1435 = vmul.f32 %v1431, %v1431
  %v1436 = vmul.f32 %v1432, %v1432
  %v1437 = vmul.f32 %v1433, %v1433
  %v1438 = vsel %vm302, %v1434, 0.0
  %1439 = vadd.xlane.f32.xlu0 %v1438
  %v1440 = vpop.xlane.xlu0 %1439
  %v1441 = vsel %vm302, %v1435, 0.0
  %1442 = vadd.xlane.f32.xlu0 %v1441
  %v1443 = vpop.xlane.xlu0 %1442
  %v1444 = vsel %vm302, %v1436, 0.0
  %1445 = vadd.xlane.f32.xlu0 %v1444
  %v1446 = vpop.xlane.xlu0 %1445
  %v1447 = vsel %vm302, %v1437, 0.0
  %1448 = vadd.xlane.f32.xlu0 %v1447
  %v1449 = vpop.xlane.xlu0 %1448
  %v1450 = vmul.f32 %v1440, %v321
  %v1451 = vmul.f32 %v1443, %v321
  %v1452 = vmul.f32 %v1446, %v321
  %v1453 = vmul.f32 %v1449, %v321
  %v1454 = vadd.f32 %v1450, 1e-05
  %v1455 = vadd.f32 %v1451, 1e-05
  %v1456 = vadd.f32 %v1452, 1e-05
  %v1457 = vadd.f32 %v1453, 1e-05
  %v1458 = vrsqrt.pop %v1454
  %v1459 = vmul.f32 %v1458, %v1454
  %v1460 = vmul.f32 %v1459, %v1458
  %v1461 = vmul.f32 0.5, %v1460
  %v1462 = vsub.f32 1.5, %v1461
  %v1463 = vmul.f32 %v1458, %v1462
  %vm1464 = vweird.f32 %v1454
  %vm1465 = vweird.f32 %v1458
  %vm1466 = vmor %vm1464, %vm1465
  %v1467 = vsel %vm1466, %v1458, %v1463
  %v1468 = vrsqrt.pop %v1455
  %v1469 = vmul.f32 %v1468, %v1455
  %v1470 = vmul.f32 %v1469, %v1468
  %v1471 = vmul.f32 0.5, %v1470
  %v1472 = vsub.f32 1.5, %v1471
  %v1473 = vmul.f32 %v1468, %v1472
  %vm1474 = vweird.f32 %v1455
  %vm1475 = vweird.f32 %v1468
  %vm1476 = vmor %vm1474, %vm1475
  %v1477 = vsel %vm1476, %v1468, %v1473
  %v1478 = vrsqrt.pop %v1456
  %v1479 = vmul.f32 %v1478, %v1456
  %v1480 = vmul.f32 %v1479, %v1478
  %v1481 = vmul.f32 0.5, %v1480
  %v1482 = vsub.f32 1.5, %v1481
  %v1483 = vmul.f32 %v1478, %v1482
  %vm1484 = vweird.f32 %v1456
  %vm1485 = vweird.f32 %v1478
  %vm1486 = vmor %vm1484, %vm1485
  %v1487 = vsel %vm1486, %v1478, %v1483
  %v1488 = vrsqrt.pop %v1457
  %v1489 = vmul.f32 %v1488, %v1457
  %v1490 = vmul.f32 %v1489, %v1488
  %v1491 = vmul.f32 0.5, %v1490
  %v1492 = vsub.f32 1.5, %v1491
  %v1493 = vmul.f32 %v1488, %v1492
  %vm1494 = vweird.f32 %v1457
  %vm1495 = vweird.f32 %v1488
  %vm1496 = vmor %vm1494, %vm1495
  %v1497 = vsel %vm1496, %v1488, %v1493
  %v1498 = vmul.f32 %v1430, %v1467
  %v1499 = vmul.f32 %v1431, %v1477
  %v1500 = vmul.f32 %v1432, %v1487
  %v1501 = vmul.f32 %v1433, %v1497
  %v1503 = vperm.slane %v1411, 0
  %v1505 = vmul.f32 %v1498, %v1503
  %v1506 = vmul.f32 %v1499, %v1503
  %v1507 = vmul.f32 %v1500, %v1503
  %v1508 = vmul.f32 %v1501, %v1503
  %v1510 = vperm.slane %v1413, 0
  %v1512 = vadd.f32 %v1505, %v1510
  %v1513 = vadd.f32 %v1506, %v1510
  %v1514 = vadd.f32 %v1507, %v1510
  %v1515 = vadd.f32 %v1508, %v1510
  %s1516 = scalar_lea.vmem %s27, 32
  %v1517 = vld [vmem:[%s1516] sm:$0xff]
  %v1518 = vld [vmem:[%s1516 + $0x8] sm:$0xff]
  %v1519 = vld [vmem:[%s1516 + $0x10] sm:$0xff]
  %v1520 = vld [vmem:[%s1516 + $0x18] sm:$0xff]
  %v1521 = vpack.c.bf16 %v1513, %v1512
  %v1522 = vpack.c.bf16 %v1515, %v1514
  %v1523 = vpack.c.bf16 %v1518, %v1517
  %v1524 = vpack.c.bf16 %v1520, %v1519
  %s1525 = scalar_lea.vmem %s29, 1
  %v1526 = vld [vmem:[%s1525] sm:$0x1]
  %v1528 = vperm.slane %v1526, 0
  %v1531 = vsel %vm302, %v1521, 0
  %v1534 = vsel %vm302, %v1522, 0
  %1536 = vmatpush.bf16.msra.mxu0 0
  %1537 = vmatpush.bf16.msra.mxu0 0
  %1538 = vmatpush.bf16.msra.mxu0 0
  %1539 = vmatpush.bf16.msra.mxu0 0
  %1540 = vmatpush.bf16.msra.mxu0 0
  %1541 = vmatpush.bf16.msra.mxu0 0
  %1542 = vmatpush.bf16.msra.mxu0 %v1524
  %1543 = vmatpush.bf16.msra.mxu0 %v1523
  %1544 = vmatmul.bf16.gmra.mxu0 %v1531
  %v1545 = vpop.f32.mrf.mxu0
  %v1546 = vadd.f32 %v1528, %v1545
  %v1547 = vpop.f32.mrf.mxu0
  %v1548 = vadd.f32 %v1528, %v1547
  %1549 = vmatmul.bf16.gmra.mxu0 %v1534
  %v1550 = vpop.f32.mrf.mxu0
  %v1551 = vadd.f32 %v1528, %v1550
  %v1552 = vpop.f32.mrf.mxu0
  %v1553 = vadd.f32 %v1528, %v1552
  %1554 = vdwg.mxu0
  %v1555 = vpack.c.bf16 %v1548, %v1546
  %v1556 = vpack.c.bf16 %v1553, %v1551
  %1559 = vrot.lane.b32.xlu0 %v1555, 96
  %v1560 = vpop.permute.xlu0 %1559
  %1561 = vrot.lane.b32.xlu0 %v1556, 96
  %v1562 = vpop.permute.xlu0 %1561
  %v1564 = vsel %vm457, %v1555, 0
  %v1567 = vsel %vm457, %v1556, 0
  %v1570 = vsel %vm457, %v1560, 0
  %v1573 = vsel %vm457, %v1562, 0
  %1575 = vmatpush.bf16.xpose.msra.mxu0 0
  %1576 = vmatpush.bf16.xpose.msra.mxu0 0
  %1577 = vmatpush.bf16.xpose.msra.mxu0 0
  %1578 = vmatpush.bf16.xpose.msra.mxu0 0
  %1579 = vmatpush.bf16.xpose.msra.mxu0 0
  %1580 = vmatpush.bf16.xpose.msra.mxu0 0
  %1581 = vmatpush.bf16.xpose.msra.mxu0 %v1573
  %1582 = vmatpush.bf16.xpose.msra.mxu0 %v1570
  %1583 = vmatmul.bf16.gmra.mxu0 %v1564
  %v1584 = vpop.f32.mrf.mxu0
  %v1585 = vadd.f32 0.0, %v1584
  %v1586 = vpop.f32.mrf.mxu0
  %v1587 = vadd.f32 0.0, %v1586
  %1588 = vmatmul.bf16.gmra.mxu0 %v1567
  %v1589 = vpop.f32.mrf.mxu0
  %v1590 = vadd.f32 0.0, %v1589
  %v1591 = vpop.f32.mrf.mxu0
  %v1592 = vadd.f32 0.0, %v1591
  %1593 = vdwg.mxu0
  %v1594 = vmul.f32 %v1585, 0.35355338
  %v1595 = vmul.f32 %v1587, 0.35355338
  %v1596 = vmul.f32 %v1590, 0.35355338
  %v1597 = vmul.f32 %v1592, 0.35355338
  %v1598 = vadd.f32 %v1594, %v296
  %v1599 = vadd.f32 %v1595, %v297
  %v1600 = vadd.f32 %v1596, %v298
  %v1601 = vadd.f32 %v1597, %v299
  %v1602 = vsel %vm302, %v1598, -inf
  %1603 = vmax.xlane.f32.xlu0 %v1602
  %v1604 = vpop.xlane.xlu0 %1603
  %v1605 = vsel %vm302, %v1599, -inf
  %1606 = vmax.xlane.f32.xlu0 %v1605
  %v1607 = vpop.xlane.xlu0 %1606
  %v1608 = vsel %vm302, %v1600, -inf
  %1609 = vmax.xlane.f32.xlu0 %v1608
  %v1610 = vpop.xlane.xlu0 %1609
  %v1611 = vsel %vm302, %v1601, -inf
  %1612 = vmax.xlane.f32.xlu0 %v1611
  %v1613 = vpop.xlane.xlu0 %1612
  %v1614 = vsub.f32 %v1598, %v1604
  %v1615 = vsub.f32 %v1599, %v1607
  %v1616 = vsub.f32 %v1600, %v1610
  %v1617 = vsub.f32 %v1601, %v1613
  %v1618 = vmul.f32 %v1614, 1.442695
  %v1619 = vpow.pop %v1618
  %v1620 = vmul.f32 %v1615, 1.442695
  %v1621 = vpow.pop %v1620
  %v1622 = vmul.f32 %v1616, 1.442695
  %v1623 = vpow.pop %v1622
  %v1624 = vmul.f32 %v1617, 1.442695
  %v1625 = vpow.pop %v1624
  %v1626 = vsel %vm302, %v1619, 0.0
  %1627 = vadd.xlane.f32.xlu0 %v1626
  %v1628 = vpop.xlane.xlu0 %1627
  %v1629 = vsel %vm302, %v1621, 0.0
  %1630 = vadd.xlane.f32.xlu0 %v1629
  %v1631 = vpop.xlane.xlu0 %1630
  %v1632 = vsel %vm302, %v1623, 0.0
  %1633 = vadd.xlane.f32.xlu0 %v1632
  %v1634 = vpop.xlane.xlu0 %1633
  %v1635 = vsel %vm302, %v1625, 0.0
  %1636 = vadd.xlane.f32.xlu0 %v1635
  %v1637 = vpop.xlane.xlu0 %1636
  %v1638 = vrcp.pop %v1628
  %v1639 = vrcp.pop %v1631
  %v1640 = vrcp.pop %v1634
  %v1641 = vrcp.pop %v1637
  %v1642 = vmul.f32 %v1619, %v1638
  %v1643 = vmul.f32 %v1621, %v1639
  %v1644 = vmul.f32 %v1623, %v1640
  %v1645 = vmul.f32 %v1625, %v1641
  %v1646 = vpack.c.bf16 %v1643, %v1642
  %v1647 = vpack.c.bf16 %v1645, %v1644
  %1648 = vrot.lane.b32.xlu0 %v1555, 64
  %v1649 = vpop.permute.xlu0 %1648
  %1650 = vrot.lane.b32.xlu0 %v1556, 64
  %v1651 = vpop.permute.xlu0 %1650
  %v1655 = vsel %vm302, %v1646, 0
  %v1658 = vsel %vm302, %v1647, 0
  %1660 = vmatpush.bf16.msra.mxu0 0
  %1661 = vmatpush.bf16.msra.mxu0 0
  %1662 = vmatpush.bf16.msra.mxu0 0
  %1663 = vmatpush.bf16.msra.mxu0 0
  %1664 = vmatpush.bf16.msra.mxu0 0
  %1665 = vmatpush.bf16.msra.mxu0 0
  %1666 = vmatpush.bf16.msra.mxu0 %v1651
  %1667 = vmatpush.bf16.msra.mxu0 %v1649
  %1668 = vmatmul.bf16.gmra.mxu0 %v1655
  %v1669 = vpop.f32.mrf.mxu0
  %v1670 = vadd.f32 0.0, %v1669
  %v1671 = vpop.f32.mrf.mxu0
  %v1672 = vadd.f32 0.0, %v1671
  %1673 = vmatmul.bf16.gmra.mxu0 %v1658
  %v1674 = vpop.f32.mrf.mxu0
  %v1675 = vadd.f32 0.0, %v1674
  %v1676 = vpop.f32.mrf.mxu0
  %v1677 = vadd.f32 0.0, %v1676
  %1678 = vdwg.mxu0
  %1679 = vrot.lane.b32.xlu0 %v1555, 120
  %v1680 = vpop.permute.xlu0 %1679
  %1681 = vrot.lane.b32.xlu0 %v1556, 120
  %v1682 = vpop.permute.xlu0 %1681
  %1683 = vrot.lane.b32.xlu0 %v1555, 88
  %v1684 = vpop.permute.xlu0 %1683
  %1685 = vrot.lane.b32.xlu0 %v1556, 88
  %v1686 = vpop.permute.xlu0 %1685
  %v1688 = vsel %vm457, %v1680, 0
  %v1691 = vsel %vm457, %v1682, 0
  %v1694 = vsel %vm457, %v1684, 0
  %v1697 = vsel %vm457, %v1686, 0
  %1699 = vmatpush.bf16.xpose.msra.mxu0 0
  %1700 = vmatpush.bf16.xpose.msra.mxu0 0
  %1701 = vmatpush.bf16.xpose.msra.mxu0 0
  %1702 = vmatpush.bf16.xpose.msra.mxu0 0
  %1703 = vmatpush.bf16.xpose.msra.mxu0 0
  %1704 = vmatpush.bf16.xpose.msra.mxu0 0
  %1705 = vmatpush.bf16.xpose.msra.mxu0 %v1697
  %1706 = vmatpush.bf16.xpose.msra.mxu0 %v1694
  %1707 = vmatmul.bf16.gmra.mxu0 %v1688
  %v1708 = vpop.f32.mrf.mxu0
  %v1709 = vadd.f32 0.0, %v1708
  %v1710 = vpop.f32.mrf.mxu0
  %v1711 = vadd.f32 0.0, %v1710
  %1712 = vmatmul.bf16.gmra.mxu0 %v1691
  %v1713 = vpop.f32.mrf.mxu0
  %v1714 = vadd.f32 0.0, %v1713
  %v1715 = vpop.f32.mrf.mxu0
  %v1716 = vadd.f32 0.0, %v1715
  %1717 = vdwg.mxu0
  %v1718 = vmul.f32 %v1709, 0.35355338
  %v1719 = vmul.f32 %v1711, 0.35355338
  %v1720 = vmul.f32 %v1714, 0.35355338
  %v1721 = vmul.f32 %v1716, 0.35355338
  %v1722 = vadd.f32 %v1718, %v296
  %v1723 = vadd.f32 %v1719, %v297
  %v1724 = vadd.f32 %v1720, %v298
  %v1725 = vadd.f32 %v1721, %v299
  %v1726 = vsel %vm302, %v1722, -inf
  %1727 = vmax.xlane.f32.xlu0 %v1726
  %v1728 = vpop.xlane.xlu0 %1727
  %v1729 = vsel %vm302, %v1723, -inf
  %1730 = vmax.xlane.f32.xlu0 %v1729
  %v1731 = vpop.xlane.xlu0 %1730
  %v1732 = vsel %vm302, %v1724, -inf
  %1733 = vmax.xlane.f32.xlu0 %v1732
  %v1734 = vpop.xlane.xlu0 %1733
  %v1735 = vsel %vm302, %v1725, -inf
  %1736 = vmax.xlane.f32.xlu0 %v1735
  %v1737 = vpop.xlane.xlu0 %1736
  %v1738 = vsub.f32 %v1722, %v1728
  %v1739 = vsub.f32 %v1723, %v1731
  %v1740 = vsub.f32 %v1724, %v1734
  %v1741 = vsub.f32 %v1725, %v1737
  %v1742 = vmul.f32 %v1738, 1.442695
  %v1743 = vpow.pop %v1742
  %v1744 = vmul.f32 %v1739, 1.442695
  %v1745 = vpow.pop %v1744
  %v1746 = vmul.f32 %v1740, 1.442695
  %v1747 = vpow.pop %v1746
  %v1748 = vmul.f32 %v1741, 1.442695
  %v1749 = vpow.pop %v1748
  %v1750 = vsel %vm302, %v1743, 0.0
  %1751 = vadd.xlane.f32.xlu0 %v1750
  %v1752 = vpop.xlane.xlu0 %1751
  %v1753 = vsel %vm302, %v1745, 0.0
  %1754 = vadd.xlane.f32.xlu0 %v1753
  %v1755 = vpop.xlane.xlu0 %1754
  %v1756 = vsel %vm302, %v1747, 0.0
  %1757 = vadd.xlane.f32.xlu0 %v1756
  %v1758 = vpop.xlane.xlu0 %1757
  %v1759 = vsel %vm302, %v1749, 0.0
  %1760 = vadd.xlane.f32.xlu0 %v1759
  %v1761 = vpop.xlane.xlu0 %1760
  %v1762 = vrcp.pop %v1752
  %v1763 = vrcp.pop %v1755
  %v1764 = vrcp.pop %v1758
  %v1765 = vrcp.pop %v1761
  %v1766 = vmul.f32 %v1743, %v1762
  %v1767 = vmul.f32 %v1745, %v1763
  %v1768 = vmul.f32 %v1747, %v1764
  %v1769 = vmul.f32 %v1749, %v1765
  %v1770 = vpack.c.bf16 %v1767, %v1766
  %v1771 = vpack.c.bf16 %v1769, %v1768
  %1772 = vrot.lane.b32.xlu0 %v1555, 56
  %v1773 = vpop.permute.xlu0 %1772
  %1774 = vrot.lane.b32.xlu0 %v1556, 56
  %v1775 = vpop.permute.xlu0 %1774
  %v1779 = vsel %vm302, %v1770, 0
  %v1782 = vsel %vm302, %v1771, 0
  %1784 = vmatpush.bf16.msra.mxu0 0
  %1785 = vmatpush.bf16.msra.mxu0 0
  %1786 = vmatpush.bf16.msra.mxu0 0
  %1787 = vmatpush.bf16.msra.mxu0 0
  %1788 = vmatpush.bf16.msra.mxu0 0
  %1789 = vmatpush.bf16.msra.mxu0 0
  %1790 = vmatpush.bf16.msra.mxu0 %v1775
  %1791 = vmatpush.bf16.msra.mxu0 %v1773
  %1792 = vmatmul.bf16.gmra.mxu0 %v1779
  %v1793 = vpop.f32.mrf.mxu0
  %v1794 = vadd.f32 0.0, %v1793
  %v1795 = vpop.f32.mrf.mxu0
  %v1796 = vadd.f32 0.0, %v1795
  %1797 = vmatmul.bf16.gmra.mxu0 %v1782
  %v1798 = vpop.f32.mrf.mxu0
  %v1799 = vadd.f32 0.0, %v1798
  %v1800 = vpop.f32.mrf.mxu0
  %v1801 = vadd.f32 0.0, %v1800
  %1802 = vdwg.mxu0
  %1803 = vrot.lane.b32.xlu0 %v1555, 112
  %v1804 = vpop.permute.xlu0 %1803
  %1805 = vrot.lane.b32.xlu0 %v1556, 112
  %v1806 = vpop.permute.xlu0 %1805
  %1807 = vrot.lane.b32.xlu0 %v1555, 80
  %v1808 = vpop.permute.xlu0 %1807
  %1809 = vrot.lane.b32.xlu0 %v1556, 80
  %v1810 = vpop.permute.xlu0 %1809
  %v1812 = vsel %vm457, %v1804, 0
  %v1815 = vsel %vm457, %v1806, 0
  %v1818 = vsel %vm457, %v1808, 0
  %v1821 = vsel %vm457, %v1810, 0
  %1823 = vmatpush.bf16.xpose.msra.mxu0 0
  %1824 = vmatpush.bf16.xpose.msra.mxu0 0
  %1825 = vmatpush.bf16.xpose.msra.mxu0 0
  %1826 = vmatpush.bf16.xpose.msra.mxu0 0
  %1827 = vmatpush.bf16.xpose.msra.mxu0 0
  %1828 = vmatpush.bf16.xpose.msra.mxu0 0
  %1829 = vmatpush.bf16.xpose.msra.mxu0 %v1821
  %1830 = vmatpush.bf16.xpose.msra.mxu0 %v1818
  %1831 = vmatmul.bf16.gmra.mxu0 %v1812
  %v1832 = vpop.f32.mrf.mxu0
  %v1833 = vadd.f32 0.0, %v1832
  %v1834 = vpop.f32.mrf.mxu0
  %v1835 = vadd.f32 0.0, %v1834
  %1836 = vmatmul.bf16.gmra.mxu0 %v1815
  %v1837 = vpop.f32.mrf.mxu0
  %v1838 = vadd.f32 0.0, %v1837
  %v1839 = vpop.f32.mrf.mxu0
  %v1840 = vadd.f32 0.0, %v1839
  %1841 = vdwg.mxu0
  %v1842 = vmul.f32 %v1833, 0.35355338
  %v1843 = vmul.f32 %v1835, 0.35355338
  %v1844 = vmul.f32 %v1838, 0.35355338
  %v1845 = vmul.f32 %v1840, 0.35355338
  %v1846 = vadd.f32 %v1842, %v296
  %v1847 = vadd.f32 %v1843, %v297
  %v1848 = vadd.f32 %v1844, %v298
  %v1849 = vadd.f32 %v1845, %v299
  %v1850 = vsel %vm302, %v1846, -inf
  %1851 = vmax.xlane.f32.xlu0 %v1850
  %v1852 = vpop.xlane.xlu0 %1851
  %v1853 = vsel %vm302, %v1847, -inf
  %1854 = vmax.xlane.f32.xlu0 %v1853
  %v1855 = vpop.xlane.xlu0 %1854
  %v1856 = vsel %vm302, %v1848, -inf
  %1857 = vmax.xlane.f32.xlu0 %v1856
  %v1858 = vpop.xlane.xlu0 %1857
  %v1859 = vsel %vm302, %v1849, -inf
  %1860 = vmax.xlane.f32.xlu0 %v1859
  %v1861 = vpop.xlane.xlu0 %1860
  %v1862 = vsub.f32 %v1846, %v1852
  %v1863 = vsub.f32 %v1847, %v1855
  %v1864 = vsub.f32 %v1848, %v1858
  %v1865 = vsub.f32 %v1849, %v1861
  %v1866 = vmul.f32 %v1862, 1.442695
  %v1867 = vpow.pop %v1866
  %v1868 = vmul.f32 %v1863, 1.442695
  %v1869 = vpow.pop %v1868
  %v1870 = vmul.f32 %v1864, 1.442695
  %v1871 = vpow.pop %v1870
  %v1872 = vmul.f32 %v1865, 1.442695
  %v1873 = vpow.pop %v1872
  %v1874 = vsel %vm302, %v1867, 0.0
  %1875 = vadd.xlane.f32.xlu0 %v1874
  %v1876 = vpop.xlane.xlu0 %1875
  %v1877 = vsel %vm302, %v1869, 0.0
  %1878 = vadd.xlane.f32.xlu0 %v1877
  %v1879 = vpop.xlane.xlu0 %1878
  %v1880 = vsel %vm302, %v1871, 0.0
  %1881 = vadd.xlane.f32.xlu0 %v1880
  %v1882 = vpop.xlane.xlu0 %1881
  %v1883 = vsel %vm302, %v1873, 0.0
  %1884 = vadd.xlane.f32.xlu0 %v1883
  %v1885 = vpop.xlane.xlu0 %1884
  %v1886 = vrcp.pop %v1876
  %v1887 = vrcp.pop %v1879
  %v1888 = vrcp.pop %v1882
  %v1889 = vrcp.pop %v1885
  %v1890 = vmul.f32 %v1867, %v1886
  %v1891 = vmul.f32 %v1869, %v1887
  %v1892 = vmul.f32 %v1871, %v1888
  %v1893 = vmul.f32 %v1873, %v1889
  %v1894 = vpack.c.bf16 %v1891, %v1890
  %v1895 = vpack.c.bf16 %v1893, %v1892
  %1896 = vrot.lane.b32.xlu0 %v1555, 48
  %v1897 = vpop.permute.xlu0 %1896
  %1898 = vrot.lane.b32.xlu0 %v1556, 48
  %v1899 = vpop.permute.xlu0 %1898
  %v1903 = vsel %vm302, %v1894, 0
  %v1906 = vsel %vm302, %v1895, 0
  %1908 = vmatpush.bf16.msra.mxu0 0
  %1909 = vmatpush.bf16.msra.mxu0 0
  %1910 = vmatpush.bf16.msra.mxu0 0
  %1911 = vmatpush.bf16.msra.mxu0 0
  %1912 = vmatpush.bf16.msra.mxu0 0
  %1913 = vmatpush.bf16.msra.mxu0 0
  %1914 = vmatpush.bf16.msra.mxu0 %v1899
  %1915 = vmatpush.bf16.msra.mxu0 %v1897
  %1916 = vmatmul.bf16.gmra.mxu0 %v1903
  %v1917 = vpop.f32.mrf.mxu0
  %v1918 = vadd.f32 0.0, %v1917
  %v1919 = vpop.f32.mrf.mxu0
  %v1920 = vadd.f32 0.0, %v1919
  %1921 = vmatmul.bf16.gmra.mxu0 %v1906
  %v1922 = vpop.f32.mrf.mxu0
  %v1923 = vadd.f32 0.0, %v1922
  %v1924 = vpop.f32.mrf.mxu0
  %v1925 = vadd.f32 0.0, %v1924
  %1926 = vdwg.mxu0
  %1927 = vrot.lane.b32.xlu0 %v1555, 104
  %v1928 = vpop.permute.xlu0 %1927
  %1929 = vrot.lane.b32.xlu0 %v1556, 104
  %v1930 = vpop.permute.xlu0 %1929
  %1931 = vrot.lane.b32.xlu0 %v1555, 72
  %v1932 = vpop.permute.xlu0 %1931
  %1933 = vrot.lane.b32.xlu0 %v1556, 72
  %v1934 = vpop.permute.xlu0 %1933
  %v1936 = vsel %vm457, %v1928, 0
  %v1939 = vsel %vm457, %v1930, 0
  %v1942 = vsel %vm457, %v1932, 0
  %v1945 = vsel %vm457, %v1934, 0
  %1947 = vmatpush.bf16.xpose.msra.mxu0 0
  %1948 = vmatpush.bf16.xpose.msra.mxu0 0
  %1949 = vmatpush.bf16.xpose.msra.mxu0 0
  %1950 = vmatpush.bf16.xpose.msra.mxu0 0
  %1951 = vmatpush.bf16.xpose.msra.mxu0 0
  %1952 = vmatpush.bf16.xpose.msra.mxu0 0
  %1953 = vmatpush.bf16.xpose.msra.mxu0 %v1945
  %1954 = vmatpush.bf16.xpose.msra.mxu0 %v1942
  %1955 = vmatmul.bf16.gmra.mxu0 %v1936
  %v1956 = vpop.f32.mrf.mxu0
  %v1957 = vadd.f32 0.0, %v1956
  %v1958 = vpop.f32.mrf.mxu0
  %v1959 = vadd.f32 0.0, %v1958
  %1960 = vmatmul.bf16.gmra.mxu0 %v1939
  %v1961 = vpop.f32.mrf.mxu0
  %v1962 = vadd.f32 0.0, %v1961
  %v1963 = vpop.f32.mrf.mxu0
  %v1964 = vadd.f32 0.0, %v1963
  %1965 = vdwg.mxu0
  %v1966 = vmul.f32 %v1957, 0.35355338
  %v1967 = vmul.f32 %v1959, 0.35355338
  %v1968 = vmul.f32 %v1962, 0.35355338
  %v1969 = vmul.f32 %v1964, 0.35355338
  %v1970 = vadd.f32 %v1966, %v296
  %v1971 = vadd.f32 %v1967, %v297
  %v1972 = vadd.f32 %v1968, %v298
  %v1973 = vadd.f32 %v1969, %v299
  %v1974 = vsel %vm302, %v1970, -inf
  %1975 = vmax.xlane.f32.xlu0 %v1974
  %v1976 = vpop.xlane.xlu0 %1975
  %v1977 = vsel %vm302, %v1971, -inf
  %1978 = vmax.xlane.f32.xlu0 %v1977
  %v1979 = vpop.xlane.xlu0 %1978
  %v1980 = vsel %vm302, %v1972, -inf
  %1981 = vmax.xlane.f32.xlu0 %v1980
  %v1982 = vpop.xlane.xlu0 %1981
  %v1983 = vsel %vm302, %v1973, -inf
  %1984 = vmax.xlane.f32.xlu0 %v1983
  %v1985 = vpop.xlane.xlu0 %1984
  %v1986 = vsub.f32 %v1970, %v1976
  %v1987 = vsub.f32 %v1971, %v1979
  %v1988 = vsub.f32 %v1972, %v1982
  %v1989 = vsub.f32 %v1973, %v1985
  %v1990 = vmul.f32 %v1986, 1.442695
  %v1991 = vpow.pop %v1990
  %v1992 = vmul.f32 %v1987, 1.442695
  %v1993 = vpow.pop %v1992
  %v1994 = vmul.f32 %v1988, 1.442695
  %v1995 = vpow.pop %v1994
  %v1996 = vmul.f32 %v1989, 1.442695
  %v1997 = vpow.pop %v1996
  %v1998 = vsel %vm302, %v1991, 0.0
  %1999 = vadd.xlane.f32.xlu0 %v1998
  %v2000 = vpop.xlane.xlu0 %1999
  %v2001 = vsel %vm302, %v1993, 0.0
  %2002 = vadd.xlane.f32.xlu0 %v2001
  %v2003 = vpop.xlane.xlu0 %2002
  %v2004 = vsel %vm302, %v1995, 0.0
  %2005 = vadd.xlane.f32.xlu0 %v2004
  %v2006 = vpop.xlane.xlu0 %2005
  %v2007 = vsel %vm302, %v1997, 0.0
  %2008 = vadd.xlane.f32.xlu0 %v2007
  %v2009 = vpop.xlane.xlu0 %2008
  %v2010 = vrcp.pop %v2000
  %v2011 = vrcp.pop %v2003
  %v2012 = vrcp.pop %v2006
  %v2013 = vrcp.pop %v2009
  %v2014 = vmul.f32 %v1991, %v2010
  %v2015 = vmul.f32 %v1993, %v2011
  %v2016 = vmul.f32 %v1995, %v2012
  %v2017 = vmul.f32 %v1997, %v2013
  %v2018 = vpack.c.bf16 %v2015, %v2014
  %v2019 = vpack.c.bf16 %v2017, %v2016
  %2020 = vrot.lane.b32.xlu0 %v1555, 40
  %v2021 = vpop.permute.xlu0 %2020
  %2022 = vrot.lane.b32.xlu0 %v1556, 40
  %v2023 = vpop.permute.xlu0 %2022
  %v2027 = vsel %vm302, %v2018, 0
  %v2030 = vsel %vm302, %v2019, 0
  %2032 = vmatpush.bf16.msra.mxu0 0
  %2033 = vmatpush.bf16.msra.mxu0 0
  %2034 = vmatpush.bf16.msra.mxu0 0
  %2035 = vmatpush.bf16.msra.mxu0 0
  %2036 = vmatpush.bf16.msra.mxu0 0
  %2037 = vmatpush.bf16.msra.mxu0 0
  %2038 = vmatpush.bf16.msra.mxu0 %v2023
  %2039 = vmatpush.bf16.msra.mxu0 %v2021
  %2040 = vmatmul.bf16.gmra.mxu0 %v2027
  %v2041 = vpop.f32.mrf.mxu0
  %v2042 = vadd.f32 0.0, %v2041
  %v2043 = vpop.f32.mrf.mxu0
  %v2044 = vadd.f32 0.0, %v2043
  %2045 = vmatmul.bf16.gmra.mxu0 %v2030
  %v2046 = vpop.f32.mrf.mxu0
  %v2047 = vadd.f32 0.0, %v2046
  %v2048 = vpop.f32.mrf.mxu0
  %v2049 = vadd.f32 0.0, %v2048
  %2050 = vdwg.mxu0
  %2055 = vrot.lane.b32.xlu0 %v1794, 8
  %v2056 = vpop.permute.xlu0 %2055
  %2057 = vrot.lane.b32.xlu0 %v1796, 8
  %v2058 = vpop.permute.xlu0 %2057
  %2059 = vrot.lane.b32.xlu0 %v1799, 8
  %v2060 = vpop.permute.xlu0 %2059
  %2061 = vrot.lane.b32.xlu0 %v1801, 8
  %v2062 = vpop.permute.xlu0 %2061
  %2071 = vrot.lane.b32.xlu0 %v1918, 16
  %v2072 = vpop.permute.xlu0 %2071
  %2073 = vrot.lane.b32.xlu0 %v1920, 16
  %v2074 = vpop.permute.xlu0 %2073
  %2075 = vrot.lane.b32.xlu0 %v1923, 16
  %v2076 = vpop.permute.xlu0 %2075
  %2077 = vrot.lane.b32.xlu0 %v1925, 16
  %v2078 = vpop.permute.xlu0 %2077
  %2087 = vrot.lane.b32.xlu0 %v2042, 24
  %v2088 = vpop.permute.xlu0 %2087
  %2089 = vrot.lane.b32.xlu0 %v2044, 24
  %v2090 = vpop.permute.xlu0 %2089
  %2091 = vrot.lane.b32.xlu0 %v2047, 24
  %v2092 = vpop.permute.xlu0 %2091
  %2093 = vrot.lane.b32.xlu0 %v2049, 24
  %v2094 = vpop.permute.xlu0 %2093
  %v2099 = vsel %vm457, %v1670, %v2056
  %v2100 = vsel %vm457, %v1672, %v2058
  %v2101 = vsel %vm457, %v1675, %v2060
  %v2102 = vsel %vm457, %v1677, %v2062
  %v2103 = vsel %vm157, %v2099, %v2072
  %v2104 = vsel %vm157, %v2100, %v2074
  %v2105 = vsel %vm157, %v2101, %v2076
  %v2106 = vsel %vm157, %v2102, %v2078
  %v2107 = vsel %vm1002, %v2103, %v2088
  %v2108 = vsel %vm1002, %v2104, %v2090
  %v2109 = vsel %vm1002, %v2105, %v2092
  %v2110 = vsel %vm1002, %v2106, %v2094
  %s2111 = scalar_lea.vmem %s31, 32
  %v2112 = vld [vmem:[%s2111] sm:$0xff]
  %v2113 = vld [vmem:[%s2111 + $0x8] sm:$0xff]
  %v2114 = vld [vmem:[%s2111 + $0x10] sm:$0xff]
  %v2115 = vld [vmem:[%s2111 + $0x18] sm:$0xff]
  %v2116 = vpack.c.bf16 %v2108, %v2107
  %v2117 = vpack.c.bf16 %v2110, %v2109
  %v2118 = vpack.c.bf16 %v2113, %v2112
  %v2119 = vpack.c.bf16 %v2115, %v2114
  %v2121 = vsel %vm302, %v2116, 0
  %v2124 = vsel %vm302, %v2117, 0
  %2126 = vmatpush.bf16.msra.mxu0 0
  %2127 = vmatpush.bf16.msra.mxu0 0
  %2128 = vmatpush.bf16.msra.mxu0 0
  %2129 = vmatpush.bf16.msra.mxu0 0
  %2130 = vmatpush.bf16.msra.mxu0 0
  %2131 = vmatpush.bf16.msra.mxu0 0
  %2132 = vmatpush.bf16.msra.mxu0 %v2119
  %2133 = vmatpush.bf16.msra.mxu0 %v2118
  %2134 = vmatmul.bf16.gmra.mxu0 %v2121
  %v2135 = vpop.f32.mrf.mxu0
  %v2136 = vadd.f32 0.0, %v2135
  %v2137 = vpop.f32.mrf.mxu0
  %v2138 = vadd.f32 0.0, %v2137
  %2139 = vmatmul.bf16.gmra.mxu0 %v2124
  %v2140 = vpop.f32.mrf.mxu0
  %v2141 = vadd.f32 0.0, %v2140
  %v2142 = vpop.f32.mrf.mxu0
  %v2143 = vadd.f32 0.0, %v2142
  %2144 = vdwg.mxu0
  %v2145 = vadd.f32 %v1406, %v2136
  %v2146 = vadd.f32 %v1407, %v2138
  %v2147 = vadd.f32 %v1408, %v2141
  %v2148 = vadd.f32 %v1409, %v2143
  %s2149 = scalar_lea.vmem %s33, 1
  %v2150 = vld [vmem:[%s2149] sm:$0x1]
  %v2152 = vperm.slane %v2150, 0
  %v2154 = vadd.f32 %v2145, %v2152
  %v2155 = vadd.f32 %v2146, %v2152
  %v2156 = vadd.f32 %v2147, %v2152
  %v2157 = vadd.f32 %v2148, %v2152
  %s2158 = scalar_lea.vmem %s23, 1
  %v2159 = vld [vmem:[%s2158] sm:$0x1]
  %s2160 = scalar_lea.vmem %s25, 1
  %v2161 = vld [vmem:[%s2160] sm:$0x1]
  %v2162 = vsel %vm302, %v2154, 0.0
  %2163 = vadd.xlane.f32.xlu0 %v2162
  %v2164 = vpop.xlane.xlu0 %2163
  %v2165 = vsel %vm302, %v2155, 0.0
  %2166 = vadd.xlane.f32.xlu0 %v2165
  %v2167 = vpop.xlane.xlu0 %2166
  %v2168 = vsel %vm302, %v2156, 0.0
  %2169 = vadd.xlane.f32.xlu0 %v2168
  %v2170 = vpop.xlane.xlu0 %2169
  %v2171 = vsel %vm302, %v2157, 0.0
  %2172 = vadd.xlane.f32.xlu0 %v2171
  %v2173 = vpop.xlane.xlu0 %2172
  %v2174 = vmul.f32 %v2164, %v321
  %v2175 = vmul.f32 %v2167, %v321
  %v2176 = vmul.f32 %v2170, %v321
  %v2177 = vmul.f32 %v2173, %v321
  %v2178 = vsub.f32 %v2154, %v2174
  %v2179 = vsub.f32 %v2155, %v2175
  %v2180 = vsub.f32 %v2156, %v2176
  %v2181 = vsub.f32 %v2157, %v2177
  %v2182 = vmul.f32 %v2178, %v2178
  %v2183 = vmul.f32 %v2179, %v2179
  %v2184 = vmul.f32 %v2180, %v2180
  %v2185 = vmul.f32 %v2181, %v2181
  %v2186 = vsel %vm302, %v2182, 0.0
  %2187 = vadd.xlane.f32.xlu0 %v2186
  %v2188 = vpop.xlane.xlu0 %2187
  %v2189 = vsel %vm302, %v2183, 0.0
  %2190 = vadd.xlane.f32.xlu0 %v2189
  %v2191 = vpop.xlane.xlu0 %2190
  %v2192 = vsel %vm302, %v2184, 0.0
  %2193 = vadd.xlane.f32.xlu0 %v2192
  %v2194 = vpop.xlane.xlu0 %2193
  %v2195 = vsel %vm302, %v2185, 0.0
  %2196 = vadd.xlane.f32.xlu0 %v2195
  %v2197 = vpop.xlane.xlu0 %2196
  %v2198 = vmul.f32 %v2188, %v321
  %v2199 = vmul.f32 %v2191, %v321
  %v2200 = vmul.f32 %v2194, %v321
  %v2201 = vmul.f32 %v2197, %v321
  %v2202 = vadd.f32 %v2198, 1e-05
  %v2203 = vadd.f32 %v2199, 1e-05
  %v2204 = vadd.f32 %v2200, 1e-05
  %v2205 = vadd.f32 %v2201, 1e-05
  %v2206 = vrsqrt.pop %v2202
  %v2207 = vmul.f32 %v2206, %v2202
  %v2208 = vmul.f32 %v2207, %v2206
  %v2209 = vmul.f32 0.5, %v2208
  %v2210 = vsub.f32 1.5, %v2209
  %v2211 = vmul.f32 %v2206, %v2210
  %vm2212 = vweird.f32 %v2202
  %vm2213 = vweird.f32 %v2206
  %vm2214 = vmor %vm2212, %vm2213
  %v2215 = vsel %vm2214, %v2206, %v2211
  %v2216 = vrsqrt.pop %v2203
  %v2217 = vmul.f32 %v2216, %v2203
  %v2218 = vmul.f32 %v2217, %v2216
  %v2219 = vmul.f32 0.5, %v2218
  %v2220 = vsub.f32 1.5, %v2219
  %v2221 = vmul.f32 %v2216, %v2220
  %vm2222 = vweird.f32 %v2203
  %vm2223 = vweird.f32 %v2216
  %vm2224 = vmor %vm2222, %vm2223
  %v2225 = vsel %vm2224, %v2216, %v2221
  %v2226 = vrsqrt.pop %v2204
  %v2227 = vmul.f32 %v2226, %v2204
  %v2228 = vmul.f32 %v2227, %v2226
  %v2229 = vmul.f32 0.5, %v2228
  %v2230 = vsub.f32 1.5, %v2229
  %v2231 = vmul.f32 %v2226, %v2230
  %vm2232 = vweird.f32 %v2204
  %vm2233 = vweird.f32 %v2226
  %vm2234 = vmor %vm2232, %vm2233
  %v2235 = vsel %vm2234, %v2226, %v2231
  %v2236 = vrsqrt.pop %v2205
  %v2237 = vmul.f32 %v2236, %v2205
  %v2238 = vmul.f32 %v2237, %v2236
  %v2239 = vmul.f32 0.5, %v2238
  %v2240 = vsub.f32 1.5, %v2239
  %v2241 = vmul.f32 %v2236, %v2240
  %vm2242 = vweird.f32 %v2205
  %vm2243 = vweird.f32 %v2236
  %vm2244 = vmor %vm2242, %vm2243
  %v2245 = vsel %vm2244, %v2236, %v2241
  %v2246 = vmul.f32 %v2178, %v2215
  %v2247 = vmul.f32 %v2179, %v2225
  %v2248 = vmul.f32 %v2180, %v2235
  %v2249 = vmul.f32 %v2181, %v2245
  %v2251 = vperm.slane %v2159, 0
  %v2253 = vmul.f32 %v2246, %v2251
  %v2254 = vmul.f32 %v2247, %v2251
  %v2255 = vmul.f32 %v2248, %v2251
  %v2256 = vmul.f32 %v2249, %v2251
  %v2258 = vperm.slane %v2161, 0
  %v2260 = vadd.f32 %v2253, %v2258
  %v2261 = vadd.f32 %v2254, %v2258
  %v2262 = vadd.f32 %v2255, %v2258
  %v2263 = vadd.f32 %v2256, %v2258
  %s2264 = scalar_lea.vmem %s35, 32
  %v2265 = vld [vmem:[%s2264] sm:$0xff]
  %v2266 = vld [vmem:[%s2264 + $0x8] sm:$0xff]
  %v2267 = vld [vmem:[%s2264 + $0x10] sm:$0xff]
  %v2268 = vld [vmem:[%s2264 + $0x18] sm:$0xff]
  %v2269 = vpack.c.bf16 %v2261, %v2260
  %v2270 = vpack.c.bf16 %v2263, %v2262
  %v2271 = vpack.c.bf16 %v2266, %v2265
  %v2272 = vpack.c.bf16 %v2268, %v2267
  %s2273 = scalar_lea.vmem %s37, 1
  %v2274 = vld [vmem:[%s2273] sm:$0x1]
  %v2276 = vperm.slane %v2274, 0
  %v2279 = vsel %vm302, %v2269, 0
  %v2282 = vsel %vm302, %v2270, 0
  %2284 = vmatpush.bf16.msra.mxu0 0
  %2285 = vmatpush.bf16.msra.mxu0 0
  %2286 = vmatpush.bf16.msra.mxu0 0
  %2287 = vmatpush.bf16.msra.mxu0 0
  %2288 = vmatpush.bf16.msra.mxu0 0
  %2289 = vmatpush.bf16.msra.mxu0 0
  %2290 = vmatpush.bf16.msra.mxu0 %v2272
  %2291 = vmatpush.bf16.msra.mxu0 %v2271
  %2292 = vmatmul.bf16.gmra.mxu0 %v2279
  %v2293 = vpop.f32.mrf.mxu0
  %v2294 = vadd.f32 %v2276, %v2293
  %v2295 = vpop.f32.mrf.mxu0
  %v2296 = vadd.f32 %v2276, %v2295
  %2297 = vmatmul.bf16.gmra.mxu0 %v2282
  %v2298 = vpop.f32.mrf.mxu0
  %v2299 = vadd.f32 %v2276, %v2298
  %v2300 = vpop.f32.mrf.mxu0
  %v2301 = vadd.f32 %v2276, %v2300
  %2302 = vdwg.mxu0
  %v2303 = vmul.f32 %v2294, 0.5
  %v2304 = vmul.f32 %v2296, 0.5
  %v2305 = vmul.f32 %v2299, 0.5
  %v2306 = vmul.f32 %v2301, 0.5
  %v2307 = vmul.f32 %v2294, 0.70710677
  %v2308 = vmul.f32 %v2296, 0.70710677
  %v2309 = vmul.f32 %v2299, 0.70710677
  %v2310 = vmul.f32 %v2301, 0.70710677
  %vm2311 = vcmp.ge.f32.partialorder %v2307, 0.0
  %vm2312 = vcmp.ge.f32.partialorder %v2308, 0.0
  %vm2313 = vcmp.ge.f32.partialorder %v2309, 0.0
  %vm2314 = vcmp.ge.f32.partialorder %v2310, 0.0
  %v2315 = vsel %vm2311, 1.0, -1.0
  %v2316 = vsel %vm2312, 1.0, -1.0
  %v2317 = vsel %vm2313, 1.0, -1.0
  %v2318 = vsel %vm2314, 1.0, -1.0
  %v2319 = vand.u32 2147483647, %v2307
  %v2320 = vand.u32 2147483647, %v2308
  %v2321 = vand.u32 2147483647, %v2309
  %v2322 = vand.u32 2147483647, %v2310
  %v2323 = vmul.f32 %v2319, 0.3275911
  %v2324 = vmul.f32 %v2320, 0.3275911
  %v2325 = vmul.f32 %v2321, 0.3275911
  %v2326 = vmul.f32 %v2322, 0.3275911
  %v2327 = vadd.f32 %v2323, 1.0
  %v2328 = vadd.f32 %v2324, 1.0
  %v2329 = vadd.f32 %v2325, 1.0
  %v2330 = vadd.f32 %v2326, 1.0
  %v2331 = vrcp.pop %v2327
  %v2332 = vmul.f32 %v2327, %v2331
  %v2333 = vsub.f32 1.0, %v2332
  %v2334 = vmul.f32 %v2331, %v2333
  %v2335 = vadd.f32 %v2331, %v2334
  %vm2336 = vweird.f32 %v2327
  %vm2337 = vweird.f32 %v2331
  %vm2338 = vmor %vm2336, %vm2337
  %v2339 = vsel %vm2338, %v2331, %v2335
  %v2340 = vand.u32 2147483647, %v2327
  %vm2341 = vcmp.eq.f32.partialorder %v2340, 8.507059e+37
  %v2342 = vand.u32 %v2327, 2147483648
  %v2343 = vor.u32 1.1754944e-38, %v2342
  %v2344 = vsel %vm2341, %v2343, %v2339
  %v2345 = vmul.f32 1.0, %v2344
  %v2346 = vrcp.pop %v2328
  %v2347 = vmul.f32 %v2328, %v2346
  %v2348 = vsub.f32 1.0, %v2347
  %v2349 = vmul.f32 %v2346, %v2348
  %v2350 = vadd.f32 %v2346, %v2349
  %vm2351 = vweird.f32 %v2328
  %vm2352 = vweird.f32 %v2346
  %vm2353 = vmor %vm2351, %vm2352
  %v2354 = vsel %vm2353, %v2346, %v2350
  %v2355 = vand.u32 2147483647, %v2328
  %vm2356 = vcmp.eq.f32.partialorder %v2355, 8.507059e+37
  %v2357 = vand.u32 %v2328, 2147483648
  %v2358 = vor.u32 1.1754944e-38, %v2357
  %v2359 = vsel %vm2356, %v2358, %v2354
  %v2360 = vmul.f32 1.0, %v2359
  %v2361 = vrcp.pop %v2329
  %v2362 = vmul.f32 %v2329, %v2361
  %v2363 = vsub.f32 1.0, %v2362
  %v2364 = vmul.f32 %v2361, %v2363
  %v2365 = vadd.f32 %v2361, %v2364
  %vm2366 = vweird.f32 %v2329
  %vm2367 = vweird.f32 %v2361
  %vm2368 = vmor %vm2366, %vm2367
  %v2369 = vsel %vm2368, %v2361, %v2365
  %v2370 = vand.u32 2147483647, %v2329
  %vm2371 = vcmp.eq.f32.partialorder %v2370, 8.507059e+37
  %v2372 = vand.u32 %v2329, 2147483648
  %v2373 = vor.u32 1.1754944e-38, %v2372
  %v2374 = vsel %vm2371, %v2373, %v2369
  %v2375 = vmul.f32 1.0, %v2374
  %v2376 = vrcp.pop %v2330
  %v2377 = vmul.f32 %v2330, %v2376
  %v2378 = vsub.f32 1.0, %v2377
  %v2379 = vmul.f32 %v2376, %v2378
  %v2380 = vadd.f32 %v2376, %v2379
  %vm2381 = vweird.f32 %v2330
  %vm2382 = vweird.f32 %v2376
  %vm2383 = vmor %vm2381, %vm2382
  %v2384 = vsel %vm2383, %v2376, %v2380
  %v2385 = vand.u32 2147483647, %v2330
  %vm2386 = vcmp.eq.f32.partialorder %v2385, 8.507059e+37
  %v2387 = vand.u32 %v2330, 2147483648
  %v2388 = vor.u32 1.1754944e-38, %v2387
  %v2389 = vsel %vm2386, %v2388, %v2384
  %v2390 = vmul.f32 1.0, %v2389
  %v2391 = vmul.f32 %v2345, 1.0614054
  %v2392 = vmul.f32 %v2360, 1.0614054
  %v2393 = vmul.f32 %v2375, 1.0614054
  %v2394 = vmul.f32 %v2390, 1.0614054
  %v2395 = vadd.f32 %v2391, -1.4531521
  %v2396 = vadd.f32 %v2392, -1.4531521
  %v2397 = vadd.f32 %v2393, -1.4531521
  %v2398 = vadd.f32 %v2394, -1.4531521
  %v2399 = vmul.f32 %v2395, %v2345
  %v2400 = vmul.f32 %v2396, %v2360
  %v2401 = vmul.f32 %v2397, %v2375
  %v2402 = vmul.f32 %v2398, %v2390
  %v2403 = vadd.f32 %v2399, 1.4214138
  %v2404 = vadd.f32 %v2400, 1.4214138
  %v2405 = vadd.f32 %v2401, 1.4214138
  %v2406 = vadd.f32 %v2402, 1.4214138
  %v2407 = vmul.f32 %v2403, %v2345
  %v2408 = vmul.f32 %v2404, %v2360
  %v2409 = vmul.f32 %v2405, %v2375
  %v2410 = vmul.f32 %v2406, %v2390
  %v2411 = vadd.f32 %v2407, -0.28449672
  %v2412 = vadd.f32 %v2408, -0.28449672
  %v2413 = vadd.f32 %v2409, -0.28449672
  %v2414 = vadd.f32 %v2410, -0.28449672
  %v2415 = vmul.f32 %v2411, %v2345
  %v2416 = vmul.f32 %v2412, %v2360
  %v2417 = vmul.f32 %v2413, %v2375
  %v2418 = vmul.f32 %v2414, %v2390
  %v2419 = vadd.f32 %v2415, 0.2548296
  %v2420 = vadd.f32 %v2416, 0.2548296
  %v2421 = vadd.f32 %v2417, 0.2548296
  %v2422 = vadd.f32 %v2418, 0.2548296
  %v2423 = vmul.f32 %v2419, %v2345
  %v2424 = vmul.f32 %v2420, %v2360
  %v2425 = vmul.f32 %v2421, %v2375
  %v2426 = vmul.f32 %v2422, %v2390
  %v2427 = vsub.f32 0.0, %v2319
  %v2428 = vsub.f32 0.0, %v2320
  %v2429 = vsub.f32 0.0, %v2321
  %v2430 = vsub.f32 0.0, %v2322
  %v2431 = vmul.f32 %v2427, %v2319
  %v2432 = vmul.f32 %v2428, %v2320
  %v2433 = vmul.f32 %v2429, %v2321
  %v2434 = vmul.f32 %v2430, %v2322
  %v2435 = vmul.f32 %v2431, 1.442695
  %v2436 = vpow.pop %v2435
  %v2437 = vmul.f32 %v2432, 1.442695
  %v2438 = vpow.pop %v2437
  %v2439 = vmul.f32 %v2433, 1.442695
  %v2440 = vpow.pop %v2439
  %v2441 = vmul.f32 %v2434, 1.442695
  %v2442 = vpow.pop %v2441
  %v2443 = vmul.f32 %v2423, %v2436
  %v2444 = vmul.f32 %v2424, %v2438
  %v2445 = vmul.f32 %v2425, %v2440
  %v2446 = vmul.f32 %v2426, %v2442
  %v2447 = vsub.f32 1.0, %v2443
  %v2448 = vsub.f32 1.0, %v2444
  %v2449 = vsub.f32 1.0, %v2445
  %v2450 = vsub.f32 1.0, %v2446
  %v2451 = vmul.f32 %v2315, %v2447
  %v2452 = vmul.f32 %v2316, %v2448
  %v2453 = vmul.f32 %v2317, %v2449
  %v2454 = vmul.f32 %v2318, %v2450
  %v2455 = vadd.f32 %v2451, 1.0
  %v2456 = vadd.f32 %v2452, 1.0
  %v2457 = vadd.f32 %v2453, 1.0
  %v2458 = vadd.f32 %v2454, 1.0
  %v2459 = vmul.f32 %v2303, %v2455
  %v2460 = vmul.f32 %v2304, %v2456
  %v2461 = vmul.f32 %v2305, %v2457
  %v2462 = vmul.f32 %v2306, %v2458
  %s2463 = scalar_lea.vmem %s39, 128
  %v2464 = vld [vmem:[%s2463] sm:$0xff]
  %v2465 = vld [vmem:[%s2463 + $0x8] sm:$0xff]
  %v2466 = vld [vmem:[%s2463 + $0x10] sm:$0xff]
  %v2467 = vld [vmem:[%s2463 + $0x18] sm:$0xff]
  %v2468 = vld [vmem:[%s2463 + $0x20] sm:$0xff]
  %v2469 = vld [vmem:[%s2463 + $0x28] sm:$0xff]
  %v2470 = vld [vmem:[%s2463 + $0x30] sm:$0xff]
  %v2471 = vld [vmem:[%s2463 + $0x38] sm:$0xff]
  %v2472 = vld [vmem:[%s2463 + $0x40] sm:$0xff]
  %v2473 = vld [vmem:[%s2463 + $0x48] sm:$0xff]
  %v2474 = vld [vmem:[%s2463 + $0x50] sm:$0xff]
  %v2475 = vld [vmem:[%s2463 + $0x58] sm:$0xff]
  %v2476 = vld [vmem:[%s2463 + $0x60] sm:$0xff]
  %v2477 = vld [vmem:[%s2463 + $0x68] sm:$0xff]
  %v2478 = vld [vmem:[%s2463 + $0x70] sm:$0xff]
  %v2479 = vld [vmem:[%s2463 + $0x78] sm:$0xff]
  %v2480 = vpack.c.bf16 %v2460, %v2459
  %v2481 = vpack.c.bf16 %v2462, %v2461
  %v2482 = vpack.c.bf16 %v2465, %v2464
  %v2483 = vpack.c.bf16 %v2467, %v2466
  %v2484 = vpack.c.bf16 %v2469, %v2468
  %v2485 = vpack.c.bf16 %v2471, %v2470
  %v2486 = vpack.c.bf16 %v2473, %v2472
  %v2487 = vpack.c.bf16 %v2475, %v2474
  %v2488 = vpack.c.bf16 %v2477, %v2476
  %v2489 = vpack.c.bf16 %v2479, %v2478
  %2490 = vmatpush.bf16.msra.mxu0 %v2489
  %2491 = vmatpush.bf16.msra.mxu0 %v2488
  %2492 = vmatpush.bf16.msra.mxu0 %v2487
  %2493 = vmatpush.bf16.msra.mxu0 %v2486
  %2494 = vmatpush.bf16.msra.mxu0 %v2485
  %2495 = vmatpush.bf16.msra.mxu0 %v2484
  %2496 = vmatpush.bf16.msra.mxu0 %v2483
  %2497 = vmatpush.bf16.msra.mxu0 %v2482
  %2498 = vmatmul.bf16.gmra.mxu0 %v2480
  %v2499 = vpop.f32.mrf.mxu0
  %v2500 = vadd.f32 0.0, %v2499
  %v2501 = vpop.f32.mrf.mxu0
  %v2502 = vadd.f32 0.0, %v2501
  %2503 = vmatmul.bf16.gmra.mxu0 %v2481
  %v2504 = vpop.f32.mrf.mxu0
  %v2505 = vadd.f32 0.0, %v2504
  %v2506 = vpop.f32.mrf.mxu0
  %v2507 = vadd.f32 0.0, %v2506
  %2508 = vdwg.mxu0
  %v2509 = vadd.f32 %v2154, %v2500
  %v2510 = vadd.f32 %v2155, %v2502
  %v2511 = vadd.f32 %v2156, %v2505
  %v2512 = vadd.f32 %v2157, %v2507
  %s2513 = scalar_lea.vmem %s41, 1
  %v2514 = vld [vmem:[%s2513] sm:$0x1]
  %v2516 = vperm.slane %v2514, 0
  %v2518 = vadd.f32 %v2509, %v2516
  %v2519 = vadd.f32 %v2510, %v2516
  %v2520 = vadd.f32 %v2511, %v2516
  %v2521 = vadd.f32 %v2512, %v2516
  %v2522 = vld [vmem:[%s43] sm:$0x1]
  %v2523 = vld [vmem:[%s45] sm:$0x1]
  %v2524 = vsel %vm302, %v2518, 0.0
  %2525 = vadd.xlane.f32.xlu0 %v2524
  %v2526 = vpop.xlane.xlu0 %2525
  %v2527 = vsel %vm302, %v2519, 0.0
  %2528 = vadd.xlane.f32.xlu0 %v2527
  %v2529 = vpop.xlane.xlu0 %2528
  %v2530 = vsel %vm302, %v2520, 0.0
  %2531 = vadd.xlane.f32.xlu0 %v2530
  %v2532 = vpop.xlane.xlu0 %2531
  %v2533 = vsel %vm302, %v2521, 0.0
  %2534 = vadd.xlane.f32.xlu0 %v2533
  %v2535 = vpop.xlane.xlu0 %2534
  %v2536 = vmul.f32 %v2526, %v321
  %v2537 = vmul.f32 %v2529, %v321
  %v2538 = vmul.f32 %v2532, %v321
  %v2539 = vmul.f32 %v2535, %v321
  %v2540 = vsub.f32 %v2518, %v2536
  %v2541 = vsub.f32 %v2519, %v2537
  %v2542 = vsub.f32 %v2520, %v2538
  %v2543 = vsub.f32 %v2521, %v2539
  %v2544 = vmul.f32 %v2540, %v2540
  %v2545 = vmul.f32 %v2541, %v2541
  %v2546 = vmul.f32 %v2542, %v2542
  %v2547 = vmul.f32 %v2543, %v2543
  %v2548 = vsel %vm302, %v2544, 0.0
  %2549 = vadd.xlane.f32.xlu0 %v2548
  %v2550 = vpop.xlane.xlu0 %2549
  %v2551 = vsel %vm302, %v2545, 0.0
  %2552 = vadd.xlane.f32.xlu0 %v2551
  %v2553 = vpop.xlane.xlu0 %2552
  %v2554 = vsel %vm302, %v2546, 0.0
  %2555 = vadd.xlane.f32.xlu0 %v2554
  %v2556 = vpop.xlane.xlu0 %2555
  %v2557 = vsel %vm302, %v2547, 0.0
  %2558 = vadd.xlane.f32.xlu0 %v2557
  %v2559 = vpop.xlane.xlu0 %2558
  %v2560 = vmul.f32 %v2550, %v321
  %v2561 = vmul.f32 %v2553, %v321
  %v2562 = vmul.f32 %v2556, %v321
  %v2563 = vmul.f32 %v2559, %v321
  %v2564 = vadd.f32 %v2560, 1e-05
  %v2565 = vadd.f32 %v2561, 1e-05
  %v2566 = vadd.f32 %v2562, 1e-05
  %v2567 = vadd.f32 %v2563, 1e-05
  %v2568 = vrsqrt.pop %v2564
  %v2569 = vmul.f32 %v2568, %v2564
  %v2570 = vmul.f32 %v2569, %v2568
  %v2571 = vmul.f32 0.5, %v2570
  %v2572 = vsub.f32 1.5, %v2571
  %v2573 = vmul.f32 %v2568, %v2572
  %vm2574 = vweird.f32 %v2564
  %vm2575 = vweird.f32 %v2568
  %vm2576 = vmor %vm2574, %vm2575
  %v2577 = vsel %vm2576, %v2568, %v2573
  %v2578 = vrsqrt.pop %v2565
  %v2579 = vmul.f32 %v2578, %v2565
  %v2580 = vmul.f32 %v2579, %v2578
  %v2581 = vmul.f32 0.5, %v2580
  %v2582 = vsub.f32 1.5, %v2581
  %v2583 = vmul.f32 %v2578, %v2582
  %vm2584 = vweird.f32 %v2565
  %vm2585 = vweird.f32 %v2578
  %vm2586 = vmor %vm2584, %vm2585
  %v2587 = vsel %vm2586, %v2578, %v2583
  %v2588 = vrsqrt.pop %v2566
  %v2589 = vmul.f32 %v2588, %v2566
  %v2590 = vmul.f32 %v2589, %v2588
  %v2591 = vmul.f32 0.5, %v2590
  %v2592 = vsub.f32 1.5, %v2591
  %v2593 = vmul.f32 %v2588, %v2592
  %vm2594 = vweird.f32 %v2566
  %vm2595 = vweird.f32 %v2588
  %vm2596 = vmor %vm2594, %vm2595
  %v2597 = vsel %vm2596, %v2588, %v2593
  %v2598 = vrsqrt.pop %v2567
  %v2599 = vmul.f32 %v2598, %v2567
  %v2600 = vmul.f32 %v2599, %v2598
  %v2601 = vmul.f32 0.5, %v2600
  %v2602 = vsub.f32 1.5, %v2601
  %v2603 = vmul.f32 %v2598, %v2602
  %vm2604 = vweird.f32 %v2567
  %vm2605 = vweird.f32 %v2598
  %vm2606 = vmor %vm2604, %vm2605
  %v2607 = vsel %vm2606, %v2598, %v2603
  %v2608 = vmul.f32 %v2540, %v2577
  %v2609 = vmul.f32 %v2541, %v2587
  %v2610 = vmul.f32 %v2542, %v2597
  %v2611 = vmul.f32 %v2543, %v2607
  %v2613 = vperm.slane %v2522, 0
  %v2615 = vmul.f32 %v2608, %v2613
  %v2616 = vmul.f32 %v2609, %v2613
  %v2617 = vmul.f32 %v2610, %v2613
  %v2618 = vmul.f32 %v2611, %v2613
  %v2620 = vperm.slane %v2523, 0
  %v2622 = vadd.f32 %v2615, %v2620
  %v2623 = vadd.f32 %v2616, %v2620
  %v2624 = vadd.f32 %v2617, %v2620
  %v2625 = vadd.f32 %v2618, %v2620
  %v2626 = vld [vmem:[%s47] sm:$0xff]
  %v2627 = vld [vmem:[%s47 + $0x8] sm:$0xff]
  %v2628 = vld [vmem:[%s47 + $0x10] sm:$0xff]
  %v2629 = vld [vmem:[%s47 + $0x18] sm:$0xff]
  %v2630 = vld [vmem:[%s47 + $0x20] sm:$0xff]
  %v2631 = vld [vmem:[%s47 + $0x28] sm:$0xff]
  %v2632 = vld [vmem:[%s47 + $0x30] sm:$0xff]
  %v2633 = vld [vmem:[%s47 + $0x38] sm:$0xff]
  %v2634 = vpack.c.bf16 %v2623, %v2622
  %v2635 = vpack.c.bf16 %v2625, %v2624
  %v2636 = vpack.c.bf16 %v2628, %v2626
  %v2637 = vpack.c.bf16 %v2629, %v2627
  %v2638 = vpack.c.bf16 %v2632, %v2630
  %v2639 = vpack.c.bf16 %v2633, %v2631
  %v2640 = vld [vmem:[%s49] sm:$0x3]
  %v2642 = vperm.slane %v2640, 0
  %v2643 = vperm.slane %v2640, 1
  %v2647 = vsel %vm302, %v2634, 0
  %v2650 = vsel %vm302, %v2635, 0
  %2652 = vmatpush.bf16.msra.mxu0 0
  %2653 = vmatpush.bf16.msra.mxu0 0
  %2654 = vmatpush.bf16.msra.mxu0 0
  %2655 = vmatpush.bf16.msra.mxu0 0
  %2656 = vmatpush.bf16.msra.mxu0 0
  %2657 = vmatpush.bf16.msra.mxu0 0
  %2658 = vmatpush.bf16.msra.mxu0 %v2638
  %2659 = vmatpush.bf16.msra.mxu0 %v2636
  %2660 = vmatmul.bf16.gmra.mxu0 %v2647
  %v2661 = vpop.f32.mrf.mxu0
  %v2662 = vadd.f32 %v2642, %v2661
  %v2663 = vpop.f32.mrf.mxu0
  %v2664 = vadd.f32 %v2642, %v2663
  %2665 = vmatmul.bf16.gmra.mxu0 %v2650
  %v2666 = vpop.f32.mrf.mxu0
  %v2667 = vadd.f32 %v2642, %v2666
  %v2668 = vpop.f32.mrf.mxu0
  %v2669 = vadd.f32 %v2642, %v2668
  %2670 = vdwg.mxu0
  %2671 = vmatpush.bf16.msra.mxu0 0
  %2672 = vmatpush.bf16.msra.mxu0 0
  %2673 = vmatpush.bf16.msra.mxu0 0
  %2674 = vmatpush.bf16.msra.mxu0 0
  %2675 = vmatpush.bf16.msra.mxu0 0
  %2676 = vmatpush.bf16.msra.mxu0 0
  %2677 = vmatpush.bf16.msra.mxu0 %v2639
  %2678 = vmatpush.bf16.msra.mxu0 %v2637
  %2679 = vmatmul.bf16.gmra.mxu0 %v2647
  %v2680 = vpop.f32.mrf.mxu0
  %v2681 = vadd.f32 %v2643, %v2680
  %v2682 = vpop.f32.mrf.mxu0
  %v2683 = vadd.f32 %v2643, %v2682
  %2684 = vmatmul.bf16.gmra.mxu0 %v2650
  %v2685 = vpop.f32.mrf.mxu0
  %v2686 = vadd.f32 %v2643, %v2685
  %v2687 = vpop.f32.mrf.mxu0
  %v2688 = vadd.f32 %v2643, %v2687
  %2689 = vdwg.mxu0
  %v2690 = vmax.f32 %v2662, 0.0
  %v2691 = vmax.f32 %v2681, 0.0
  %v2692 = vmax.f32 %v2664, 0.0
  %v2693 = vmax.f32 %v2683, 0.0
  %v2694 = vmax.f32 %v2667, 0.0
  %v2695 = vmax.f32 %v2686, 0.0
  %v2696 = vmax.f32 %v2669, 0.0
  %v2697 = vmax.f32 %v2688, 0.0
  %v2698 = vld [vmem:[%s51] sm:$0xff]
  %v2699 = vld [vmem:[%s51 + $0x8] sm:$0xff]
  %v2700 = vld [vmem:[%s51 + $0x10] sm:$0xff]
  %v2701 = vld [vmem:[%s51 + $0x18] sm:$0xff]
  %v2702 = vld [vmem:[%s51 + $0x20] sm:$0xff]
  %v2703 = vld [vmem:[%s51 + $0x28] sm:$0xff]
  %v2704 = vld [vmem:[%s51 + $0x30] sm:$0xff]
  %v2705 = vld [vmem:[%s51 + $0x38] sm:$0xff]
  %v2706 = vld [vmem:[%s51 + $0x40] sm:$0xff]
  %v2707 = vld [vmem:[%s51 + $0x48] sm:$0xff]
  %v2708 = vld [vmem:[%s51 + $0x50] sm:$0xff]
  %v2709 = vld [vmem:[%s51 + $0x58] sm:$0xff]
  %v2710 = vld [vmem:[%s51 + $0x60] sm:$0xff]
  %v2711 = vld [vmem:[%s51 + $0x68] sm:$0xff]
  %v2712 = vld [vmem:[%s51 + $0x70] sm:$0xff]
  %v2713 = vld [vmem:[%s51 + $0x78] sm:$0xff]
  %v2714 = vld [vmem:[%s51 + $0x80] sm:$0xff]
  %v2715 = vld [vmem:[%s51 + $0x88] sm:$0xff]
  %v2716 = vld [vmem:[%s51 + $0x90] sm:$0xff]
  %v2717 = vld [vmem:[%s51 + $0x98] sm:$0xff]
  %v2718 = vld [vmem:[%s51 + $0xa0] sm:$0xff]
  %v2719 = vld [vmem:[%s51 + $0xa8] sm:$0xff]
  %v2720 = vld [vmem:[%s51 + $0xb0] sm:$0xff]
  %v2721 = vld [vmem:[%s51 + $0xb8] sm:$0xff]
  %v2722 = vld [vmem:[%s51 + $0xc0] sm:$0xff]
  %v2723 = vld [vmem:[%s51 + $0xc8] sm:$0xff]
  %v2724 = vld [vmem:[%s51 + $0xd0] sm:$0xff]
  %v2725 = vld [vmem:[%s51 + $0xd8] sm:$0xff]
  %v2726 = vld [vmem:[%s51 + $0xe0] sm:$0xff]
  %v2727 = vld [vmem:[%s51 + $0xe8] sm:$0xff]
  %v2728 = vld [vmem:[%s51 + $0xf0] sm:$0xff]
  %v2729 = vld [vmem:[%s51 + $0xf8] sm:$0xff]
  %v2730 = vld [vmem:[%s51 + $0x100] sm:$0xff]
  %v2731 = vld [vmem:[%s51 + $0x108] sm:$0xff]
  %v2732 = vld [vmem:[%s51 + $0x110] sm:$0xff]
  %v2733 = vld [vmem:[%s51 + $0x118] sm:$0xff]
  %v2734 = vld [vmem:[%s51 + $0x120] sm:$0xff]
  %v2735 = vld [vmem:[%s51 + $0x128] sm:$0xff]
  %v2736 = vld [vmem:[%s51 + $0x130] sm:$0xff]
  %v2737 = vld [vmem:[%s51 + $0x138] sm:$0xff]
  %v2738 = vld [vmem:[%s51 + $0x140] sm:$0xff]
  %v2739 = vld [vmem:[%s51 + $0x148] sm:$0xff]
  %v2740 = vld [vmem:[%s51 + $0x150] sm:$0xff]
  %v2741 = vld [vmem:[%s51 + $0x158] sm:$0xff]
  %v2742 = vld [vmem:[%s51 + $0x160] sm:$0xff]
  %v2743 = vld [vmem:[%s51 + $0x168] sm:$0xff]
  %v2744 = vld [vmem:[%s51 + $0x170] sm:$0xff]
  %v2745 = vld [vmem:[%s51 + $0x178] sm:$0xff]
  %v2746 = vld [vmem:[%s51 + $0x180] sm:$0xff]
  %v2747 = vld [vmem:[%s51 + $0x188] sm:$0xff]
  %v2748 = vld [vmem:[%s51 + $0x190] sm:$0xff]
  %v2749 = vld [vmem:[%s51 + $0x198] sm:$0xff]
  %v2750 = vld [vmem:[%s51 + $0x1a0] sm:$0xff]
  %v2751 = vld [vmem:[%s51 + $0x1a8] sm:$0xff]
  %v2752 = vld [vmem:[%s51 + $0x1b0] sm:$0xff]
  %v2753 = vld [vmem:[%s51 + $0x1b8] sm:$0xff]
  %v2754 = vld [vmem:[%s51 + $0x1c0] sm:$0xff]
  %v2755 = vld [vmem:[%s51 + $0x1c8] sm:$0xff]
  %v2756 = vld [vmem:[%s51 + $0x1d0] sm:$0xff]
  %v2757 = vld [vmem:[%s51 + $0x1d8] sm:$0xff]
  %v2758 = vld [vmem:[%s51 + $0x1e0] sm:$0xff]
  %v2759 = vld [vmem:[%s51 + $0x1e8] sm:$0xff]
  %v2760 = vld [vmem:[%s51 + $0x1f0] sm:$0xff]
  %v2761 = vld [vmem:[%s51 + $0x1f8] sm:$0xff]
  %v2762 = vpack.c.bf16 %v2692, %v2690
  %v2763 = vpack.c.bf16 %v2693, %v2691
  %v2764 = vpack.c.bf16 %v2696, %v2694
  %v2765 = vpack.c.bf16 %v2697, %v2695
  %v2766 = vpack.c.bf16 %v2700, %v2698
  %v2767 = vpack.c.bf16 %v2701, %v2699
  %v2768 = vpack.c.bf16 %v2704, %v2702
  %v2769 = vpack.c.bf16 %v2705, %v2703
  %v2770 = vpack.c.bf16 %v2708, %v2706
  %v2771 = vpack.c.bf16 %v2709, %v2707
  %v2772 = vpack.c.bf16 %v2712, %v2710
  %v2773 = vpack.c.bf16 %v2713, %v2711
  %v2774 = vpack.c.bf16 %v2716, %v2714
  %v2775 = vpack.c.bf16 %v2717, %v2715
  %v2776 = vpack.c.bf16 %v2720, %v2718
  %v2777 = vpack.c.bf16 %v2721, %v2719
  %v2778 = vpack.c.bf16 %v2724, %v2722
  %v2779 = vpack.c.bf16 %v2725, %v2723
  %v2780 = vpack.c.bf16 %v2728, %v2726
  %v2781 = vpack.c.bf16 %v2729, %v2727
  %v2782 = vpack.c.bf16 %v2732, %v2730
  %v2783 = vpack.c.bf16 %v2733, %v2731
  %v2784 = vpack.c.bf16 %v2736, %v2734
  %v2785 = vpack.c.bf16 %v2737, %v2735
  %v2786 = vpack.c.bf16 %v2740, %v2738
  %v2787 = vpack.c.bf16 %v2741, %v2739
  %v2788 = vpack.c.bf16 %v2744, %v2742
  %v2789 = vpack.c.bf16 %v2745, %v2743
  %v2790 = vpack.c.bf16 %v2748, %v2746
  %v2791 = vpack.c.bf16 %v2749, %v2747
  %v2792 = vpack.c.bf16 %v2752, %v2750
  %v2793 = vpack.c.bf16 %v2753, %v2751
  %v2794 = vpack.c.bf16 %v2756, %v2754
  %v2795 = vpack.c.bf16 %v2757, %v2755
  %v2796 = vpack.c.bf16 %v2760, %v2758
  %v2797 = vpack.c.bf16 %v2761, %v2759
  %v2798 = vld [vmem:[%s53] sm:$0x3]
  %v2800 = vperm.slane %v2798, 0
  %v2801 = vperm.slane %v2798, 1
  %2804 = vmatpush.bf16.msra.mxu0 %v2780
  %2805 = vmatpush.bf16.msra.mxu0 %v2778
  %2806 = vmatpush.bf16.msra.mxu0 %v2776
  %2807 = vmatpush.bf16.msra.mxu0 %v2774
  %2808 = vmatpush.bf16.msra.mxu0 %v2772
  %2809 = vmatpush.bf16.msra.mxu0 %v2770
  %2810 = vmatpush.bf16.msra.mxu0 %v2768
  %2811 = vmatpush.bf16.msra.mxu0 %v2766
  %2812 = vmatmul.bf16.gmra.mxu0 %v2762
  %v2813 = vpop.f32.mrf.mxu0
  %v2814 = vadd.f32 %v2800, %v2813
  %v2815 = vpop.f32.mrf.mxu0
  %v2816 = vadd.f32 %v2800, %v2815
  %2817 = vmatmul.bf16.gmra.mxu0 %v2764
  %v2818 = vpop.f32.mrf.mxu0
  %v2819 = vadd.f32 %v2800, %v2818
  %v2820 = vpop.f32.mrf.mxu0
  %v2821 = vadd.f32 %v2800, %v2820
  %2822 = vdwg.mxu0
  %2823 = vmatpush.bf16.msra.mxu0 %v2796
  %2824 = vmatpush.bf16.msra.mxu0 %v2794
  %2825 = vmatpush.bf16.msra.mxu0 %v2792
  %2826 = vmatpush.bf16.msra.mxu0 %v2790
  %2827 = vmatpush.bf16.msra.mxu0 %v2788
  %2828 = vmatpush.bf16.msra.mxu0 %v2786
  %2829 = vmatpush.bf16.msra.mxu0 %v2784
  %2830 = vmatpush.bf16.msra.mxu0 %v2782
  %2831 = vmatmul.bf16.gmra.mxu0 %v2763
  %v2832 = vpop.f32.mrf.mxu0
  %v2833 = vadd.f32 %v2814, %v2832
  %v2834 = vpop.f32.mrf.mxu0
  %v2835 = vadd.f32 %v2816, %v2834
  %2836 = vmatmul.bf16.gmra.mxu0 %v2765
  %v2837 = vpop.f32.mrf.mxu0
  %v2838 = vadd.f32 %v2819, %v2837
  %v2839 = vpop.f32.mrf.mxu0
  %v2840 = vadd.f32 %v2821, %v2839
  %2841 = vdwg.mxu0
  %2842 = vmatpush.bf16.msra.mxu0 %v2781
  %2843 = vmatpush.bf16.msra.mxu0 %v2779
  %2844 = vmatpush.bf16.msra.mxu0 %v2777
  %2845 = vmatpush.bf16.msra.mxu0 %v2775
  %2846 = vmatpush.bf16.msra.mxu0 %v2773
  %2847 = vmatpush.bf16.msra.mxu0 %v2771
  %2848 = vmatpush.bf16.msra.mxu0 %v2769
  %2849 = vmatpush.bf16.msra.mxu0 %v2767
  %2850 = vmatmul.bf16.gmra.mxu0 %v2762
  %v2851 = vpop.f32.mrf.mxu0
  %v2852 = vadd.f32 %v2801, %v2851
  %v2853 = vpop.f32.mrf.mxu0
  %v2854 = vadd.f32 %v2801, %v2853
  %2855 = vmatmul.bf16.gmra.mxu0 %v2764
  %v2856 = vpop.f32.mrf.mxu0
  %v2857 = vadd.f32 %v2801, %v2856
  %v2858 = vpop.f32.mrf.mxu0
  %v2859 = vadd.f32 %v2801, %v2858
  %2860 = vdwg.mxu0
  %2861 = vmatpush.bf16.msra.mxu0 %v2797
  %2862 = vmatpush.bf16.msra.mxu0 %v2795
  %2863 = vmatpush.bf16.msra.mxu0 %v2793
  %2864 = vmatpush.bf16.msra.mxu0 %v2791
  %2865 = vmatpush.bf16.msra.mxu0 %v2789
  %2866 = vmatpush.bf16.msra.mxu0 %v2787
  %2867 = vmatpush.bf16.msra.mxu0 %v2785
  %2868 = vmatpush.bf16.msra.mxu0 %v2783
  %2869 = vmatmul.bf16.gmra.mxu0 %v2763
  %v2870 = vpop.f32.mrf.mxu0
  %v2871 = vadd.f32 %v2852, %v2870
  %v2872 = vpop.f32.mrf.mxu0
  %v2873 = vadd.f32 %v2854, %v2872
  %2874 = vmatmul.bf16.gmra.mxu0 %v2765
  %v2875 = vpop.f32.mrf.mxu0
  %v2876 = vadd.f32 %v2857, %v2875
  %v2877 = vpop.f32.mrf.mxu0
  %v2878 = vadd.f32 %v2859, %v2877
  %2879 = vdwg.mxu0
  %v2880 = vmax.f32 %v2833, 0.0
  %v2881 = vmax.f32 %v2871, 0.0
  %v2882 = vmax.f32 %v2835, 0.0
  %v2883 = vmax.f32 %v2873, 0.0
  %v2884 = vmax.f32 %v2838, 0.0
  %v2885 = vmax.f32 %v2876, 0.0
  %v2886 = vmax.f32 %v2840, 0.0
  %v2887 = vmax.f32 %v2878, 0.0
  %v2888 = vld [vmem:[%s55] sm:$0xff]
  %v2889 = vld [vmem:[%s55 + $0x8] sm:$0xff]
  %v2890 = vld [vmem:[%s55 + $0x10] sm:$0xff]
  %v2891 = vld [vmem:[%s55 + $0x18] sm:$0xff]
  %v2892 = vld [vmem:[%s55 + $0x20] sm:$0xff]
  %v2893 = vld [vmem:[%s55 + $0x28] sm:$0xff]
  %v2894 = vld [vmem:[%s55 + $0x30] sm:$0xff]
  %v2895 = vld [vmem:[%s55 + $0x38] sm:$0xff]
  %v2896 = vld [vmem:[%s55 + $0x40] sm:$0xff]
  %v2897 = vld [vmem:[%s55 + $0x48] sm:$0xff]
  %v2898 = vld [vmem:[%s55 + $0x50] sm:$0xff]
  %v2899 = vld [vmem:[%s55 + $0x58] sm:$0xff]
  %v2900 = vld [vmem:[%s55 + $0x60] sm:$0xff]
  %v2901 = vld [vmem:[%s55 + $0x68] sm:$0xff]
  %v2902 = vld [vmem:[%s55 + $0x70] sm:$0xff]
  %v2903 = vld [vmem:[%s55 + $0x78] sm:$0xff]
  %v2904 = vld [vmem:[%s55 + $0x80] sm:$0xff]
  %v2905 = vld [vmem:[%s55 + $0x88] sm:$0xff]
  %v2906 = vld [vmem:[%s55 + $0x90] sm:$0xff]
  %v2907 = vld [vmem:[%s55 + $0x98] sm:$0xff]
  %v2908 = vld [vmem:[%s55 + $0xa0] sm:$0xff]
  %v2909 = vld [vmem:[%s55 + $0xa8] sm:$0xff]
  %v2910 = vld [vmem:[%s55 + $0xb0] sm:$0xff]
  %v2911 = vld [vmem:[%s55 + $0xb8] sm:$0xff]
  %v2912 = vld [vmem:[%s55 + $0xc0] sm:$0xff]
  %v2913 = vld [vmem:[%s55 + $0xc8] sm:$0xff]
  %v2914 = vld [vmem:[%s55 + $0xd0] sm:$0xff]
  %v2915 = vld [vmem:[%s55 + $0xd8] sm:$0xff]
  %v2916 = vld [vmem:[%s55 + $0xe0] sm:$0xff]
  %v2917 = vld [vmem:[%s55 + $0xe8] sm:$0xff]
  %v2918 = vld [vmem:[%s55 + $0xf0] sm:$0xff]
  %v2919 = vld [vmem:[%s55 + $0xf8] sm:$0xff]
  %v2920 = vpack.c.bf16 %v2882, %v2880
  %v2921 = vpack.c.bf16 %v2883, %v2881
  %v2922 = vpack.c.bf16 %v2886, %v2884
  %v2923 = vpack.c.bf16 %v2887, %v2885
  %v2924 = vpack.c.bf16 %v2889, %v2888
  %v2925 = vpack.c.bf16 %v2891, %v2890
  %v2926 = vpack.c.bf16 %v2893, %v2892
  %v2927 = vpack.c.bf16 %v2895, %v2894
  %v2928 = vpack.c.bf16 %v2897, %v2896
  %v2929 = vpack.c.bf16 %v2899, %v2898
  %v2930 = vpack.c.bf16 %v2901, %v2900
  %v2931 = vpack.c.bf16 %v2903, %v2902
  %v2932 = vpack.c.bf16 %v2905, %v2904
  %v2933 = vpack.c.bf16 %v2907, %v2906
  %v2934 = vpack.c.bf16 %v2909, %v2908
  %v2935 = vpack.c.bf16 %v2911, %v2910
  %v2936 = vpack.c.bf16 %v2913, %v2912
  %v2937 = vpack.c.bf16 %v2915, %v2914
  %v2938 = vpack.c.bf16 %v2917, %v2916
  %v2939 = vpack.c.bf16 %v2919, %v2918
  %v2940 = vld [vmem:[%s57] sm:$0x1]
  %v2942 = vperm.slane %v2940, 0
  %2944 = vmatpush.bf16.msra.mxu0 %v2931
  %2945 = vmatpush.bf16.msra.mxu0 %v2930
  %2946 = vmatpush.bf16.msra.mxu0 %v2929
  %2947 = vmatpush.bf16.msra.mxu0 %v2928
  %2948 = vmatpush.bf16.msra.mxu0 %v2927
  %2949 = vmatpush.bf16.msra.mxu0 %v2926
  %2950 = vmatpush.bf16.msra.mxu0 %v2925
  %2951 = vmatpush.bf16.msra.mxu0 %v2924
  %2952 = vmatmul.bf16.gmra.mxu0 %v2920
  %v2953 = vpop.f32.mrf.mxu0
  %v2954 = vadd.f32 %v2942, %v2953
  %v2955 = vpop.f32.mrf.mxu0
  %v2956 = vadd.f32 %v2942, %v2955
  %2957 = vmatmul.bf16.gmra.mxu0 %v2922
  %v2958 = vpop.f32.mrf.mxu0
  %v2959 = vadd.f32 %v2942, %v2958
  %v2960 = vpop.f32.mrf.mxu0
  %v2961 = vadd.f32 %v2942, %v2960
  %2962 = vdwg.mxu0
  %2963 = vmatpush.bf16.msra.mxu0 %v2939
  %2964 = vmatpush.bf16.msra.mxu0 %v2938
  %2965 = vmatpush.bf16.msra.mxu0 %v2937
  %2966 = vmatpush.bf16.msra.mxu0 %v2936
  %2967 = vmatpush.bf16.msra.mxu0 %v2935
  %2968 = vmatpush.bf16.msra.mxu0 %v2934
  %2969 = vmatpush.bf16.msra.mxu0 %v2933
  %2970 = vmatpush.bf16.msra.mxu0 %v2932
  %2971 = vmatmul.bf16.gmra.mxu0 %v2921
  %v2972 = vpop.f32.mrf.mxu0
  %v2973 = vadd.f32 %v2954, %v2972
  %v2974 = vpop.f32.mrf.mxu0
  %v2975 = vadd.f32 %v2956, %v2974
  %2976 = vmatmul.bf16.gmra.mxu0 %v2923
  %v2977 = vpop.f32.mrf.mxu0
  %v2978 = vadd.f32 %v2959, %v2977
  %v2979 = vpop.f32.mrf.mxu0
  %v2980 = vadd.f32 %v2961, %v2979
  %2981 = vdwg.mxu0
  %2982 = vst [vmem:[%s67] sm:$0xff] %v2973
  %2983 = vst [vmem:[%s67 + $0x8] sm:$0xff] %v2975
  %2984 = vst [vmem:[%s67 + $0x10] sm:$0xff] %v2978
  %2985 = vst [vmem:[%s67 + $0x18] sm:$0xff] %v2980
  %v2987 = vrot.slane %v1408, 6
  %v2989 = vsel %vm291, %v1406, %v2987
  %vm2990 = vcmask 1043456
  %v2991 = vsel %vm2990, %v2989, 0.0
  %v2992 = vld [vmem:[%s59] sm:$0xff]
  %v2993 = vld [vmem:[%s59 + $0x8] sm:$0xff]
  %v2994 = vld [vmem:[%s59 + $0x10] sm:$0xff]
  %v2995 = vld [vmem:[%s59 + $0x18] sm:$0xff]
  %v2996 = vpack.c.bf16 %v2991, %v2991
  %v2997 = vpack.c.bf16 %v2993, %v2992
  %v2998 = vpack.c.bf16 %v2995, %v2994
  %v2999 = vld [vmem:[%s61] sm:$0x1]
  %v3001 = vperm.slane %v2999, 0
  %v3004 = vsel %vm302, %v2996, 0
  %3006 = vmatpush.bf16.msra.mxu0 0
  %3007 = vmatpush.bf16.msra.mxu0 0
  %3008 = vmatpush.bf16.msra.mxu0 0
  %3009 = vmatpush.bf16.msra.mxu0 0
  %3010 = vmatpush.bf16.msra.mxu0 0
  %3011 = vmatpush.bf16.msra.mxu0 0
  %3012 = vmatpush.bf16.msra.mxu0 %v2998
  %3013 = vmatpush.bf16.msra.mxu0 %v2997
  %3014 = vmatmul.bf16.gmra.mxu0 %v3004
  %v3015 = vpop.f32.mrf.mxu0
  %v3016 = vadd.f32 %v3001, %v3015
  %v3017 = vpop.f32.mrf.mxu0
  %3018 = vdwg.mxu0
  %v3019 = vmax.f32 %v3016, 0.0
  %v3020 = vld [vmem:[%s63] sm:$0xff]
  %v3021 = vld [vmem:[%s63 + $0x8] sm:$0xff]
  %v3022 = vld [vmem:[%s63 + $0x10] sm:$0xff]
  %v3023 = vld [vmem:[%s63 + $0x18] sm:$0xff]
  %v3024 = vld [vmem:[%s63 + $0x20] sm:$0xff]
  %v3025 = vld [vmem:[%s63 + $0x28] sm:$0xff]
  %v3026 = vld [vmem:[%s63 + $0x30] sm:$0xff]
  %v3027 = vld [vmem:[%s63 + $0x38] sm:$0xff]
  %v3028 = vpack.c.bf16 %v3019, %v3019
  %v3029 = vpack.c.bf16 %v3021, %v3020
  %v3030 = vpack.c.bf16 %v3023, %v3022
  %v3031 = vpack.c.bf16 %v3025, %v3024
  %v3032 = vpack.c.bf16 %v3027, %v3026
  %v3033 = vld [vmem:[%s65] sm:$0x1]
  %v3035 = vperm.slane %v3033, 0
  %vm3037 = vcmask 523264
  %v3039 = vsel %vm3037, %v3028, 0
  %3041 = vmatpush.bf16.msra.mxu0 0
  %3042 = vmatpush.bf16.msra.mxu0 0
  %3043 = vmatpush.bf16.msra.mxu0 0
  %3044 = vmatpush.bf16.msra.mxu0 0
  %3045 = vmatpush.bf16.msra.mxu0 %v3032
  %3046 = vmatpush.bf16.msra.mxu0 %v3031
  %3047 = vmatpush.bf16.msra.mxu0 %v3030
  %3048 = vmatpush.bf16.msra.mxu0 %v3029
  %3049 = vmatmul.bf16.gmra.mxu0 %v3039
  %v3050 = vpop.f32.mrf.mxu0
  %v3051 = vadd.f32 %v3035, %v3050
  %v3052 = vpop.f32.mrf.mxu0
  %3053 = vdwg.mxu0
  %3054 = vst [vmem:[%s69] sm:$0xff] %v3051
  %v3056 = vrot.slane %v2520, 6
  %v3058 = vsel %vm291, %v2518, %v3056
  %v3059 = vsel %vm2990, %v3058, 0.0
  %s3060 = scalar_lea.vmem %s59, 32
  %v3061 = vld [vmem:[%s3060] sm:$0xff]
  %v3062 = vld [vmem:[%s3060 + $0x8] sm:$0xff]
  %v3063 = vld [vmem:[%s3060 + $0x10] sm:$0xff]
  %v3064 = vld [vmem:[%s3060 + $0x18] sm:$0xff]
  %v3065 = vpack.c.bf16 %v3059, %v3059
  %v3066 = vpack.c.bf16 %v3062, %v3061
  %v3067 = vpack.c.bf16 %v3064, %v3063
  %s3068 = scalar_lea.vmem %s61, 1
  %v3069 = vld [vmem:[%s3068] sm:$0x1]
  %v3071 = vperm.slane %v3069, 0
  %v3074 = vsel %vm302, %v3065, 0
  %3076 = vmatpush.bf16.msra.mxu0 0
  %3077 = vmatpush.bf16.msra.mxu0 0
  %3078 = vmatpush.bf16.msra.mxu0 0
  %3079 = vmatpush.bf16.msra.mxu0 0
  %3080 = vmatpush.bf16.msra.mxu0 0
  %3081 = vmatpush.bf16.msra.mxu0 0
  %3082 = vmatpush.bf16.msra.mxu0 %v3067
  %3083 = vmatpush.bf16.msra.mxu0 %v3066
  %3084 = vmatmul.bf16.gmra.mxu0 %v3074
  %v3085 = vpop.f32.mrf.mxu0
  %v3086 = vadd.f32 %v3071, %v3085
  %v3087 = vpop.f32.mrf.mxu0
  %3088 = vdwg.mxu0
  %v3089 = vmax.f32 %v3086, 0.0
  %s3090 = scalar_lea.vmem %s63, 64
  %v3091 = vld [vmem:[%s3090] sm:$0xff]
  %v3092 = vld [vmem:[%s3090 + $0x8] sm:$0xff]
  %v3093 = vld [vmem:[%s3090 + $0x10] sm:$0xff]
  %v3094 = vld [vmem:[%s3090 + $0x18] sm:$0xff]
  %v3095 = vld [vmem:[%s3090 + $0x20] sm:$0xff]
  %v3096 = vld [vmem:[%s3090 + $0x28] sm:$0xff]
  %v3097 = vld [vmem:[%s3090 + $0x30] sm:$0xff]
  %v3098 = vld [vmem:[%s3090 + $0x38] sm:$0xff]
  %v3099 = vpack.c.bf16 %v3089, %v3089
  %v3100 = vpack.c.bf16 %v3092, %v3091
  %v3101 = vpack.c.bf16 %v3094, %v3093
  %v3102 = vpack.c.bf16 %v3096, %v3095
  %v3103 = vpack.c.bf16 %v3098, %v3097
  %s3104 = scalar_lea.vmem %s65, 1
  %v3105 = vld [vmem:[%s3104] sm:$0x1]
  %v3107 = vperm.slane %v3105, 0
  %v3110 = vsel %vm3037, %v3099, 0
  %3112 = vmatpush.bf16.msra.mxu0 0
  %3113 = vmatpush.bf16.msra.mxu0 0
  %3114 = vmatpush.bf16.msra.mxu0 0
  %3115 = vmatpush.bf16.msra.mxu0 0
  %3116 = vmatpush.bf16.msra.mxu0 %v3103
  %3117 = vmatpush.bf16.msra.mxu0 %v3102
  %3118 = vmatpush.bf16.msra.mxu0 %v3101
  %3119 = vmatpush.bf16.msra.mxu0 %v3100
  %3120 = vmatmul.bf16.gmra.mxu0 %v3110
  %v3121 = vpop.f32.mrf.mxu0
  %v3122 = vadd.f32 %v3107, %v3121
  %v3123 = vpop.f32.mrf.mxu0
  %3124 = vdwg.mxu0
  %3125 = vst [vmem:[%s69 + $0x8] sm:$0xff] %v3122
  // Predicated region
  $region134: #{_lambda_.1} parent=0 // pred_check
    _
  $region135: #{_lambda_.1} parent=0 // pred_check_branch
    %3127 = sbr.rel (0) target = $region137
  $region136: #{_lambda_.1} parent=0 // pred_region
    _
  $region137: #{_lambda_.1} parent=0 // pred_fallthru
    _
  // Predicated region
  $region138: #{_lambda_.1} parent=0 // pred_check
    _
  $region139: #{_lambda_.1} parent=0 // pred_check_branch
    %3129 = sbr.rel (0) target = $region141
  $region140: #{_lambda_.1} parent=0 // pred_region
    _
  $region141: #{_lambda_.1} parent=0 // pred_fallthru
    _
  // Predicated region
  $region142: #{_lambda_.1} parent=0 // pred_check
    _
  $region143: #{_lambda_.1} parent=0 // pred_check_branch
    %3131 = sbr.rel (0) target = $region145
  $region144: #{_lambda_.1} parent=0 // pred_region
    _
  $region145: #{_lambda_.1} parent=0 // pred_fallthru
    _
  // Predicated region
  $region146: #{_lambda_.1} parent=0 // pred_check
    _
  $region147: #{_lambda_.1} parent=0 // pred_check_branch
    %3133 = sbr.rel (0) target = $region149
  $region148: #{_lambda_.1} parent=0 // pred_region
    _
  $region149: #{_lambda_.1} parent=0 // pred_fallthru
    _

</llo_original>
